<compile_context>
chip_gen: v5e
topology: v5e:2x2
jax: 0.10.0
libtpu: 0.0.40
codegen_flags: <defaults>
</compile_context>

<pallas_src>
import functools

import jax
import jax.numpy as jnp
from jax.experimental import pallas as pl
from jax.experimental.pallas import tpu as pltpu


_TK1 = 1024  # layer-1 reduction tile (the only streamed axis)

# (in_features, out_features, relu) in forward order -- matches the PyTorch spec.
_LAYERS = [(5000, 1000, True), (1000, 500, True), (500, 100, True), (100, 2, False)]


def _round_up(x, m):
    return (x + m - 1) // m * m


# Padded (lane/MXU friendly) dims.  N_i padded == K_{i+1} padded by construction.
_K1P = _round_up(5000, _TK1)       # 5120
_N1P = _round_up(1000, 128)        # 1024
_N2P = _round_up(500, 128)         # 512
_N3P = _round_up(100, 128)         # 128
_N4P = _round_up(2, 128)           # 128
assert _N1P % 128 == 0 and _N2P % 128 == 0 and _N3P % 128 == 0 and _N4P % 128 == 0


# ---------------------------------------------------------------------------
# Fused 4-layer MLP kernel
# ---------------------------------------------------------------------------

def _mlp_kernel(x_ref, w1_ref, b1_ref, w2_ref, b2_ref, w3_ref, b3_ref,
                w4_ref, b4_ref, o_ref, acc_ref):
    # grid = (K1_tiles,): sequential reduction over layer-1 K, streaming W1.
    k = pl.program_id(0)

    @pl.when(k == 0)
    def _init():
        acc_ref[...] = jnp.zeros_like(acc_ref)

    # Layer 1 partial: bf16 x bf16 -> f32 accumulate into resident VMEM scratch.
    acc_ref[...] += jnp.dot(x_ref[...], w1_ref[...],
                            preferred_element_type=jnp.float32)

    @pl.when(k == pl.num_programs(0) - 1)
    def _epilogue():
        # Layer 1 bias + ReLU (padded columns: 0*x + 0 bias -> relu -> 0).
        h1 = jnp.maximum(acc_ref[...] + b1_ref[...], 0.0).astype(jnp.bfloat16)
        # Layer 2 (fully VMEM-resident weights).
        h2 = jnp.maximum(
            jnp.dot(h1, w2_ref[...], preferred_element_type=jnp.float32)
            + b2_ref[...], 0.0).astype(jnp.bfloat16)
        # Layer 3.
        h3 = jnp.maximum(
            jnp.dot(h2, w3_ref[...], preferred_element_type=jnp.float32)
            + b3_ref[...], 0.0).astype(jnp.bfloat16)
        # Layer 4 (no ReLU) -> lane-dense (Mp, 128) f32 store.
        o_ref[...] = (jnp.dot(h3, w4_ref[...],
                              preferred_element_type=jnp.float32)
                      + b4_ref[...])


def amazon_mlp_forward(packed, x):
    """x: (M, 5000) f32  ->  (M, 2) f32."""
    (w1, b1), (w2, b2), (w3, b3), (w4, b4) = packed
    M, K = x.shape
    assert K == 5000, K

    Mp = _round_up(max(M, 16), 16)   # bf16 sublane packing: 16 rows per vreg group
    xp = jnp.zeros((Mp, _K1P), jnp.bfloat16).at[:M, :K].set(x.astype(jnp.bfloat16))

    grid = (_K1P // _TK1,)           # 5 steps

    cost = pl.CostEstimate(
        flops=2 * Mp * (_K1P * _N1P + _N1P * _N2P + _N2P * _N3P + _N3P * _N4P),
        transcendentals=0,
        bytes_accessed=(Mp * _K1P * 2
                        + (_K1P * _N1P + _N1P * _N2P + _N2P * _N3P + _N3P * _N4P) * 2
                        + (_N1P + _N2P + _N3P + _N4P) * 4
                        + Mp * _N4P * 4),
    )

    out = pl.pallas_call(
        _mlp_kernel,
        out_shape=jax.ShapeDtypeStruct((Mp, _N4P), jnp.float32),
        grid_spec=pltpu.PrefetchScalarGridSpec(
            num_scalar_prefetch=0,
            grid=grid,
            in_specs=[
                pl.BlockSpec((Mp, _TK1), lambda k: (0, k)),    # x: K-streamed
                pl.BlockSpec((_TK1, _N1P), lambda k: (k, 0)),  # W1: K-streamed
                pl.BlockSpec((1, _N1P), lambda k: (0, 0)),     # b1: resident
                pl.BlockSpec((_N1P, _N2P), lambda k: (0, 0)),  # W2: resident
                pl.BlockSpec((1, _N2P), lambda k: (0, 0)),     # b2
                pl.BlockSpec((_N2P, _N3P), lambda k: (0, 0)),  # W3
                pl.BlockSpec((1, _N3P), lambda k: (0, 0)),     # b3
                pl.BlockSpec((_N3P, _N4P), lambda k: (0, 0)),  # W4
                pl.BlockSpec((1, _N4P), lambda k: (0, 0)),     # b4
            ],
            out_specs=pl.BlockSpec((Mp, _N4P), lambda k: (0, 0)),
            scratch_shapes=[pltpu.VMEM((Mp, _N1P), jnp.float32)],  # layer-1 acc
        ),
        compiler_params=pltpu.CompilerParams(
            dimension_semantics=("arbitrary",),
            vmem_limit_bytes=64 << 20,
        ),
        cost_estimate=cost,
    )(xp, w1, b1, w2, b2, w3, b3, w4, b4)

    return out[:M, :2]


# ---------------------------------------------------------------------------
# Parameter init (PyTorch nn.Linear-style) and one-time packing
# ---------------------------------------------------------------------------

def init_params(key):
    """Returns [(w (out,in) f32, b (out,) f32, relu)] in forward order."""
    params = []
    for idx, (n_in, n_out, relu) in enumerate(_LAYERS):
        kw, kb = jax.random.split(jax.random.fold_in(key, idx))
        bound = 1.0 / jnp.sqrt(float(n_in))
        w = jax.random.uniform(kw, (n_out, n_in), jnp.float32, -bound, bound)
        b = jax.random.uniform(kb, (n_out,), jnp.float32, -bound, bound)
        params.append((w, b, relu))
    return params


def pack_params(params):
    """Transpose to (Kp, Np) bf16 weights, (1, Np) f32 biases, zero-padded once."""
    kps = [_K1P, _N1P, _N2P, _N3P]
    nps = [_N1P, _N2P, _N3P, _N4P]
    packed = []
    for (w, b, _relu), kp, np_ in zip(params, kps, nps):
        n_out, n_in = w.shape
        assert n_in <= kp and n_out <= np_
        wp = jnp.zeros((kp, np_), jnp.float32).at[:n_in, :n_out].set(w.T)
        bp = jnp.zeros((1, np_), jnp.float32).at[0, :n_out].set(b)
        packed.append((wp.astype(jnp.bfloat16), bp))
    return packed


def mlp_ref(params, x):
    h = x
    for w, b, relu in params:
        h = h @ w.T + b
        if relu:
            h = jnp.maximum(h, 0.0)
    return h


# ---------------------------------------------------------------------------

if __name__ == "__main__":
    key = jax.random.PRNGKey(0)
    params = init_params(key)
    packed = pack_params(params)

    kx = jax.random.fold_in(key, 1000)
    x = jax.random.normal(kx, (4, 5000), jnp.float32)   # (batch, 5000)

    out = amazon_mlp_forward(packed, x)
    out = jax.block_until_ready(out)

    assert out.shape == (4, 2), out.shape
    assert bool(jnp.all(jnp.isfinite(out)))

    # Validate against a pure-JAX f32 reference (tolerance relaxed for bf16 operands).
    ref = mlp_ref(params, x)
    max_err = float(jnp.max(jnp.abs(out - ref)))
    assert max_err < 1e-1, f"max abs error vs reference: {max_err}"

    print("KERNEL_OK")
</pallas_src>

<mosaic_0001>
module attributes {stable_mosaic.version = 11 : i64} {
  func.func @_mlp_kernel(%arg0: i32, %arg1: memref<16x1024xbf16, #tpu.memory_space<vmem>>, %arg2: memref<1024x1024xbf16, #tpu.memory_space<vmem>>, %arg3: memref<1x1024xf32, #tpu.memory_space<vmem>>, %arg4: memref<1024x512xbf16, #tpu.memory_space<vmem>>, %arg5: memref<1x512xf32, #tpu.memory_space<vmem>>, %arg6: memref<512x128xbf16, #tpu.memory_space<vmem>>, %arg7: memref<1x128xf32, #tpu.memory_space<vmem>>, %arg8: memref<128x128xbf16, #tpu.memory_space<vmem>>, %arg9: memref<1x128xf32, #tpu.memory_space<vmem>>, %arg10: memref<16x128xf32, #tpu.memory_space<vmem>>, %arg11: memref<16x1024xf32, #tpu.memory_space<vmem>>) attributes {dimension_semantics = [#tpu.dimension_semantics<arbitrary>], iteration_bounds = array<i64: 5>, scalar_prefetch = 0 : i64, scratch_operands = 1 : i64, tpu.core_type = #tpu.core_type<tc>, window_params = [{transform_indices = @transform_0, window_bounds = array<i64: 16, 1024>}, {transform_indices = @transform_1, window_bounds = array<i64: 1024, 1024>}, {pipeline_mode = #tpu.pipeline_mode<synchronous>, transform_indices = @transform_2, window_bounds = array<i64: 1, 1024>}, {pipeline_mode = #tpu.pipeline_mode<synchronous>, transform_indices = @transform_3, window_bounds = array<i64: 1024, 512>}, {pipeline_mode = #tpu.pipeline_mode<synchronous>, transform_indices = @transform_4, window_bounds = array<i64: 1, 512>}, {pipeline_mode = #tpu.pipeline_mode<synchronous>, transform_indices = @transform_5, window_bounds = array<i64: 512, 128>}, {pipeline_mode = #tpu.pipeline_mode<synchronous>, transform_indices = @transform_6, window_bounds = array<i64: 1, 128>}, {pipeline_mode = #tpu.pipeline_mode<synchronous>, transform_indices = @transform_7, window_bounds = array<i64: 128, 128>}, {pipeline_mode = #tpu.pipeline_mode<synchronous>, transform_indices = @transform_8, window_bounds = array<i64: 1, 128>}, {pipeline_mode = #tpu.pipeline_mode<synchronous>, transform_indices = @transform_9, window_bounds = array<i64: 16, 128>}]} {
    %c0_i32 = arith.constant 0 : i32
    %0 = arith.cmpi eq, %arg0, %c0_i32 : i32
    %1 = arith.extui %0 : i1 to i32
    %c0_i32_0 = arith.constant 0 : i32
    %2 = arith.cmpi ne, %1, %c0_i32_0 : i32
    scf.if %2 {
      %cst_9 = arith.constant 0.000000e+00 : f32
      %12 = vector.broadcast %cst_9 : f32 to vector<16x1024xf32>
      %c0_10 = arith.constant 0 : index
      %c0_11 = arith.constant 0 : index
      %13 = vector.load %arg11[%c0_10, %c0_11] : memref<16x1024xf32, #tpu.memory_space<vmem>>, vector<16x1024xf32>
      tpu.vector_store %arg11[%c0_10, %c0_11], %12 {strides = array<i32>} : memref<16x1024xf32, #tpu.memory_space<vmem>>, vector<16x1024xf32>,
    } else {
    }
    %c0 = arith.constant 0 : index
    %c0_1 = arith.constant 0 : index
    %3 = vector.load %arg11[%c0, %c0_1] : memref<16x1024xf32, #tpu.memory_space<vmem>>, vector<16x1024xf32>
    %c0_2 = arith.constant 0 : index
    %c0_3 = arith.constant 0 : index
    %4 = vector.load %arg1[%c0_2, %c0_3] : memref<16x1024xbf16, #tpu.memory_space<vmem>>, vector<16x1024xbf16>
    %c0_4 = arith.constant 0 : index
    %c0_5 = arith.constant 0 : index
    %5 = vector.load %arg2[%c0_4, %c0_5] : memref<1024x1024xbf16, #tpu.memory_space<vmem>>, vector<1024x1024xbf16>
    %cst = arith.constant dense<0.000000e+00> : vector<16x1024xf32>
    %6 = tpu.matmul %4, %5, %cst {dimension_numbers = #tpu.dot_dimension_numbers<[1], [0], [0], [1], [0, 0, 1, 1], [], []>} : vector<16x1024xbf16>, vector<1024x1024xbf16>, vector<16x1024xf32> -> vector<16x1024xf32>
    %7 = arith.addf %3, %6 : vector<16x1024xf32>
    %c0_6 = arith.constant 0 : index
    %c0_7 = arith.constant 0 : index
    %8 = vector.load %arg11[%c0_6, %c0_7] : memref<16x1024xf32, #tpu.memory_space<vmem>>, vector<16x1024xf32>
    tpu.vector_store %arg11[%c0_6, %c0_7], %7 {strides = array<i32>} : memref<16x1024xf32, #tpu.memory_space<vmem>>, vector<16x1024xf32>,
    %c4_i32 = arith.constant 4 : i32
    %9 = arith.cmpi eq, %arg0, %c4_i32 : i32
    %10 = arith.extui %9 : i1 to i32
    %c0_i32_8 = arith.constant 0 : i32
    %11 = arith.cmpi ne, %10, %c0_i32_8 : i32
    scf.if %11 {
      %c0_9 = arith.constant 0 : index
      %c0_10 = arith.constant 0 : index
      %12 = vector.load %arg11[%c0_9, %c0_10] : memref<16x1024xf32, #tpu.memory_space<vmem>>, vector<16x1024xf32>
      %c0_11 = arith.constant 0 : index
      %c0_12 = arith.constant 0 : index
      %13 = vector.load %arg3[%c0_11, %c0_12] : memref<1x1024xf32, #tpu.memory_space<vmem>>, vector<1x1024xf32>
      %14 = vector.broadcast %13 : vector<1x1024xf32> to vector<16x1024xf32>
      %15 = arith.addf %12, %14 : vector<16x1024xf32>
      %cst_13 = arith.constant 0.000000e+00 : f32
      %16 = vector.broadcast %cst_13 : f32 to vector<16x1024xf32>
      %17 = arith.maximumf %15, %16 : vector<16x1024xf32>
      %18 = arith.truncf %17 : vector<16x1024xf32> to vector<16x1024xbf16>
      %c0_14 = arith.constant 0 : index
      %c0_15 = arith.constant 0 : index
      %19 = vector.load %arg4[%c0_14, %c0_15] : memref<1024x512xbf16, #tpu.memory_space<vmem>>, vector<1024x512xbf16>
      %cst_16 = arith.constant dense<0.000000e+00> : vector<16x512xf32>
      %20 = tpu.matmul %18, %19, %cst_16 {dimension_numbers = #tpu.dot_dimension_numbers<[1], [0], [0], [1], [0, 0, 1, 1], [], []>} : vector<16x1024xbf16>, vector<1024x512xbf16>, vector<16x512xf32> -> vector<16x512xf32>
      %c0_17 = arith.constant 0 : index
      %c0_18 = arith.constant 0 : index
      %21 = vector.load %arg5[%c0_17, %c0_18] : memref<1x512xf32, #tpu.memory_space<vmem>>, vector<1x512xf32>
      %22 = vector.broadcast %21 : vector<1x512xf32> to vector<16x512xf32>
      %23 = arith.addf %20, %22 : vector<16x512xf32>
      %cst_19 = arith.constant 0.000000e+00 : f32
      %24 = vector.broadcast %cst_19 : f32 to vector<16x512xf32>
      %25 = arith.maximumf %23, %24 : vector<16x512xf32>
      %26 = arith.truncf %25 : vector<16x512xf32> to vector<16x512xbf16>
      %c0_20 = arith.constant 0 : index
      %c0_21 = arith.constant 0 : index
      %27 = vector.load %arg6[%c0_20, %c0_21] : memref<512x128xbf16, #tpu.memory_space<vmem>>, vector<512x128xbf16>
      %cst_22 = arith.constant dense<0.000000e+00> : vector<16x128xf32>
      %28 = tpu.matmul %26, %27, %cst_22 {dimension_numbers = #tpu.dot_dimension_numbers<[1], [0], [0], [1], [0, 0, 1, 1], [], []>} : vector<16x512xbf16>, vector<512x128xbf16>, vector<16x128xf32> -> vector<16x128xf32>
      %c0_23 = arith.constant 0 : index
      %c0_24 = arith.constant 0 : index
      %29 = vector.load %arg7[%c0_23, %c0_24] : memref<1x128xf32, #tpu.memory_space<vmem>>, vector<1x128xf32>
      %30 = vector.broadcast %29 : vector<1x128xf32> to vector<16x128xf32>
      %31 = arith.addf %28, %30 : vector<16x128xf32>
      %cst_25 = arith.constant 0.000000e+00 : f32
      %32 = vector.broadcast %cst_25 : f32 to vector<16x128xf32>
      %33 = arith.maximumf %31, %32 : vector<16x128xf32>
      %34 = arith.truncf %33 : vector<16x128xf32> to vector<16x128xbf16>
      %c0_26 = arith.constant 0 : index
      %c0_27 = arith.constant 0 : index
      %35 = vector.load %arg8[%c0_26, %c0_27] : memref<128x128xbf16, #tpu.memory_space<vmem>>, vector<128x128xbf16>
      %cst_28 = arith.constant dense<0.000000e+00> : vector<16x128xf32>
      %36 = tpu.matmul %34, %35, %cst_28 {dimension_numbers = #tpu.dot_dimension_numbers<[1], [0], [0], [1], [0, 0, 1, 1], [], []>} : vector<16x128xbf16>, vector<128x128xbf16>, vector<16x128xf32> -> vector<16x128xf32>
      %c0_29 = arith.constant 0 : index
      %c0_30 = arith.constant 0 : index
      %37 = vector.load %arg9[%c0_29, %c0_30] : memref<1x128xf32, #tpu.memory_space<vmem>>, vector<1x128xf32>
      %38 = vector.broadcast %37 : vector<1x128xf32> to vector<16x128xf32>
      %39 = arith.addf %36, %38 : vector<16x128xf32>
      %c0_31 = arith.constant 0 : index
      %c0_32 = arith.constant 0 : index
      %40 = vector.load %arg10[%c0_31, %c0_32] : memref<16x128xf32, #tpu.memory_space<vmem>>, vector<16x128xf32>
      tpu.vector_store %arg10[%c0_31, %c0_32], %39 {strides = array<i32>} : memref<16x128xf32, #tpu.memory_space<vmem>>, vector<16x128xf32>,
    } else {
    }
    return
  }
  func.func @transform_0(%arg0: i32) -> (i32, i32) {
    %c0_i32 = arith.constant 0 : i32
    %c0_i32_0 = arith.constant 0 : i32
    return %c0_i32, %arg0 : i32, i32
  }
  func.func @transform_1(%arg0: i32) -> (i32, i32) {
    %c0_i32 = arith.constant 0 : i32
    %c0_i32_0 = arith.constant 0 : i32
    return %arg0, %c0_i32 : i32, i32
  }
  func.func @transform_2(%arg0: i32) -> (i32, i32) {
    %c0_i32 = arith.constant 0 : i32
    %c0_i32_0 = arith.constant 0 : i32
    %c0_i32_1 = arith.constant 0 : i32
    return %c0_i32, %c0_i32_0 : i32, i32
  }
  func.func @transform_3(%arg0: i32) -> (i32, i32) {
    %c0_i32 = arith.constant 0 : i32
    %c0_i32_0 = arith.constant 0 : i32
    %c0_i32_1 = arith.constant 0 : i32
    return %c0_i32, %c0_i32_0 : i32, i32
  }
  func.func @transform_4(%arg0: i32) -> (i32, i32) {
    %c0_i32 = arith.constant 0 : i32
    %c0_i32_0 = arith.constant 0 : i32
    %c0_i32_1 = arith.constant 0 : i32
    return %c0_i32, %c0_i32_0 : i32, i32
  }
  func.func @transform_5(%arg0: i32) -> (i32, i32) {
    %c0_i32 = arith.constant 0 : i32
    %c0_i32_0 = arith.constant 0 : i32
    %c0_i32_1 = arith.constant 0 : i32
    return %c0_i32, %c0_i32_0 : i32, i32
  }
  func.func @transform_6(%arg0: i32) -> (i32, i32) {
    %c0_i32 = arith.constant 0 : i32
    %c0_i32_0 = arith.constant 0 : i32
    %c0_i32_1 = arith.constant 0 : i32
    return %c0_i32, %c0_i32_0 : i32, i32
  }
  func.func @transform_7(%arg0: i32) -> (i32, i32) {
    %c0_i32 = arith.constant 0 : i32
    %c0_i32_0 = arith.constant 0 : i32
    %c0_i32_1 = arith.constant 0 : i32
    return %c0_i32, %c0_i32_0 : i32, i32
  }
  func.func @transform_8(%arg0: i32) -> (i32, i32) {
    %c0_i32 = arith.constant 0 : i32
    %c0_i32_0 = arith.constant 0 : i32
    %c0_i32_1 = arith.constant 0 : i32
    return %c0_i32, %c0_i32_0 : i32, i32
  }
  func.func @transform_9(%arg0: i32) -> (i32, i32) {
    %c0_i32 = arith.constant 0 : i32
    %c0_i32_0 = arith.constant 0 : i32
    %c0_i32_1 = arith.constant 0 : i32
    return %c0_i32, %c0_i32_0 : i32, i32
  }
}

</mosaic_0001>

<llo_original>
// kernel: tpu_custom_call.1
$region0: #{tpu_custom_call.1}
  #allocation0 [shape = 'u32[]', space=smem, size = 0x4, offset = 0x4, fixed_abs, tag = 'smem constant byte address 0x4 - core index']
  #allocation1 [shape = 'u32[72,128]{1,0:T(1,128)}', space=vmem, size = 0x9000, scoped, tag = 'internal scratch']
  #allocation2 [shape = 'f32[16,1024]{1,0:T(8,128)}', space=vmem, size = 0x10000, scoped, tag = 'scratch operand']
  %s0 = inlined_call_operand.hbm [shape: bf16[16,5120], index: 0, kind: input, shape index: {}]
  %s1 = inlined_call_operand.hbm [shape: bf16[5120,1024], index: 1, kind: input, shape index: {}]
  %s2 = inlined_call_operand.hbm [shape: f32[1,1024], index: 2, kind: input, shape index: {}]
  %s3 = inlined_call_operand.hbm [shape: bf16[1024,512], index: 3, kind: input, shape index: {}]
  %s4 = inlined_call_operand.hbm [shape: f32[1,512], index: 4, kind: input, shape index: {}]
  %s5 = inlined_call_operand.hbm [shape: bf16[512,128], index: 5, kind: input, shape index: {}]
  %s6 = inlined_call_operand.hbm [shape: f32[1,128], index: 6, kind: input, shape index: {}]
  %s7 = inlined_call_operand.hbm [shape: bf16[128,128], index: 7, kind: input, shape index: {}]
  %s8 = inlined_call_operand.hbm [shape: f32[1,128], index: 8, kind: input, shape index: {}]
  %s9 = inlined_call_operand.hbm [shape: f32[16,128], index: 9, kind: output, shape index: {}]
  %s10 = sld [smem:[#allocation0]]
  $region113: #{tpu_custom_call.1} parent=0
    _
  %s12 = ssub.s32 1, %s10
  %s13 = scalar_select 0, %s12, %s10
  $region1: #{tpu_custom_call.1} parent=0
    #allocation3 [shape = 'u8[65536]{0}', space=vmem, size = 0x10000, scoped, tag = 'input window, operand 0']
    #allocation4 [shape = 's32[2]{0}', space=sflag, size = 0x8, scoped, tag = 'scoped memory for tpu_custom_call.1']
    #allocation5 [shape = 's32[2]{0}', space=sflag, size = 0x8, scoped, tag = 'scoped memory for tpu_custom_call.1']
    #allocation6 [shape = 'u8[4194304]{0}', space=vmem, size = 0x400000, scoped, tag = 'input window, operand 1']
    #allocation7 [shape = 's32[2]{0}', space=sflag, size = 0x8, scoped, tag = 'scoped memory for tpu_custom_call.1']
    #allocation8 [shape = 'u8[4096]{0}', space=vmem, size = 0x1000, scoped, tag = 'input window, operand 2, single buffered']
    #allocation9 [shape = 'u8[1048576]{0}', space=vmem, size = 0x100000, scoped, tag = 'input window, operand 3, single buffered']
    #allocation10 [shape = 's32[1]{0}', space=sflag, size = 0x4, scoped, tag = 'scoped memory for tpu_custom_call.1']
    #allocation11 [shape = 'u8[2048]{0}', space=vmem, size = 0x800, scoped, tag = 'input window, operand 4, single buffered']
    #allocation12 [shape = 'u8[131072]{0}', space=vmem, size = 0x20000, scoped, tag = 'input window, operand 5, single buffered']
    #allocation13 [shape = 's32[1]{0}', space=sflag, size = 0x4, scoped, tag = 'scoped memory for tpu_custom_call.1']
    #allocation14 [shape = 'u8[512]{0}', space=vmem, size = 0x400, scoped, tag = 'input window, operand 6, single buffered']
    #allocation15 [shape = 'u8[32768]{0}', space=vmem, size = 0x8000, scoped, tag = 'input window, operand 7, single buffered']
    #allocation16 [shape = 's32[1]{0}', space=sflag, size = 0x4, scoped, tag = 'scoped memory for tpu_custom_call.1']
    #allocation17 [shape = 'u8[512]{0}', space=vmem, size = 0x400, scoped, tag = 'input window, operand 8, single buffered']
    #allocation18 [shape = 'u8[8192]{0}', space=vmem, size = 0x2000, scoped, tag = 'output window, operand 0, single buffered']
    %14 = vsyncpa [#allocation4], 0
    %s15 = scalar_lea.sflag [#allocation4], 1
    %16 = vsyncpa %s15, 0
    %17 = vsyncpa [#allocation7], 0
    %s18 = scalar_lea.sflag [#allocation7], 1
    %19 = vsyncpa %s18, 0
    %20 = vsyncpa [#allocation10], 0
    %21 = vsyncpa [#allocation13], 0
    %22 = vsyncpa [#allocation16], 0
    %23 = vsyncpa [#allocation5], 0
    loop: start=0, step=1, limit=7
    $region2: #{tpu_custom_call.1} parent=1 // loop_pre_header
      _
    $region3: #{tpu_custom_call.1} parent=1 // loop_header
      %s25 = sphi 0, %s29
      %p26 = scmp.ge.s32.totalorder %s25, 7
      %s35 = sphi 0, %s37
      %s38 = sphi 0, %s35
      %s39 = sphi 0, %s38
      %s55 = sphi 0, %s39
      %s61 = sphi 0, %s63
      %s64 = sphi 0, %s61
      %s65 = sphi 0, %s64
      %s81 = sphi 0, %s65
      %s85 = sphi 0, %s85
      %s87 = sphi 0, %s85
      %s88 = sphi 0, %s87
      %s102 = sphi 0, %s88
      %s106 = sphi 0, %s106
      %s108 = sphi 0, %s106
      %s109 = sphi 0, %s108
      %s123 = sphi 0, %s109
      %s127 = sphi 0, %s127
      %s129 = sphi 0, %s127
      %s130 = sphi 0, %s129
      %s144 = sphi 0, %s130
      %s148 = sphi 0, %s148
      %s150 = sphi 0, %s148
      %s151 = sphi 0, %s150
      %s165 = sphi 0, %s151
      %s169 = sphi 0, %s169
      %s171 = sphi 0, %s169
      %s172 = sphi 0, %s171
      %s186 = sphi 0, %s172
      %s190 = sphi 0, %s190
      %s192 = sphi 0, %s190
      %s193 = sphi 0, %s192
      %s207 = sphi 0, %s193
      %s211 = sphi 0, %s211
      %s213 = sphi 0, %s211
      %s214 = sphi 0, %s213
      %s228 = sphi 0, %s214
      %s232 = sphi 0, %s232
      %s234 = sphi 0, %s232
      %s235 = sphi 0, %s234
      %s249 = sphi 0, %s235
    $region4: #{tpu_custom_call.1} parent=1 // loop_header_branch
      %28 = sbr.rel (%p26) target = $region8
    $region5: #{tpu_custom_call.1} parent=1 // loop_body
      %s30 = ssub.s32 %s25, 1
      %s31 = ssub.s32 %s25, 2
      %s32 = sadd.s32 %s25, 1
      %s33 = ssub.s32 %s25, %s32
      %p34 = scmp.eq.s32.totalorder %s33, 0
      %s36 = sadd.s32 %s35, 1
      %s37 = scalar_select %p34, %s35, %s36
      %p40 = pneg %p34
      %p41 = scmp.eq.s32.totalorder %s25, 4
      %p42 = por %p40, %p41
      %p43 = scmp.ne.s32.totalorder %s35, %s38
      %p44 = scmp.eq.s32.totalorder %s25, 0
      %p45 = por %p43, %p44
      %p46 = scmp.ne.s32.totalorder %s35, %s38
      %p47 = scmp.eq.s32.totalorder %s30, 4
      %p48 = por %p46, %p47
      %p49 = scmp.ne.s32.totalorder %s38, %s39
      %p50 = scmp.eq.s32.totalorder %s30, 0
      %p51 = por %p49, %p50
      %p52 = scmp.ne.s32.totalorder %s38, %s39
      %p53 = scmp.eq.s32.totalorder %s31, 4
      %p54 = por %p52, %p53
      %p56 = scmp.ne.s32.totalorder %s39, %s55
      %p57 = scmp.eq.s32.totalorder %s31, 0
      %p58 = por %p56, %p57
      %s59 = ssub.s32 %s25, %s32
      %p60 = scmp.eq.s32.totalorder %s59, 0
      %s62 = sadd.s32 %s61, 1
      %s63 = scalar_select %p60, %s61, %s62
      %p66 = pneg %p60
      %p67 = scmp.eq.s32.totalorder %s25, 4
      %p68 = por %p66, %p67
      %p69 = scmp.ne.s32.totalorder %s61, %s64
      %p70 = scmp.eq.s32.totalorder %s25, 0
      %p71 = por %p69, %p70
      %p72 = scmp.ne.s32.totalorder %s61, %s64
      %p73 = scmp.eq.s32.totalorder %s30, 4
      %p74 = por %p72, %p73
      %p75 = scmp.ne.s32.totalorder %s64, %s65
      %p76 = scmp.eq.s32.totalorder %s30, 0
      %p77 = por %p75, %p76
      %p78 = scmp.ne.s32.totalorder %s64, %s65
      %p79 = scmp.eq.s32.totalorder %s31, 4
      %p80 = por %p78, %p79
      %p82 = scmp.ne.s32.totalorder %s65, %s81
      %p83 = scmp.eq.s32.totalorder %s31, 0
      %p84 = por %p82, %p83
      %s86 = sadd.s32 %s85, 1
      %p89 = scmp.eq.s32.totalorder %s25, 4
      %p90 = scmp.ne.s32.totalorder %s85, %s87
      %p91 = scmp.eq.s32.totalorder %s25, 0
      %p92 = por %p90, %p91
      %p93 = scmp.ne.s32.totalorder %s85, %s87
      %p94 = scmp.eq.s32.totalorder %s30, 4
      %p95 = por %p93, %p94
      %p96 = scmp.ne.s32.totalorder %s87, %s88
      %p97 = scmp.eq.s32.totalorder %s30, 0
      %p98 = por %p96, %p97
      %p99 = scmp.ne.s32.totalorder %s87, %s88
      %p100 = scmp.eq.s32.totalorder %s31, 4
      %p101 = por %p99, %p100
      %p103 = scmp.ne.s32.totalorder %s88, %s102
      %p104 = scmp.eq.s32.totalorder %s31, 0
      %p105 = por %p103, %p104
      %s107 = sadd.s32 %s106, 1
      %p110 = scmp.eq.s32.totalorder %s25, 4
      %p111 = scmp.ne.s32.totalorder %s106, %s108
      %p112 = scmp.eq.s32.totalorder %s25, 0
      %p113 = por %p111, %p112
      %p114 = scmp.ne.s32.totalorder %s106, %s108
      %p115 = scmp.eq.s32.totalorder %s30, 4
      %p116 = por %p114, %p115
      %p117 = scmp.ne.s32.totalorder %s108, %s109
      %p118 = scmp.eq.s32.totalorder %s30, 0
      %p119 = por %p117, %p118
      %p120 = scmp.ne.s32.totalorder %s108, %s109
      %p121 = scmp.eq.s32.totalorder %s31, 4
      %p122 = por %p120, %p121
      %p124 = scmp.ne.s32.totalorder %s109, %s123
      %p125 = scmp.eq.s32.totalorder %s31, 0
      %p126 = por %p124, %p125
      %s128 = sadd.s32 %s127, 1
      %p131 = scmp.eq.s32.totalorder %s25, 4
      %p132 = scmp.ne.s32.totalorder %s127, %s129
      %p133 = scmp.eq.s32.totalorder %s25, 0
      %p134 = por %p132, %p133
      %p135 = scmp.ne.s32.totalorder %s127, %s129
      %p136 = scmp.eq.s32.totalorder %s30, 4
      %p137 = por %p135, %p136
      %p138 = scmp.ne.s32.totalorder %s129, %s130
      %p139 = scmp.eq.s32.totalorder %s30, 0
      %p140 = por %p138, %p139
      %p141 = scmp.ne.s32.totalorder %s129, %s130
      %p142 = scmp.eq.s32.totalorder %s31, 4
      %p143 = por %p141, %p142
      %p145 = scmp.ne.s32.totalorder %s130, %s144
      %p146 = scmp.eq.s32.totalorder %s31, 0
      %p147 = por %p145, %p146
      %s149 = sadd.s32 %s148, 1
      %p152 = scmp.eq.s32.totalorder %s25, 4
      %p153 = scmp.ne.s32.totalorder %s148, %s150
      %p154 = scmp.eq.s32.totalorder %s25, 0
      %p155 = por %p153, %p154
      %p156 = scmp.ne.s32.totalorder %s148, %s150
      %p157 = scmp.eq.s32.totalorder %s30, 4
      %p158 = por %p156, %p157
      %p159 = scmp.ne.s32.totalorder %s150, %s151
      %p160 = scmp.eq.s32.totalorder %s30, 0
      %p161 = por %p159, %p160
      %p162 = scmp.ne.s32.totalorder %s150, %s151
      %p163 = scmp.eq.s32.totalorder %s31, 4
      %p164 = por %p162, %p163
      %p166 = scmp.ne.s32.totalorder %s151, %s165
      %p167 = scmp.eq.s32.totalorder %s31, 0
      %p168 = por %p166, %p167
      %s170 = sadd.s32 %s169, 1
      %p173 = scmp.eq.s32.totalorder %s25, 4
      %p174 = scmp.ne.s32.totalorder %s169, %s171
      %p175 = scmp.eq.s32.totalorder %s25, 0
      %p176 = por %p174, %p175
      %p177 = scmp.ne.s32.totalorder %s169, %s171
      %p178 = scmp.eq.s32.totalorder %s30, 4
      %p179 = por %p177, %p178
      %p180 = scmp.ne.s32.totalorder %s171, %s172
      %p181 = scmp.eq.s32.totalorder %s30, 0
      %p182 = por %p180, %p181
      %p183 = scmp.ne.s32.totalorder %s171, %s172
      %p184 = scmp.eq.s32.totalorder %s31, 4
      %p185 = por %p183, %p184
      %p187 = scmp.ne.s32.totalorder %s172, %s186
      %p188 = scmp.eq.s32.totalorder %s31, 0
      %p189 = por %p187, %p188
      %s191 = sadd.s32 %s190, 1
      %p194 = scmp.eq.s32.totalorder %s25, 4
      %p195 = scmp.ne.s32.totalorder %s190, %s192
      %p196 = scmp.eq.s32.totalorder %s25, 0
      %p197 = por %p195, %p196
      %p198 = scmp.ne.s32.totalorder %s190, %s192
      %p199 = scmp.eq.s32.totalorder %s30, 4
      %p200 = por %p198, %p199
      %p201 = scmp.ne.s32.totalorder %s192, %s193
      %p202 = scmp.eq.s32.totalorder %s30, 0
      %p203 = por %p201, %p202
      %p204 = scmp.ne.s32.totalorder %s192, %s193
      %p205 = scmp.eq.s32.totalorder %s31, 4
      %p206 = por %p204, %p205
      %p208 = scmp.ne.s32.totalorder %s193, %s207
      %p209 = scmp.eq.s32.totalorder %s31, 0
      %p210 = por %p208, %p209
      %s212 = sadd.s32 %s211, 1
      %p215 = scmp.eq.s32.totalorder %s25, 4
      %p216 = scmp.ne.s32.totalorder %s211, %s213
      %p217 = scmp.eq.s32.totalorder %s25, 0
      %p218 = por %p216, %p217
      %p219 = scmp.ne.s32.totalorder %s211, %s213
      %p220 = scmp.eq.s32.totalorder %s30, 4
      %p221 = por %p219, %p220
      %p222 = scmp.ne.s32.totalorder %s213, %s214
      %p223 = scmp.eq.s32.totalorder %s30, 0
      %p224 = por %p222, %p223
      %p225 = scmp.ne.s32.totalorder %s213, %s214
      %p226 = scmp.eq.s32.totalorder %s31, 4
      %p227 = por %p225, %p226
      %p229 = scmp.ne.s32.totalorder %s214, %s228
      %p230 = scmp.eq.s32.totalorder %s31, 0
      %p231 = por %p229, %p230
      %s233 = sadd.s32 %s232, 1
      %p236 = scmp.eq.s32.totalorder %s25, 4
      %p237 = scmp.ne.s32.totalorder %s232, %s234
      %p238 = scmp.eq.s32.totalorder %s25, 0
      %p239 = por %p237, %p238
      %p240 = scmp.ne.s32.totalorder %s232, %s234
      %p241 = scmp.eq.s32.totalorder %s30, 4
      %p242 = por %p240, %p241
      %p243 = scmp.ne.s32.totalorder %s234, %s235
      %p244 = scmp.eq.s32.totalorder %s30, 0
      %p245 = por %p243, %p244
      %p246 = scmp.ne.s32.totalorder %s234, %s235
      %p247 = scmp.eq.s32.totalorder %s31, 4
      %p248 = por %p246, %p247
      %p250 = scmp.ne.s32.totalorder %s235, %s249
      %p251 = scmp.eq.s32.totalorder %s31, 0
      %p252 = por %p250, %p251
      %p253 = scmp.le.s32.totalorder 1, %s25
      %p254 = scmp.lt.s32.totalorder %s25, 6
      %p255 = pnand %p253, %p254
      %p256 = pneg %p255
      // Predicated region
      $region9: #{tpu_custom_call.1} parent=5 // pred_check
        _
      $region10: #{tpu_custom_call.1} parent=5 // pred_check_branch
        %258 = sbr.rel (%p255) target = $region12
      $region11: #{tpu_custom_call.1} parent=5 // pred_region
        %s259 = ssub.s32 %s25, 1
        // Predicated region
        $region13: #{tpu_custom_call.1} parent=11 // pred_check
          %p260 = pneg %p98
        $region14: #{tpu_custom_call.1} parent=11 // pred_check_branch
          %262 = sbr.rel (%p260) target = $region16
        $region15: #{tpu_custom_call.1} parent=11 // pred_region
          %264 = vsyncadd [#allocation7], 0
          %s266 = sshll.u32 %s2, 4
          %s267 = int_to_ptr.hbm [resolvable:$true] %s266
          %s268 = sshll.u32 [#allocation8], 4
          %s269 = int_to_ptr.vmem [resolvable:$true] %s268
          %271 = dma.hbm_to_vmem [thread:$0]  %s267, 128, %s269, [#allocation7]
        $region16: #{tpu_custom_call.1} parent=11 // pred_fallthru
          _
        // Predicated region
        $region17: #{tpu_custom_call.1} parent=11 // pred_check
          %p272 = pneg %p119
        $region18: #{tpu_custom_call.1} parent=11 // pred_check_branch
          %274 = sbr.rel (%p272) target = $region20
        $region19: #{tpu_custom_call.1} parent=11 // pred_region
          %276 = vsyncadd [#allocation10], 0
          %s277 = sshll.u32 %s3, 4
          %s278 = int_to_ptr.hbm [resolvable:$true] %s277
          %s279 = sshll.u32 [#allocation9], 4
          %s280 = int_to_ptr.vmem [resolvable:$true] %s279
          %285 = dma.hbm_to_vmem [thread:$0]  %s278, 32768, %s280, [#allocation10], 256, 256, 16
        $region20: #{tpu_custom_call.1} parent=11 // pred_fallthru
          _
        // Predicated region
        $region21: #{tpu_custom_call.1} parent=11 // pred_check
          %p286 = pneg %p140
        $region22: #{tpu_custom_call.1} parent=11 // pred_check_branch
          %288 = sbr.rel (%p286) target = $region24
        $region23: #{tpu_custom_call.1} parent=11 // pred_region
          %290 = vsyncadd [#allocation10], 0
          %s292 = sshll.u32 %s4, 4
          %s293 = int_to_ptr.hbm [resolvable:$true] %s292
          %s294 = sshll.u32 [#allocation11], 4
          %s295 = int_to_ptr.vmem [resolvable:$true] %s294
          %297 = dma.hbm_to_vmem [thread:$0]  %s293, 64, %s295, [#allocation10]
        $region24: #{tpu_custom_call.1} parent=11 // pred_fallthru
          _
        // Predicated region
        $region25: #{tpu_custom_call.1} parent=11 // pred_check
          %p298 = pneg %p161
        $region26: #{tpu_custom_call.1} parent=11 // pred_check_branch
          %300 = sbr.rel (%p298) target = $region28
        $region27: #{tpu_custom_call.1} parent=11 // pred_region
          %302 = vsyncadd [#allocation13], 0
          %s303 = sshll.u32 %s5, 4
          %s304 = int_to_ptr.hbm [resolvable:$true] %s303
          %s305 = sshll.u32 [#allocation12], 4
          %s306 = int_to_ptr.vmem [resolvable:$true] %s305
          %311 = dma.hbm_to_vmem [thread:$0]  %s304, 4096, %s306, [#allocation13], 64, 64, 4
        $region28: #{tpu_custom_call.1} parent=11 // pred_fallthru
          _
        // Predicated region
        $region29: #{tpu_custom_call.1} parent=11 // pred_check
          %p312 = pneg %p182
        $region30: #{tpu_custom_call.1} parent=11 // pred_check_branch
          %314 = sbr.rel (%p312) target = $region32
        $region31: #{tpu_custom_call.1} parent=11 // pred_region
          %316 = vsyncadd [#allocation13], 0
          %s318 = sshll.u32 %s6, 4
          %s319 = int_to_ptr.hbm [resolvable:$true] %s318
          %s320 = sshll.u32 [#allocation14], 4
          %s321 = int_to_ptr.vmem [resolvable:$true] %s320
          %323 = dma.hbm_to_vmem [thread:$0]  %s319, 16, %s321, [#allocation13]
        $region32: #{tpu_custom_call.1} parent=11 // pred_fallthru
          _
        // Predicated region
        $region33: #{tpu_custom_call.1} parent=11 // pred_check
          %p324 = pneg %p203
        $region34: #{tpu_custom_call.1} parent=11 // pred_check_branch
          %326 = sbr.rel (%p324) target = $region36
        $region35: #{tpu_custom_call.1} parent=11 // pred_region
          %328 = vsyncadd [#allocation16], 0
          %s329 = sshll.u32 %s7, 4
          %s330 = int_to_ptr.hbm [resolvable:$true] %s329
          %s331 = sshll.u32 [#allocation15], 4
          %s332 = int_to_ptr.vmem [resolvable:$true] %s331
          %337 = dma.hbm_to_vmem [thread:$0]  %s330, 1024, %s332, [#allocation16], 64, 64, 4
        $region36: #{tpu_custom_call.1} parent=11 // pred_fallthru
          _
        // Predicated region
        $region37: #{tpu_custom_call.1} parent=11 // pred_check
          %p338 = pneg %p224
        $region38: #{tpu_custom_call.1} parent=11 // pred_check_branch
          %340 = sbr.rel (%p338) target = $region40
        $region39: #{tpu_custom_call.1} parent=11 // pred_region
          %342 = vsyncadd [#allocation16], 0
          %s344 = sshll.u32 %s8, 4
          %s345 = int_to_ptr.hbm [resolvable:$true] %s344
          %s346 = sshll.u32 [#allocation17], 4
          %s347 = int_to_ptr.vmem [resolvable:$true] %s346
          %349 = dma.hbm_to_vmem [thread:$0]  %s345, 16, %s347, [#allocation16]
        $region40: #{tpu_custom_call.1} parent=11 // pred_fallthru
          _
      $region12: #{tpu_custom_call.1} parent=5 // pred_fallthru
        _
      %p350 = scmp.lt.s32.totalorder %s25, 5
      // Predicated region
      $region41: #{tpu_custom_call.1} parent=5 // pred_check
        %p351 = pneg %p350
      $region42: #{tpu_custom_call.1} parent=5 // pred_check_branch
        %353 = sbr.rel (%p351) target = $region44
      $region43: #{tpu_custom_call.1} parent=5 // pred_region
        // Predicated region
        $region45: #{tpu_custom_call.1} parent=43 // pred_check
          %p354 = pneg %p45
        $region46: #{tpu_custom_call.1} parent=43 // pred_check_branch
          %356 = sbr.rel (%p354) target = $region48
        $region47: #{tpu_custom_call.1} parent=43 // pred_region
          %s357 = sand.u32 %s35, 1
          %s358 = scalar_lea.sflag [#allocation4], %s357
          %s359 = sand.u32 %s35, 1
          %s360 = smul.addr %s359, 64
          %s361 = scalar_lea.vmem [#allocation3], %s360
          %s362 = smul.u32 8, %s25
          %364 = vsyncadd %s358, 0
          %s365 = smul.addr %s362, 4
          %s366 = scalar_lea.hbm %s0, %s365
          %s367 = sshll.u32 %s366, 4
          %s368 = int_to_ptr.hbm [resolvable:$true] %s367
          %s369 = sshll.u32 %s361, 4
          %s370 = int_to_ptr.vmem [resolvable:$true] %s369
          %375 = dma.hbm_to_vmem [thread:$0]  %s368, 1024, %s370, %s358, 2560, 512, 32
        $region48: #{tpu_custom_call.1} parent=43 // pred_fallthru
          _
        // Predicated region
        $region49: #{tpu_custom_call.1} parent=43 // pred_check
          %p376 = pneg %p71
        $region50: #{tpu_custom_call.1} parent=43 // pred_check_branch
          %378 = sbr.rel (%p376) target = $region52
        $region51: #{tpu_custom_call.1} parent=43 // pred_region
          %s379 = sand.u32 %s25, 1
          %s380 = scalar_lea.sflag [#allocation7], %s379
          %s381 = sand.u32 %s61, 1
          %s382 = smul.addr %s381, 4096
          %s383 = scalar_lea.vmem [#allocation6], %s382
          %s384 = smul.u32 128, %s25
          %386 = vsyncadd %s380, 0
          %s387 = smul.addr %s384, 8
          %s388 = smul.addr %s387, 4
          %s389 = scalar_lea.hbm %s1, %s388
          %s390 = sshll.u32 %s389, 4
          %s391 = int_to_ptr.hbm [resolvable:$true] %s390
          %s392 = sshll.u32 %s383, 4
          %s393 = int_to_ptr.vmem [resolvable:$true] %s392
          %398 = dma.hbm_to_vmem [thread:$0]  %s391, 65536, %s393, %s380, 512, 512, 32
        $region52: #{tpu_custom_call.1} parent=43 // pred_fallthru
          _
      $region44: #{tpu_custom_call.1} parent=5 // pred_fallthru
        _
      %p399 = scmp.le.s32.totalorder 1, %s25
      %p400 = scmp.lt.s32.totalorder %s25, 6
      %p401 = pnand %p399, %p400
      %p402 = pneg %p401
      // Predicated region
      $region53: #{tpu_custom_call.1} parent=5 // pred_check
        _
      $region54: #{tpu_custom_call.1} parent=5 // pred_check_branch
        %404 = sbr.rel (%p401) target = $region56
      $region55: #{tpu_custom_call.1} parent=5 // pred_region
        %s405 = ssub.s32 %s25, 1
        %s406 = sand.u32 %s38, 1
        %s407 = scalar_lea.sflag [#allocation4], %s406
        %s408 = sand.u32 %s38, 1
        %s409 = smul.addr %s408, 64
        %s410 = scalar_lea.vmem [#allocation3], %s409
        // Predicated region
        $region57: #{tpu_custom_call.1} parent=55 // pred_check
          %p411 = pneg %p51
        $region58: #{tpu_custom_call.1} parent=55 // pred_check_branch
          %413 = sbr.rel (%p411) target = $region60
        $region59: #{tpu_custom_call.1} parent=55 // pred_region
          %415 = dma.done %s407, 1024
        $region60: #{tpu_custom_call.1} parent=55 // pred_fallthru
          _
        %s416 = sand.u32 %s30, 1
        %s417 = scalar_lea.sflag [#allocation7], %s416
        %s418 = sand.u32 %s64, 1
        %s419 = smul.addr %s418, 4096
        %s420 = scalar_lea.vmem [#allocation6], %s419
        // Predicated region
        $region61: #{tpu_custom_call.1} parent=55 // pred_check
          %p421 = pneg %p77
        $region62: #{tpu_custom_call.1} parent=55 // pred_check_branch
          %423 = sbr.rel (%p421) target = $region64
        $region63: #{tpu_custom_call.1} parent=55 // pred_region
          %425 = dma.done %s417, 65536
        $region64: #{tpu_custom_call.1} parent=55 // pred_fallthru
          _
        // Predicated region
        $region65: #{tpu_custom_call.1} parent=55 // pred_check
          %p426 = pneg %p98
        $region66: #{tpu_custom_call.1} parent=55 // pred_check_branch
          %428 = sbr.rel (%p426) target = $region68
        $region67: #{tpu_custom_call.1} parent=55 // pred_region
          %430 = dma.done [#allocation7], 128
        $region68: #{tpu_custom_call.1} parent=55 // pred_fallthru
          _
        // Predicated region
        $region69: #{tpu_custom_call.1} parent=55 // pred_check
          %p431 = pneg %p119
        $region70: #{tpu_custom_call.1} parent=55 // pred_check_branch
          %433 = sbr.rel (%p431) target = $region72
        $region71: #{tpu_custom_call.1} parent=55 // pred_region
          %435 = dma.done [#allocation10], 32768
        $region72: #{tpu_custom_call.1} parent=55 // pred_fallthru
          _
        // Predicated region
        $region73: #{tpu_custom_call.1} parent=55 // pred_check
          %p436 = pneg %p140
        $region74: #{tpu_custom_call.1} parent=55 // pred_check_branch
          %438 = sbr.rel (%p436) target = $region76
        $region75: #{tpu_custom_call.1} parent=55 // pred_region
          %440 = dma.done [#allocation10], 64
        $region76: #{tpu_custom_call.1} parent=55 // pred_fallthru
          _
        // Predicated region
        $region77: #{tpu_custom_call.1} parent=55 // pred_check
          %p441 = pneg %p161
        $region78: #{tpu_custom_call.1} parent=55 // pred_check_branch
          %443 = sbr.rel (%p441) target = $region80
        $region79: #{tpu_custom_call.1} parent=55 // pred_region
          %445 = dma.done [#allocation13], 4096
        $region80: #{tpu_custom_call.1} parent=55 // pred_fallthru
          _
        // Predicated region
        $region81: #{tpu_custom_call.1} parent=55 // pred_check
          %p446 = pneg %p182
        $region82: #{tpu_custom_call.1} parent=55 // pred_check_branch
          %448 = sbr.rel (%p446) target = $region84
        $region83: #{tpu_custom_call.1} parent=55 // pred_region
          %450 = dma.done [#allocation13], 16
        $region84: #{tpu_custom_call.1} parent=55 // pred_fallthru
          _
        // Predicated region
        $region85: #{tpu_custom_call.1} parent=55 // pred_check
          %p451 = pneg %p203
        $region86: #{tpu_custom_call.1} parent=55 // pred_check_branch
          %453 = sbr.rel (%p451) target = $region88
        $region87: #{tpu_custom_call.1} parent=55 // pred_region
          %455 = dma.done [#allocation16], 1024
        $region88: #{tpu_custom_call.1} parent=55 // pred_fallthru
          _
        // Predicated region
        $region89: #{tpu_custom_call.1} parent=55 // pred_check
          %p456 = pneg %p224
        $region90: #{tpu_custom_call.1} parent=55 // pred_check_branch
          %458 = sbr.rel (%p456) target = $region92
        $region91: #{tpu_custom_call.1} parent=55 // pred_region
          %460 = dma.done [#allocation16], 16
        $region92: #{tpu_custom_call.1} parent=55 // pred_fallthru
          _
        %s461 = sand.u32 %s38, 1
        %s462 = scalar_lea.sflag [#allocation4], %s461
        %s463 = sand.u32 %s38, 1
        %s464 = smul.addr %s463, 64
        %s465 = scalar_lea.vmem [#allocation3], %s464
        %p466 = pneg %p51
        %p467 = pneg %p48
        %s468 = sand.u32 %s30, 1
        %s469 = scalar_lea.sflag [#allocation7], %s468
        %s470 = sand.u32 %s64, 1
        %s471 = smul.addr %s470, 4096
        %s472 = scalar_lea.vmem [#allocation6], %s471
        %p473 = pneg %p77
        %p474 = pneg %p74
        %p475 = pneg %p98
        %p476 = pneg %p95
        %p477 = pneg %p119
        %p478 = pneg %p116
        %p479 = pneg %p140
        %p480 = pneg %p137
        %p481 = pneg %p161
        %p482 = pneg %p158
        %p483 = pneg %p182
        %p484 = pneg %p179
        %p485 = pneg %p203
        %p486 = pneg %p200
        %p487 = pneg %p224
        %p488 = pneg %p221
        %p489 = pneg %p245
        %p490 = pneg %p242
        %s491 = smul.u32 8, %s30
        %s492 = smul.u32 128, %s30
        %p493 = scmp.eq.s32.totalorder %s30, 0
        // Predicated region
        $region93: #{tpu_custom_call.1} parent=55 // pred_check
          %p494 = pneg %p493
        $region94: #{tpu_custom_call.1} parent=55 // pred_check_branch
          %496 = sbr.rel (%p494) target = $region96
        $region95: #{tpu_custom_call.1} parent=55 // pred_region
          %497 = vst [vmem:[#allocation2] sm:$0xff] 0.0
          %498 = vst [vmem:[#allocation2 + $0x8] sm:$0xff] 0.0
          %499 = vst [vmem:[#allocation2 + $0x10] sm:$0xff] 0.0
          %500 = vst [vmem:[#allocation2 + $0x18] sm:$0xff] 0.0
          %501 = vst [vmem:[#allocation2 + $0x20] sm:$0xff] 0.0
          %502 = vst [vmem:[#allocation2 + $0x28] sm:$0xff] 0.0
          %503 = vst [vmem:[#allocation2 + $0x30] sm:$0xff] 0.0
          %504 = vst [vmem:[#allocation2 + $0x38] sm:$0xff] 0.0
          %505 = vst [vmem:[#allocation2 + $0x40] sm:$0xff] 0.0
          %506 = vst [vmem:[#allocation2 + $0x48] sm:$0xff] 0.0
          %507 = vst [vmem:[#allocation2 + $0x50] sm:$0xff] 0.0
          %508 = vst [vmem:[#allocation2 + $0x58] sm:$0xff] 0.0
          %509 = vst [vmem:[#allocation2 + $0x60] sm:$0xff] 0.0
          %510 = vst [vmem:[#allocation2 + $0x68] sm:$0xff] 0.0
          %511 = vst [vmem:[#allocation2 + $0x70] sm:$0xff] 0.0
          %512 = vst [vmem:[#allocation2 + $0x78] sm:$0xff] 0.0
        $region96: #{tpu_custom_call.1} parent=55 // pred_fallthru
          _
        %v513 = vld [vmem:[#allocation2] sm:$0xff]
        %v514 = vld [vmem:[#allocation2 + $0x8] sm:$0xff]
        %v515 = vld [vmem:[#allocation2 + $0x10] sm:$0xff]
        %v516 = vld [vmem:[#allocation2 + $0x18] sm:$0xff]
        %v517 = vld [vmem:[#allocation2 + $0x20] sm:$0xff]
        %v518 = vld [vmem:[#allocation2 + $0x28] sm:$0xff]
        %v519 = vld [vmem:[#allocation2 + $0x30] sm:$0xff]
        %v520 = vld [vmem:[#allocation2 + $0x38] sm:$0xff]
        %v521 = vld [vmem:[#allocation2 + $0x40] sm:$0xff]
        %v522 = vld [vmem:[#allocation2 + $0x48] sm:$0xff]
        %v523 = vld [vmem:[#allocation2 + $0x50] sm:$0xff]
        %v524 = vld [vmem:[#allocation2 + $0x58] sm:$0xff]
        %v525 = vld [vmem:[#allocation2 + $0x60] sm:$0xff]
        %v526 = vld [vmem:[#allocation2 + $0x68] sm:$0xff]
        %v527 = vld [vmem:[#allocation2 + $0x70] sm:$0xff]
        %v528 = vld [vmem:[#allocation2 + $0x78] sm:$0xff]
        %v529 = vld [vmem:[%s410] sm:$0xff]
        %v530 = vld [vmem:[%s410 + $0x8] sm:$0xff]
        %v531 = vld [vmem:[%s410 + $0x10] sm:$0xff]
        %v532 = vld [vmem:[%s410 + $0x18] sm:$0xff]
        %v533 = vld [vmem:[%s410 + $0x20] sm:$0xff]
        %v534 = vld [vmem:[%s410 + $0x28] sm:$0xff]
        %v535 = vld [vmem:[%s410 + $0x30] sm:$0xff]
        %v536 = vld [vmem:[%s410 + $0x38] sm:$0xff]
        %v537 = vld [vmem:[%s420] sm:$0xff]
        %v538 = vld [vmem:[%s420 + $0x8] sm:$0xff]
        %v539 = vld [vmem:[%s420 + $0x10] sm:$0xff]
        %v540 = vld [vmem:[%s420 + $0x18] sm:$0xff]
        %v541 = vld [vmem:[%s420 + $0x20] sm:$0xff]
        %v542 = vld [vmem:[%s420 + $0x28] sm:$0xff]
        %v543 = vld [vmem:[%s420 + $0x30] sm:$0xff]
        %v544 = vld [vmem:[%s420 + $0x38] sm:$0xff]
        %v545 = vld [vmem:[%s420 + $0x40] sm:$0xff]
        %v546 = vld [vmem:[%s420 + $0x48] sm:$0xff]
        %v547 = vld [vmem:[%s420 + $0x50] sm:$0xff]
        %v548 = vld [vmem:[%s420 + $0x58] sm:$0xff]
        %v549 = vld [vmem:[%s420 + $0x60] sm:$0xff]
        %v550 = vld [vmem:[%s420 + $0x68] sm:$0xff]
        %v551 = vld [vmem:[%s420 + $0x70] sm:$0xff]
        %v552 = vld [vmem:[%s420 + $0x78] sm:$0xff]
        %v553 = vld [vmem:[%s420 + $0x80] sm:$0xff]
        %v554 = vld [vmem:[%s420 + $0x88] sm:$0xff]
        %v555 = vld [vmem:[%s420 + $0x90] sm:$0xff]
        %v556 = vld [vmem:[%s420 + $0x98] sm:$0xff]
        %v557 = vld [vmem:[%s420 + $0xa0] sm:$0xff]
        %v558 = vld [vmem:[%s420 + $0xa8] sm:$0xff]
        %v559 = vld [vmem:[%s420 + $0xb0] sm:$0xff]
        %v560 = vld [vmem:[%s420 + $0xb8] sm:$0xff]
        %v561 = vld [vmem:[%s420 + $0xc0] sm:$0xff]
        %v562 = vld [vmem:[%s420 + $0xc8] sm:$0xff]
        %v563 = vld [vmem:[%s420 + $0xd0] sm:$0xff]
        %v564 = vld [vmem:[%s420 + $0xd8] sm:$0xff]
        %v565 = vld [vmem:[%s420 + $0xe0] sm:$0xff]
        %v566 = vld [vmem:[%s420 + $0xe8] sm:$0xff]
        %v567 = vld [vmem:[%s420 + $0xf0] sm:$0xff]
        %v568 = vld [vmem:[%s420 + $0xf8] sm:$0xff]
        %v569 = vld [vmem:[%s420 + $0x100] sm:$0xff]
        %v570 = vld [vmem:[%s420 + $0x108] sm:$0xff]
        %v571 = vld [vmem:[%s420 + $0x110] sm:$0xff]
        %v572 = vld [vmem:[%s420 + $0x118] sm:$0xff]
        %v573 = vld [vmem:[%s420 + $0x120] sm:$0xff]
        %v574 = vld [vmem:[%s420 + $0x128] sm:$0xff]
        %v575 = vld [vmem:[%s420 + $0x130] sm:$0xff]
        %v576 = vld [vmem:[%s420 + $0x138] sm:$0xff]
        %v577 = vld [vmem:[%s420 + $0x140] sm:$0xff]
        %v578 = vld [vmem:[%s420 + $0x148] sm:$0xff]
        %v579 = vld [vmem:[%s420 + $0x150] sm:$0xff]
        %v580 = vld [vmem:[%s420 + $0x158] sm:$0xff]
        %v581 = vld [vmem:[%s420 + $0x160] sm:$0xff]
        %v582 = vld [vmem:[%s420 + $0x168] sm:$0xff]
        %v583 = vld [vmem:[%s420 + $0x170] sm:$0xff]
        %v584 = vld [vmem:[%s420 + $0x178] sm:$0xff]
        %v585 = vld [vmem:[%s420 + $0x180] sm:$0xff]
        %v586 = vld [vmem:[%s420 + $0x188] sm:$0xff]
        %v587 = vld [vmem:[%s420 + $0x190] sm:$0xff]
        %v588 = vld [vmem:[%s420 + $0x198] sm:$0xff]
        %v589 = vld [vmem:[%s420 + $0x1a0] sm:$0xff]
        %v590 = vld [vmem:[%s420 + $0x1a8] sm:$0xff]
        %v591 = vld [vmem:[%s420 + $0x1b0] sm:$0xff]
        %v592 = vld [vmem:[%s420 + $0x1b8] sm:$0xff]
        %v593 = vld [vmem:[%s420 + $0x1c0] sm:$0xff]
        %v594 = vld [vmem:[%s420 + $0x1c8] sm:$0xff]
        %v595 = vld [vmem:[%s420 + $0x1d0] sm:$0xff]
        %v596 = vld [vmem:[%s420 + $0x1d8] sm:$0xff]
        %v597 = vld [vmem:[%s420 + $0x1e0] sm:$0xff]
        %v598 = vld [vmem:[%s420 + $0x1e8] sm:$0xff]
        %v599 = vld [vmem:[%s420 + $0x1f0] sm:$0xff]
        %v600 = vld [vmem:[%s420 + $0x1f8] sm:$0xff]
        %v601 = vld [vmem:[%s420 + $0x200] sm:$0xff]
        %v602 = vld [vmem:[%s420 + $0x208] sm:$0xff]
        %v603 = vld [vmem:[%s420 + $0x210] sm:$0xff]
        %v604 = vld [vmem:[%s420 + $0x218] sm:$0xff]
        %v605 = vld [vmem:[%s420 + $0x220] sm:$0xff]
        %v606 = vld [vmem:[%s420 + $0x228] sm:$0xff]
        %v607 = vld [vmem:[%s420 + $0x230] sm:$0xff]
        %v608 = vld [vmem:[%s420 + $0x238] sm:$0xff]
        %v609 = vld [vmem:[%s420 + $0x240] sm:$0xff]
        %v610 = vld [vmem:[%s420 + $0x248] sm:$0xff]
        %v611 = vld [vmem:[%s420 + $0x250] sm:$0xff]
        %v612 = vld [vmem:[%s420 + $0x258] sm:$0xff]
        %v613 = vld [vmem:[%s420 + $0x260] sm:$0xff]
        %v614 = vld [vmem:[%s420 + $0x268] sm:$0xff]
        %v615 = vld [vmem:[%s420 + $0x270] sm:$0xff]
        %v616 = vld [vmem:[%s420 + $0x278] sm:$0xff]
        %v617 = vld [vmem:[%s420 + $0x280] sm:$0xff]
        %v618 = vld [vmem:[%s420 + $0x288] sm:$0xff]
        %v619 = vld [vmem:[%s420 + $0x290] sm:$0xff]
        %v620 = vld [vmem:[%s420 + $0x298] sm:$0xff]
        %v621 = vld [vmem:[%s420 + $0x2a0] sm:$0xff]
        %v622 = vld [vmem:[%s420 + $0x2a8] sm:$0xff]
        %v623 = vld [vmem:[%s420 + $0x2b0] sm:$0xff]
        %v624 = vld [vmem:[%s420 + $0x2b8] sm:$0xff]
        %v625 = vld [vmem:[%s420 + $0x2c0] sm:$0xff]
        %v626 = vld [vmem:[%s420 + $0x2c8] sm:$0xff]
        %v627 = vld [vmem:[%s420 + $0x2d0] sm:$0xff]
        %v628 = vld [vmem:[%s420 + $0x2d8] sm:$0xff]
        %v629 = vld [vmem:[%s420 + $0x2e0] sm:$0xff]
        %v630 = vld [vmem:[%s420 + $0x2e8] sm:$0xff]
        %v631 = vld [vmem:[%s420 + $0x2f0] sm:$0xff]
        %v632 = vld [vmem:[%s420 + $0x2f8] sm:$0xff]
        %v633 = vld [vmem:[%s420 + $0x300] sm:$0xff]
        %v634 = vld [vmem:[%s420 + $0x308] sm:$0xff]
        %v635 = vld [vmem:[%s420 + $0x310] sm:$0xff]
        %v636 = vld [vmem:[%s420 + $0x318] sm:$0xff]
        %v637 = vld [vmem:[%s420 + $0x320] sm:$0xff]
        %v638 = vld [vmem:[%s420 + $0x328] sm:$0xff]
        %v639 = vld [vmem:[%s420 + $0x330] sm:$0xff]
        %v640 = vld [vmem:[%s420 + $0x338] sm:$0xff]
        %v641 = vld [vmem:[%s420 + $0x340] sm:$0xff]
        %v642 = vld [vmem:[%s420 + $0x348] sm:$0xff]
        %v643 = vld [vmem:[%s420 + $0x350] sm:$0xff]
        %v644 = vld [vmem:[%s420 + $0x358] sm:$0xff]
        %v645 = vld [vmem:[%s420 + $0x360] sm:$0xff]
        %v646 = vld [vmem:[%s420 + $0x368] sm:$0xff]
        %v647 = vld [vmem:[%s420 + $0x370] sm:$0xff]
        %v648 = vld [vmem:[%s420 + $0x378] sm:$0xff]
        %v649 = vld [vmem:[%s420 + $0x380] sm:$0xff]
        %v650 = vld [vmem:[%s420 + $0x388] sm:$0xff]
        %v651 = vld [vmem:[%s420 + $0x390] sm:$0xff]
        %v652 = vld [vmem:[%s420 + $0x398] sm:$0xff]
        %v653 = vld [vmem:[%s420 + $0x3a0] sm:$0xff]
        %v654 = vld [vmem:[%s420 + $0x3a8] sm:$0xff]
        %v655 = vld [vmem:[%s420 + $0x3b0] sm:$0xff]
        %v656 = vld [vmem:[%s420 + $0x3b8] sm:$0xff]
        %v657 = vld [vmem:[%s420 + $0x3c0] sm:$0xff]
        %v658 = vld [vmem:[%s420 + $0x3c8] sm:$0xff]
        %v659 = vld [vmem:[%s420 + $0x3d0] sm:$0xff]
        %v660 = vld [vmem:[%s420 + $0x3d8] sm:$0xff]
        %v661 = vld [vmem:[%s420 + $0x3e0] sm:$0xff]
        %v662 = vld [vmem:[%s420 + $0x3e8] sm:$0xff]
        %v663 = vld [vmem:[%s420 + $0x3f0] sm:$0xff]
        %v664 = vld [vmem:[%s420 + $0x3f8] sm:$0xff]
        %v665 = vld [vmem:[%s420 + $0x400] sm:$0xff]
        %v666 = vld [vmem:[%s420 + $0x408] sm:$0xff]
        %v667 = vld [vmem:[%s420 + $0x410] sm:$0xff]
        %v668 = vld [vmem:[%s420 + $0x418] sm:$0xff]
        %v669 = vld [vmem:[%s420 + $0x420] sm:$0xff]
        %v670 = vld [vmem:[%s420 + $0x428] sm:$0xff]
        %v671 = vld [vmem:[%s420 + $0x430] sm:$0xff]
        %v672 = vld [vmem:[%s420 + $0x438] sm:$0xff]
        %v673 = vld [vmem:[%s420 + $0x440] sm:$0xff]
        %v674 = vld [vmem:[%s420 + $0x448] sm:$0xff]
        %v675 = vld [vmem:[%s420 + $0x450] sm:$0xff]
        %v676 = vld [vmem:[%s420 + $0x458] sm:$0xff]
        %v677 = vld [vmem:[%s420 + $0x460] sm:$0xff]
        %v678 = vld [vmem:[%s420 + $0x468] sm:$0xff]
        %v679 = vld [vmem:[%s420 + $0x470] sm:$0xff]
        %v680 = vld [vmem:[%s420 + $0x478] sm:$0xff]
        %v681 = vld [vmem:[%s420 + $0x480] sm:$0xff]
        %v682 = vld [vmem:[%s420 + $0x488] sm:$0xff]
        %v683 = vld [vmem:[%s420 + $0x490] sm:$0xff]
        %v684 = vld [vmem:[%s420 + $0x498] sm:$0xff]
        %v685 = vld [vmem:[%s420 + $0x4a0] sm:$0xff]
        %v686 = vld [vmem:[%s420 + $0x4a8] sm:$0xff]
        %v687 = vld [vmem:[%s420 + $0x4b0] sm:$0xff]
        %v688 = vld [vmem:[%s420 + $0x4b8] sm:$0xff]
        %v689 = vld [vmem:[%s420 + $0x4c0] sm:$0xff]
        %v690 = vld [vmem:[%s420 + $0x4c8] sm:$0xff]
        %v691 = vld [vmem:[%s420 + $0x4d0] sm:$0xff]
        %v692 = vld [vmem:[%s420 + $0x4d8] sm:$0xff]
        %v693 = vld [vmem:[%s420 + $0x4e0] sm:$0xff]
        %v694 = vld [vmem:[%s420 + $0x4e8] sm:$0xff]
        %v695 = vld [vmem:[%s420 + $0x4f0] sm:$0xff]
        %v696 = vld [vmem:[%s420 + $0x4f8] sm:$0xff]
        %v697 = vld [vmem:[%s420 + $0x500] sm:$0xff]
        %v698 = vld [vmem:[%s420 + $0x508] sm:$0xff]
        %v699 = vld [vmem:[%s420 + $0x510] sm:$0xff]
        %v700 = vld [vmem:[%s420 + $0x518] sm:$0xff]
        %v701 = vld [vmem:[%s420 + $0x520] sm:$0xff]
        %v702 = vld [vmem:[%s420 + $0x528] sm:$0xff]
        %v703 = vld [vmem:[%s420 + $0x530] sm:$0xff]
        %v704 = vld [vmem:[%s420 + $0x538] sm:$0xff]
        %v705 = vld [vmem:[%s420 + $0x540] sm:$0xff]
        %v706 = vld [vmem:[%s420 + $0x548] sm:$0xff]
        %v707 = vld [vmem:[%s420 + $0x550] sm:$0xff]
        %v708 = vld [vmem:[%s420 + $0x558] sm:$0xff]
        %v709 = vld [vmem:[%s420 + $0x560] sm:$0xff]
        %v710 = vld [vmem:[%s420 + $0x568] sm:$0xff]
        %v711 = vld [vmem:[%s420 + $0x570] sm:$0xff]
        %v712 = vld [vmem:[%s420 + $0x578] sm:$0xff]
        %v713 = vld [vmem:[%s420 + $0x580] sm:$0xff]
        %v714 = vld [vmem:[%s420 + $0x588] sm:$0xff]
        %v715 = vld [vmem:[%s420 + $0x590] sm:$0xff]
        %v716 = vld [vmem:[%s420 + $0x598] sm:$0xff]
        %v717 = vld [vmem:[%s420 + $0x5a0] sm:$0xff]
        %v718 = vld [vmem:[%s420 + $0x5a8] sm:$0xff]
        %v719 = vld [vmem:[%s420 + $0x5b0] sm:$0xff]
        %v720 = vld [vmem:[%s420 + $0x5b8] sm:$0xff]
        %v721 = vld [vmem:[%s420 + $0x5c0] sm:$0xff]
        %v722 = vld [vmem:[%s420 + $0x5c8] sm:$0xff]
        %v723 = vld [vmem:[%s420 + $0x5d0] sm:$0xff]
        %v724 = vld [vmem:[%s420 + $0x5d8] sm:$0xff]
        %v725 = vld [vmem:[%s420 + $0x5e0] sm:$0xff]
        %v726 = vld [vmem:[%s420 + $0x5e8] sm:$0xff]
        %v727 = vld [vmem:[%s420 + $0x5f0] sm:$0xff]
        %v728 = vld [vmem:[%s420 + $0x5f8] sm:$0xff]
        %v729 = vld [vmem:[%s420 + $0x600] sm:$0xff]
        %v730 = vld [vmem:[%s420 + $0x608] sm:$0xff]
        %v731 = vld [vmem:[%s420 + $0x610] sm:$0xff]
        %v732 = vld [vmem:[%s420 + $0x618] sm:$0xff]
        %v733 = vld [vmem:[%s420 + $0x620] sm:$0xff]
        %v734 = vld [vmem:[%s420 + $0x628] sm:$0xff]
        %v735 = vld [vmem:[%s420 + $0x630] sm:$0xff]
        %v736 = vld [vmem:[%s420 + $0x638] sm:$0xff]
        %v737 = vld [vmem:[%s420 + $0x640] sm:$0xff]
        %v738 = vld [vmem:[%s420 + $0x648] sm:$0xff]
        %v739 = vld [vmem:[%s420 + $0x650] sm:$0xff]
        %v740 = vld [vmem:[%s420 + $0x658] sm:$0xff]
        %v741 = vld [vmem:[%s420 + $0x660] sm:$0xff]
        %v742 = vld [vmem:[%s420 + $0x668] sm:$0xff]
        %v743 = vld [vmem:[%s420 + $0x670] sm:$0xff]
        %v744 = vld [vmem:[%s420 + $0x678] sm:$0xff]
        %v745 = vld [vmem:[%s420 + $0x680] sm:$0xff]
        %v746 = vld [vmem:[%s420 + $0x688] sm:$0xff]
        %v747 = vld [vmem:[%s420 + $0x690] sm:$0xff]
        %v748 = vld [vmem:[%s420 + $0x698] sm:$0xff]
        %v749 = vld [vmem:[%s420 + $0x6a0] sm:$0xff]
        %v750 = vld [vmem:[%s420 + $0x6a8] sm:$0xff]
        %v751 = vld [vmem:[%s420 + $0x6b0] sm:$0xff]
        %v752 = vld [vmem:[%s420 + $0x6b8] sm:$0xff]
        %v753 = vld [vmem:[%s420 + $0x6c0] sm:$0xff]
        %v754 = vld [vmem:[%s420 + $0x6c8] sm:$0xff]
        %v755 = vld [vmem:[%s420 + $0x6d0] sm:$0xff]
        %v756 = vld [vmem:[%s420 + $0x6d8] sm:$0xff]
        %v757 = vld [vmem:[%s420 + $0x6e0] sm:$0xff]
        %v758 = vld [vmem:[%s420 + $0x6e8] sm:$0xff]
        %v759 = vld [vmem:[%s420 + $0x6f0] sm:$0xff]
        %v760 = vld [vmem:[%s420 + $0x6f8] sm:$0xff]
        %v761 = vld [vmem:[%s420 + $0x700] sm:$0xff]
        %v762 = vld [vmem:[%s420 + $0x708] sm:$0xff]
        %v763 = vld [vmem:[%s420 + $0x710] sm:$0xff]
        %v764 = vld [vmem:[%s420 + $0x718] sm:$0xff]
        %v765 = vld [vmem:[%s420 + $0x720] sm:$0xff]
        %v766 = vld [vmem:[%s420 + $0x728] sm:$0xff]
        %v767 = vld [vmem:[%s420 + $0x730] sm:$0xff]
        %v768 = vld [vmem:[%s420 + $0x738] sm:$0xff]
        %v769 = vld [vmem:[%s420 + $0x740] sm:$0xff]
        %v770 = vld [vmem:[%s420 + $0x748] sm:$0xff]
        %v771 = vld [vmem:[%s420 + $0x750] sm:$0xff]
        %v772 = vld [vmem:[%s420 + $0x758] sm:$0xff]
        %v773 = vld [vmem:[%s420 + $0x760] sm:$0xff]
        %v774 = vld [vmem:[%s420 + $0x768] sm:$0xff]
        %v775 = vld [vmem:[%s420 + $0x770] sm:$0xff]
        %v776 = vld [vmem:[%s420 + $0x778] sm:$0xff]
        %v777 = vld [vmem:[%s420 + $0x780] sm:$0xff]
        %v778 = vld [vmem:[%s420 + $0x788] sm:$0xff]
        %v779 = vld [vmem:[%s420 + $0x790] sm:$0xff]
        %v780 = vld [vmem:[%s420 + $0x798] sm:$0xff]
        %v781 = vld [vmem:[%s420 + $0x7a0] sm:$0xff]
        %v782 = vld [vmem:[%s420 + $0x7a8] sm:$0xff]
        %v783 = vld [vmem:[%s420 + $0x7b0] sm:$0xff]
        %v784 = vld [vmem:[%s420 + $0x7b8] sm:$0xff]
        %v785 = vld [vmem:[%s420 + $0x7c0] sm:$0xff]
        %v786 = vld [vmem:[%s420 + $0x7c8] sm:$0xff]
        %v787 = vld [vmem:[%s420 + $0x7d0] sm:$0xff]
        %v788 = vld [vmem:[%s420 + $0x7d8] sm:$0xff]
        %v789 = vld [vmem:[%s420 + $0x7e0] sm:$0xff]
        %v790 = vld [vmem:[%s420 + $0x7e8] sm:$0xff]
        %v791 = vld [vmem:[%s420 + $0x7f0] sm:$0xff]
        %v792 = vld [vmem:[%s420 + $0x7f8] sm:$0xff]
        %v793 = vld [vmem:[%s420 + $0x800] sm:$0xff]
        %v794 = vld [vmem:[%s420 + $0x808] sm:$0xff]
        %v795 = vld [vmem:[%s420 + $0x810] sm:$0xff]
        %v796 = vld [vmem:[%s420 + $0x818] sm:$0xff]
        %v797 = vld [vmem:[%s420 + $0x820] sm:$0xff]
        %v798 = vld [vmem:[%s420 + $0x828] sm:$0xff]
        %v799 = vld [vmem:[%s420 + $0x830] sm:$0xff]
        %v800 = vld [vmem:[%s420 + $0x838] sm:$0xff]
        %v801 = vld [vmem:[%s420 + $0x840] sm:$0xff]
        %v802 = vld [vmem:[%s420 + $0x848] sm:$0xff]
        %v803 = vld [vmem:[%s420 + $0x850] sm:$0xff]
        %v804 = vld [vmem:[%s420 + $0x858] sm:$0xff]
        %v805 = vld [vmem:[%s420 + $0x860] sm:$0xff]
        %v806 = vld [vmem:[%s420 + $0x868] sm:$0xff]
        %v807 = vld [vmem:[%s420 + $0x870] sm:$0xff]
        %v808 = vld [vmem:[%s420 + $0x878] sm:$0xff]
        %v809 = vld [vmem:[%s420 + $0x880] sm:$0xff]
        %v810 = vld [vmem:[%s420 + $0x888] sm:$0xff]
        %v811 = vld [vmem:[%s420 + $0x890] sm:$0xff]
        %v812 = vld [vmem:[%s420 + $0x898] sm:$0xff]
        %v813 = vld [vmem:[%s420 + $0x8a0] sm:$0xff]
        %v814 = vld [vmem:[%s420 + $0x8a8] sm:$0xff]
        %v815 = vld [vmem:[%s420 + $0x8b0] sm:$0xff]
        %v816 = vld [vmem:[%s420 + $0x8b8] sm:$0xff]
        %v817 = vld [vmem:[%s420 + $0x8c0] sm:$0xff]
        %v818 = vld [vmem:[%s420 + $0x8c8] sm:$0xff]
        %v819 = vld [vmem:[%s420 + $0x8d0] sm:$0xff]
        %v820 = vld [vmem:[%s420 + $0x8d8] sm:$0xff]
        %v821 = vld [vmem:[%s420 + $0x8e0] sm:$0xff]
        %v822 = vld [vmem:[%s420 + $0x8e8] sm:$0xff]
        %v823 = vld [vmem:[%s420 + $0x8f0] sm:$0xff]
        %v824 = vld [vmem:[%s420 + $0x8f8] sm:$0xff]
        %v825 = vld [vmem:[%s420 + $0x900] sm:$0xff]
        %v826 = vld [vmem:[%s420 + $0x908] sm:$0xff]
        %v827 = vld [vmem:[%s420 + $0x910] sm:$0xff]
        %v828 = vld [vmem:[%s420 + $0x918] sm:$0xff]
        %v829 = vld [vmem:[%s420 + $0x920] sm:$0xff]
        %v830 = vld [vmem:[%s420 + $0x928] sm:$0xff]
        %v831 = vld [vmem:[%s420 + $0x930] sm:$0xff]
        %v832 = vld [vmem:[%s420 + $0x938] sm:$0xff]
        %v833 = vld [vmem:[%s420 + $0x940] sm:$0xff]
        %v834 = vld [vmem:[%s420 + $0x948] sm:$0xff]
        %v835 = vld [vmem:[%s420 + $0x950] sm:$0xff]
        %v836 = vld [vmem:[%s420 + $0x958] sm:$0xff]
        %v837 = vld [vmem:[%s420 + $0x960] sm:$0xff]
        %v838 = vld [vmem:[%s420 + $0x968] sm:$0xff]
        %v839 = vld [vmem:[%s420 + $0x970] sm:$0xff]
        %v840 = vld [vmem:[%s420 + $0x978] sm:$0xff]
        %v841 = vld [vmem:[%s420 + $0x980] sm:$0xff]
        %v842 = vld [vmem:[%s420 + $0x988] sm:$0xff]
        %v843 = vld [vmem:[%s420 + $0x990] sm:$0xff]
        %v844 = vld [vmem:[%s420 + $0x998] sm:$0xff]
        %v845 = vld [vmem:[%s420 + $0x9a0] sm:$0xff]
        %v846 = vld [vmem:[%s420 + $0x9a8] sm:$0xff]
        %v847 = vld [vmem:[%s420 + $0x9b0] sm:$0xff]
        %v848 = vld [vmem:[%s420 + $0x9b8] sm:$0xff]
        %v849 = vld [vmem:[%s420 + $0x9c0] sm:$0xff]
        %v850 = vld [vmem:[%s420 + $0x9c8] sm:$0xff]
        %v851 = vld [vmem:[%s420 + $0x9d0] sm:$0xff]
        %v852 = vld [vmem:[%s420 + $0x9d8] sm:$0xff]
        %v853 = vld [vmem:[%s420 + $0x9e0] sm:$0xff]
        %v854 = vld [vmem:[%s420 + $0x9e8] sm:$0xff]
        %v855 = vld [vmem:[%s420 + $0x9f0] sm:$0xff]
        %v856 = vld [vmem:[%s420 + $0x9f8] sm:$0xff]
        %v857 = vld [vmem:[%s420 + $0xa00] sm:$0xff]
        %v858 = vld [vmem:[%s420 + $0xa08] sm:$0xff]
        %v859 = vld [vmem:[%s420 + $0xa10] sm:$0xff]
        %v860 = vld [vmem:[%s420 + $0xa18] sm:$0xff]
        %v861 = vld [vmem:[%s420 + $0xa20] sm:$0xff]
        %v862 = vld [vmem:[%s420 + $0xa28] sm:$0xff]
        %v863 = vld [vmem:[%s420 + $0xa30] sm:$0xff]
        %v864 = vld [vmem:[%s420 + $0xa38] sm:$0xff]
        %v865 = vld [vmem:[%s420 + $0xa40] sm:$0xff]
        %v866 = vld [vmem:[%s420 + $0xa48] sm:$0xff]
        %v867 = vld [vmem:[%s420 + $0xa50] sm:$0xff]
        %v868 = vld [vmem:[%s420 + $0xa58] sm:$0xff]
        %v869 = vld [vmem:[%s420 + $0xa60] sm:$0xff]
        %v870 = vld [vmem:[%s420 + $0xa68] sm:$0xff]
        %v871 = vld [vmem:[%s420 + $0xa70] sm:$0xff]
        %v872 = vld [vmem:[%s420 + $0xa78] sm:$0xff]
        %v873 = vld [vmem:[%s420 + $0xa80] sm:$0xff]
        %v874 = vld [vmem:[%s420 + $0xa88] sm:$0xff]
        %v875 = vld [vmem:[%s420 + $0xa90] sm:$0xff]
        %v876 = vld [vmem:[%s420 + $0xa98] sm:$0xff]
        %v877 = vld [vmem:[%s420 + $0xaa0] sm:$0xff]
        %v878 = vld [vmem:[%s420 + $0xaa8] sm:$0xff]
        %v879 = vld [vmem:[%s420 + $0xab0] sm:$0xff]
        %v880 = vld [vmem:[%s420 + $0xab8] sm:$0xff]
        %v881 = vld [vmem:[%s420 + $0xac0] sm:$0xff]
        %v882 = vld [vmem:[%s420 + $0xac8] sm:$0xff]
        %v883 = vld [vmem:[%s420 + $0xad0] sm:$0xff]
        %v884 = vld [vmem:[%s420 + $0xad8] sm:$0xff]
        %v885 = vld [vmem:[%s420 + $0xae0] sm:$0xff]
        %v886 = vld [vmem:[%s420 + $0xae8] sm:$0xff]
        %v887 = vld [vmem:[%s420 + $0xaf0] sm:$0xff]
        %v888 = vld [vmem:[%s420 + $0xaf8] sm:$0xff]
        %v889 = vld [vmem:[%s420 + $0xb00] sm:$0xff]
        %v890 = vld [vmem:[%s420 + $0xb08] sm:$0xff]
        %v891 = vld [vmem:[%s420 + $0xb10] sm:$0xff]
        %v892 = vld [vmem:[%s420 + $0xb18] sm:$0xff]
        %v893 = vld [vmem:[%s420 + $0xb20] sm:$0xff]
        %v894 = vld [vmem:[%s420 + $0xb28] sm:$0xff]
        %v895 = vld [vmem:[%s420 + $0xb30] sm:$0xff]
        %v896 = vld [vmem:[%s420 + $0xb38] sm:$0xff]
        %v897 = vld [vmem:[%s420 + $0xb40] sm:$0xff]
        %v898 = vld [vmem:[%s420 + $0xb48] sm:$0xff]
        %v899 = vld [vmem:[%s420 + $0xb50] sm:$0xff]
        %v900 = vld [vmem:[%s420 + $0xb58] sm:$0xff]
        %v901 = vld [vmem:[%s420 + $0xb60] sm:$0xff]
        %v902 = vld [vmem:[%s420 + $0xb68] sm:$0xff]
        %v903 = vld [vmem:[%s420 + $0xb70] sm:$0xff]
        %v904 = vld [vmem:[%s420 + $0xb78] sm:$0xff]
        %v905 = vld [vmem:[%s420 + $0xb80] sm:$0xff]
        %v906 = vld [vmem:[%s420 + $0xb88] sm:$0xff]
        %v907 = vld [vmem:[%s420 + $0xb90] sm:$0xff]
        %v908 = vld [vmem:[%s420 + $0xb98] sm:$0xff]
        %v909 = vld [vmem:[%s420 + $0xba0] sm:$0xff]
        %v910 = vld [vmem:[%s420 + $0xba8] sm:$0xff]
        %v911 = vld [vmem:[%s420 + $0xbb0] sm:$0xff]
        %v912 = vld [vmem:[%s420 + $0xbb8] sm:$0xff]
        %v913 = vld [vmem:[%s420 + $0xbc0] sm:$0xff]
        %v914 = vld [vmem:[%s420 + $0xbc8] sm:$0xff]
        %v915 = vld [vmem:[%s420 + $0xbd0] sm:$0xff]
        %v916 = vld [vmem:[%s420 + $0xbd8] sm:$0xff]
        %v917 = vld [vmem:[%s420 + $0xbe0] sm:$0xff]
        %v918 = vld [vmem:[%s420 + $0xbe8] sm:$0xff]
        %v919 = vld [vmem:[%s420 + $0xbf0] sm:$0xff]
        %v920 = vld [vmem:[%s420 + $0xbf8] sm:$0xff]
        %v921 = vld [vmem:[%s420 + $0xc00] sm:$0xff]
        %v922 = vld [vmem:[%s420 + $0xc08] sm:$0xff]
        %v923 = vld [vmem:[%s420 + $0xc10] sm:$0xff]
        %v924 = vld [vmem:[%s420 + $0xc18] sm:$0xff]
        %v925 = vld [vmem:[%s420 + $0xc20] sm:$0xff]
        %v926 = vld [vmem:[%s420 + $0xc28] sm:$0xff]
        %v927 = vld [vmem:[%s420 + $0xc30] sm:$0xff]
        %v928 = vld [vmem:[%s420 + $0xc38] sm:$0xff]
        %v929 = vld [vmem:[%s420 + $0xc40] sm:$0xff]
        %v930 = vld [vmem:[%s420 + $0xc48] sm:$0xff]
        %v931 = vld [vmem:[%s420 + $0xc50] sm:$0xff]
        %v932 = vld [vmem:[%s420 + $0xc58] sm:$0xff]
        %v933 = vld [vmem:[%s420 + $0xc60] sm:$0xff]
        %v934 = vld [vmem:[%s420 + $0xc68] sm:$0xff]
        %v935 = vld [vmem:[%s420 + $0xc70] sm:$0xff]
        %v936 = vld [vmem:[%s420 + $0xc78] sm:$0xff]
        %v937 = vld [vmem:[%s420 + $0xc80] sm:$0xff]
        %v938 = vld [vmem:[%s420 + $0xc88] sm:$0xff]
        %v939 = vld [vmem:[%s420 + $0xc90] sm:$0xff]
        %v940 = vld [vmem:[%s420 + $0xc98] sm:$0xff]
        %v941 = vld [vmem:[%s420 + $0xca0] sm:$0xff]
        %v942 = vld [vmem:[%s420 + $0xca8] sm:$0xff]
        %v943 = vld [vmem:[%s420 + $0xcb0] sm:$0xff]
        %v944 = vld [vmem:[%s420 + $0xcb8] sm:$0xff]
        %v945 = vld [vmem:[%s420 + $0xcc0] sm:$0xff]
        %v946 = vld [vmem:[%s420 + $0xcc8] sm:$0xff]
        %v947 = vld [vmem:[%s420 + $0xcd0] sm:$0xff]
        %v948 = vld [vmem:[%s420 + $0xcd8] sm:$0xff]
        %v949 = vld [vmem:[%s420 + $0xce0] sm:$0xff]
        %v950 = vld [vmem:[%s420 + $0xce8] sm:$0xff]
        %v951 = vld [vmem:[%s420 + $0xcf0] sm:$0xff]
        %v952 = vld [vmem:[%s420 + $0xcf8] sm:$0xff]
        %v953 = vld [vmem:[%s420 + $0xd00] sm:$0xff]
        %v954 = vld [vmem:[%s420 + $0xd08] sm:$0xff]
        %v955 = vld [vmem:[%s420 + $0xd10] sm:$0xff]
        %v956 = vld [vmem:[%s420 + $0xd18] sm:$0xff]
        %v957 = vld [vmem:[%s420 + $0xd20] sm:$0xff]
        %v958 = vld [vmem:[%s420 + $0xd28] sm:$0xff]
        %v959 = vld [vmem:[%s420 + $0xd30] sm:$0xff]
        %v960 = vld [vmem:[%s420 + $0xd38] sm:$0xff]
        %v961 = vld [vmem:[%s420 + $0xd40] sm:$0xff]
        %v962 = vld [vmem:[%s420 + $0xd48] sm:$0xff]
        %v963 = vld [vmem:[%s420 + $0xd50] sm:$0xff]
        %v964 = vld [vmem:[%s420 + $0xd58] sm:$0xff]
        %v965 = vld [vmem:[%s420 + $0xd60] sm:$0xff]
        %v966 = vld [vmem:[%s420 + $0xd68] sm:$0xff]
        %v967 = vld [vmem:[%s420 + $0xd70] sm:$0xff]
        %v968 = vld [vmem:[%s420 + $0xd78] sm:$0xff]
        %v969 = vld [vmem:[%s420 + $0xd80] sm:$0xff]
        %v970 = vld [vmem:[%s420 + $0xd88] sm:$0xff]
        %v971 = vld [vmem:[%s420 + $0xd90] sm:$0xff]
        %v972 = vld [vmem:[%s420 + $0xd98] sm:$0xff]
        %v973 = vld [vmem:[%s420 + $0xda0] sm:$0xff]
        %v974 = vld [vmem:[%s420 + $0xda8] sm:$0xff]
        %v975 = vld [vmem:[%s420 + $0xdb0] sm:$0xff]
        %v976 = vld [vmem:[%s420 + $0xdb8] sm:$0xff]
        %v977 = vld [vmem:[%s420 + $0xdc0] sm:$0xff]
        %v978 = vld [vmem:[%s420 + $0xdc8] sm:$0xff]
        %v979 = vld [vmem:[%s420 + $0xdd0] sm:$0xff]
        %v980 = vld [vmem:[%s420 + $0xdd8] sm:$0xff]
        %v981 = vld [vmem:[%s420 + $0xde0] sm:$0xff]
        %v982 = vld [vmem:[%s420 + $0xde8] sm:$0xff]
        %v983 = vld [vmem:[%s420 + $0xdf0] sm:$0xff]
        %v984 = vld [vmem:[%s420 + $0xdf8] sm:$0xff]
        %v985 = vld [vmem:[%s420 + $0xe00] sm:$0xff]
        %v986 = vld [vmem:[%s420 + $0xe08] sm:$0xff]
        %v987 = vld [vmem:[%s420 + $0xe10] sm:$0xff]
        %v988 = vld [vmem:[%s420 + $0xe18] sm:$0xff]
        %v989 = vld [vmem:[%s420 + $0xe20] sm:$0xff]
        %v990 = vld [vmem:[%s420 + $0xe28] sm:$0xff]
        %v991 = vld [vmem:[%s420 + $0xe30] sm:$0xff]
        %v992 = vld [vmem:[%s420 + $0xe38] sm:$0xff]
        %v993 = vld [vmem:[%s420 + $0xe40] sm:$0xff]
        %v994 = vld [vmem:[%s420 + $0xe48] sm:$0xff]
        %v995 = vld [vmem:[%s420 + $0xe50] sm:$0xff]
        %v996 = vld [vmem:[%s420 + $0xe58] sm:$0xff]
        %v997 = vld [vmem:[%s420 + $0xe60] sm:$0xff]
        %v998 = vld [vmem:[%s420 + $0xe68] sm:$0xff]
        %v999 = vld [vmem:[%s420 + $0xe70] sm:$0xff]
        %v1000 = vld [vmem:[%s420 + $0xe78] sm:$0xff]
        %v1001 = vld [vmem:[%s420 + $0xe80] sm:$0xff]
        %v1002 = vld [vmem:[%s420 + $0xe88] sm:$0xff]
        %v1003 = vld [vmem:[%s420 + $0xe90] sm:$0xff]
        %v1004 = vld [vmem:[%s420 + $0xe98] sm:$0xff]
        %v1005 = vld [vmem:[%s420 + $0xea0] sm:$0xff]
        %v1006 = vld [vmem:[%s420 + $0xea8] sm:$0xff]
        %v1007 = vld [vmem:[%s420 + $0xeb0] sm:$0xff]
        %v1008 = vld [vmem:[%s420 + $0xeb8] sm:$0xff]
        %v1009 = vld [vmem:[%s420 + $0xec0] sm:$0xff]
        %v1010 = vld [vmem:[%s420 + $0xec8] sm:$0xff]
        %v1011 = vld [vmem:[%s420 + $0xed0] sm:$0xff]
        %v1012 = vld [vmem:[%s420 + $0xed8] sm:$0xff]
        %v1013 = vld [vmem:[%s420 + $0xee0] sm:$0xff]
        %v1014 = vld [vmem:[%s420 + $0xee8] sm:$0xff]
        %v1015 = vld [vmem:[%s420 + $0xef0] sm:$0xff]
        %v1016 = vld [vmem:[%s420 + $0xef8] sm:$0xff]
        %v1017 = vld [vmem:[%s420 + $0xf00] sm:$0xff]
        %v1018 = vld [vmem:[%s420 + $0xf08] sm:$0xff]
        %v1019 = vld [vmem:[%s420 + $0xf10] sm:$0xff]
        %v1020 = vld [vmem:[%s420 + $0xf18] sm:$0xff]
        %v1021 = vld [vmem:[%s420 + $0xf20] sm:$0xff]
        %v1022 = vld [vmem:[%s420 + $0xf28] sm:$0xff]
        %v1023 = vld [vmem:[%s420 + $0xf30] sm:$0xff]
        %v1024 = vld [vmem:[%s420 + $0xf38] sm:$0xff]
        %v1025 = vld [vmem:[%s420 + $0xf40] sm:$0xff]
        %v1026 = vld [vmem:[%s420 + $0xf48] sm:$0xff]
        %v1027 = vld [vmem:[%s420 + $0xf50] sm:$0xff]
        %v1028 = vld [vmem:[%s420 + $0xf58] sm:$0xff]
        %v1029 = vld [vmem:[%s420 + $0xf60] sm:$0xff]
        %v1030 = vld [vmem:[%s420 + $0xf68] sm:$0xff]
        %v1031 = vld [vmem:[%s420 + $0xf70] sm:$0xff]
        %v1032 = vld [vmem:[%s420 + $0xf78] sm:$0xff]
        %v1033 = vld [vmem:[%s420 + $0xf80] sm:$0xff]
        %v1034 = vld [vmem:[%s420 + $0xf88] sm:$0xff]
        %v1035 = vld [vmem:[%s420 + $0xf90] sm:$0xff]
        %v1036 = vld [vmem:[%s420 + $0xf98] sm:$0xff]
        %v1037 = vld [vmem:[%s420 + $0xfa0] sm:$0xff]
        %v1038 = vld [vmem:[%s420 + $0xfa8] sm:$0xff]
        %v1039 = vld [vmem:[%s420 + $0xfb0] sm:$0xff]
        %v1040 = vld [vmem:[%s420 + $0xfb8] sm:$0xff]
        %v1041 = vld [vmem:[%s420 + $0xfc0] sm:$0xff]
        %v1042 = vld [vmem:[%s420 + $0xfc8] sm:$0xff]
        %v1043 = vld [vmem:[%s420 + $0xfd0] sm:$0xff]
        %v1044 = vld [vmem:[%s420 + $0xfd8] sm:$0xff]
        %v1045 = vld [vmem:[%s420 + $0xfe0] sm:$0xff]
        %v1046 = vld [vmem:[%s420 + $0xfe8] sm:$0xff]
        %v1047 = vld [vmem:[%s420 + $0xff0] sm:$0xff]
        %v1048 = vld [vmem:[%s420 + $0xff8] sm:$0xff]
        %v1057 = vunpack.c.l.b16 %v529
        %v1058 = vunpack.c.h.b16 %v529
        %v1059 = vunpack.c.l.b16 %v530
        %v1060 = vunpack.c.h.b16 %v530
        %v1061 = vunpack.c.l.b16 %v531
        %v1062 = vunpack.c.h.b16 %v531
        %v1063 = vunpack.c.l.b16 %v532
        %v1064 = vunpack.c.h.b16 %v532
        %v1065 = vunpack.c.l.b16 %v533
        %v1066 = vunpack.c.h.b16 %v533
        %v1067 = vunpack.c.l.b16 %v534
        %v1068 = vunpack.c.h.b16 %v534
        %v1069 = vunpack.c.l.b16 %v535
        %v1070 = vunpack.c.h.b16 %v535
        %v1071 = vunpack.c.l.b16 %v536
        %v1072 = vunpack.c.h.b16 %v536
        %v1073 = vpack.c.b16 %v1065, %v1057
        %v1074 = vpack.c.b16 %v1066, %v1058
        %v1075 = vpack.c.b16 %v1067, %v1059
        %v1076 = vpack.c.b16 %v1068, %v1060
        %v1077 = vpack.c.b16 %v1069, %v1061
        %v1078 = vpack.c.b16 %v1070, %v1062
        %v1079 = vpack.c.b16 %v1071, %v1063
        %v1080 = vpack.c.b16 %v1072, %v1064
        %v1601 = vunpack.c.l.b16 %v537
        %v1602 = vunpack.c.h.b16 %v537
        %v1603 = vunpack.c.l.b16 %v538
        %v1604 = vunpack.c.h.b16 %v538
        %v1605 = vunpack.c.l.b16 %v539
        %v1606 = vunpack.c.h.b16 %v539
        %v1607 = vunpack.c.l.b16 %v540
        %v1608 = vunpack.c.h.b16 %v540
        %v1609 = vunpack.c.l.b16 %v541
        %v1610 = vunpack.c.h.b16 %v541
        %v1611 = vunpack.c.l.b16 %v542
        %v1612 = vunpack.c.h.b16 %v542
        %v1613 = vunpack.c.l.b16 %v543
        %v1614 = vunpack.c.h.b16 %v543
        %v1615 = vunpack.c.l.b16 %v544
        %v1616 = vunpack.c.h.b16 %v544
        %v1617 = vunpack.c.l.b16 %v545
        %v1618 = vunpack.c.h.b16 %v545
        %v1619 = vunpack.c.l.b16 %v546
        %v1620 = vunpack.c.h.b16 %v546
        %v1621 = vunpack.c.l.b16 %v547
        %v1622 = vunpack.c.h.b16 %v547
        %v1623 = vunpack.c.l.b16 %v548
        %v1624 = vunpack.c.h.b16 %v548
        %v1625 = vunpack.c.l.b16 %v549
        %v1626 = vunpack.c.h.b16 %v549
        %v1627 = vunpack.c.l.b16 %v550
        %v1628 = vunpack.c.h.b16 %v550
        %v1629 = vunpack.c.l.b16 %v551
        %v1630 = vunpack.c.h.b16 %v551
        %v1631 = vunpack.c.l.b16 %v552
        %v1632 = vunpack.c.h.b16 %v552
        %v1633 = vunpack.c.l.b16 %v553
        %v1634 = vunpack.c.h.b16 %v553
        %v1635 = vunpack.c.l.b16 %v554
        %v1636 = vunpack.c.h.b16 %v554
        %v1637 = vunpack.c.l.b16 %v555
        %v1638 = vunpack.c.h.b16 %v555
        %v1639 = vunpack.c.l.b16 %v556
        %v1640 = vunpack.c.h.b16 %v556
        %v1641 = vunpack.c.l.b16 %v557
        %v1642 = vunpack.c.h.b16 %v557
        %v1643 = vunpack.c.l.b16 %v558
        %v1644 = vunpack.c.h.b16 %v558
        %v1645 = vunpack.c.l.b16 %v559
        %v1646 = vunpack.c.h.b16 %v559
        %v1647 = vunpack.c.l.b16 %v560
        %v1648 = vunpack.c.h.b16 %v560
        %v1649 = vunpack.c.l.b16 %v561
        %v1650 = vunpack.c.h.b16 %v561
        %v1651 = vunpack.c.l.b16 %v562
        %v1652 = vunpack.c.h.b16 %v562
        %v1653 = vunpack.c.l.b16 %v563
        %v1654 = vunpack.c.h.b16 %v563
        %v1655 = vunpack.c.l.b16 %v564
        %v1656 = vunpack.c.h.b16 %v564
        %v1657 = vunpack.c.l.b16 %v565
        %v1658 = vunpack.c.h.b16 %v565
        %v1659 = vunpack.c.l.b16 %v566
        %v1660 = vunpack.c.h.b16 %v566
        %v1661 = vunpack.c.l.b16 %v567
        %v1662 = vunpack.c.h.b16 %v567
        %v1663 = vunpack.c.l.b16 %v568
        %v1664 = vunpack.c.h.b16 %v568
        %v1665 = vunpack.c.l.b16 %v569
        %v1666 = vunpack.c.h.b16 %v569
        %v1667 = vunpack.c.l.b16 %v570
        %v1668 = vunpack.c.h.b16 %v570
        %v1669 = vunpack.c.l.b16 %v571
        %v1670 = vunpack.c.h.b16 %v571
        %v1671 = vunpack.c.l.b16 %v572
        %v1672 = vunpack.c.h.b16 %v572
        %v1673 = vunpack.c.l.b16 %v573
        %v1674 = vunpack.c.h.b16 %v573
        %v1675 = vunpack.c.l.b16 %v574
        %v1676 = vunpack.c.h.b16 %v574
        %v1677 = vunpack.c.l.b16 %v575
        %v1678 = vunpack.c.h.b16 %v575
        %v1679 = vunpack.c.l.b16 %v576
        %v1680 = vunpack.c.h.b16 %v576
        %v1681 = vunpack.c.l.b16 %v577
        %v1682 = vunpack.c.h.b16 %v577
        %v1683 = vunpack.c.l.b16 %v578
        %v1684 = vunpack.c.h.b16 %v578
        %v1685 = vunpack.c.l.b16 %v579
        %v1686 = vunpack.c.h.b16 %v579
        %v1687 = vunpack.c.l.b16 %v580
        %v1688 = vunpack.c.h.b16 %v580
        %v1689 = vunpack.c.l.b16 %v581
        %v1690 = vunpack.c.h.b16 %v581
        %v1691 = vunpack.c.l.b16 %v582
        %v1692 = vunpack.c.h.b16 %v582
        %v1693 = vunpack.c.l.b16 %v583
        %v1694 = vunpack.c.h.b16 %v583
        %v1695 = vunpack.c.l.b16 %v584
        %v1696 = vunpack.c.h.b16 %v584
        %v1697 = vunpack.c.l.b16 %v585
        %v1698 = vunpack.c.h.b16 %v585
        %v1699 = vunpack.c.l.b16 %v586
        %v1700 = vunpack.c.h.b16 %v586
        %v1701 = vunpack.c.l.b16 %v587
        %v1702 = vunpack.c.h.b16 %v587
        %v1703 = vunpack.c.l.b16 %v588
        %v1704 = vunpack.c.h.b16 %v588
        %v1705 = vunpack.c.l.b16 %v589
        %v1706 = vunpack.c.h.b16 %v589
        %v1707 = vunpack.c.l.b16 %v590
        %v1708 = vunpack.c.h.b16 %v590
        %v1709 = vunpack.c.l.b16 %v591
        %v1710 = vunpack.c.h.b16 %v591
        %v1711 = vunpack.c.l.b16 %v592
        %v1712 = vunpack.c.h.b16 %v592
        %v1713 = vunpack.c.l.b16 %v593
        %v1714 = vunpack.c.h.b16 %v593
        %v1715 = vunpack.c.l.b16 %v594
        %v1716 = vunpack.c.h.b16 %v594
        %v1717 = vunpack.c.l.b16 %v595
        %v1718 = vunpack.c.h.b16 %v595
        %v1719 = vunpack.c.l.b16 %v596
        %v1720 = vunpack.c.h.b16 %v596
        %v1721 = vunpack.c.l.b16 %v597
        %v1722 = vunpack.c.h.b16 %v597
        %v1723 = vunpack.c.l.b16 %v598
        %v1724 = vunpack.c.h.b16 %v598
        %v1725 = vunpack.c.l.b16 %v599
        %v1726 = vunpack.c.h.b16 %v599
        %v1727 = vunpack.c.l.b16 %v600
        %v1728 = vunpack.c.h.b16 %v600
        %v1729 = vunpack.c.l.b16 %v601
        %v1730 = vunpack.c.h.b16 %v601
        %v1731 = vunpack.c.l.b16 %v602
        %v1732 = vunpack.c.h.b16 %v602
        %v1733 = vunpack.c.l.b16 %v603
        %v1734 = vunpack.c.h.b16 %v603
        %v1735 = vunpack.c.l.b16 %v604
        %v1736 = vunpack.c.h.b16 %v604
        %v1737 = vunpack.c.l.b16 %v605
        %v1738 = vunpack.c.h.b16 %v605
        %v1739 = vunpack.c.l.b16 %v606
        %v1740 = vunpack.c.h.b16 %v606
        %v1741 = vunpack.c.l.b16 %v607
        %v1742 = vunpack.c.h.b16 %v607
        %v1743 = vunpack.c.l.b16 %v608
        %v1744 = vunpack.c.h.b16 %v608
        %v1745 = vunpack.c.l.b16 %v609
        %v1746 = vunpack.c.h.b16 %v609
        %v1747 = vunpack.c.l.b16 %v610
        %v1748 = vunpack.c.h.b16 %v610
        %v1749 = vunpack.c.l.b16 %v611
        %v1750 = vunpack.c.h.b16 %v611
        %v1751 = vunpack.c.l.b16 %v612
        %v1752 = vunpack.c.h.b16 %v612
        %v1753 = vunpack.c.l.b16 %v613
        %v1754 = vunpack.c.h.b16 %v613
        %v1755 = vunpack.c.l.b16 %v614
        %v1756 = vunpack.c.h.b16 %v614
        %v1757 = vunpack.c.l.b16 %v615
        %v1758 = vunpack.c.h.b16 %v615
        %v1759 = vunpack.c.l.b16 %v616
        %v1760 = vunpack.c.h.b16 %v616
        %v1761 = vunpack.c.l.b16 %v617
        %v1762 = vunpack.c.h.b16 %v617
        %v1763 = vunpack.c.l.b16 %v618
        %v1764 = vunpack.c.h.b16 %v618
        %v1765 = vunpack.c.l.b16 %v619
        %v1766 = vunpack.c.h.b16 %v619
        %v1767 = vunpack.c.l.b16 %v620
        %v1768 = vunpack.c.h.b16 %v620
        %v1769 = vunpack.c.l.b16 %v621
        %v1770 = vunpack.c.h.b16 %v621
        %v1771 = vunpack.c.l.b16 %v622
        %v1772 = vunpack.c.h.b16 %v622
        %v1773 = vunpack.c.l.b16 %v623
        %v1774 = vunpack.c.h.b16 %v623
        %v1775 = vunpack.c.l.b16 %v624
        %v1776 = vunpack.c.h.b16 %v624
        %v1777 = vunpack.c.l.b16 %v625
        %v1778 = vunpack.c.h.b16 %v625
        %v1779 = vunpack.c.l.b16 %v626
        %v1780 = vunpack.c.h.b16 %v626
        %v1781 = vunpack.c.l.b16 %v627
        %v1782 = vunpack.c.h.b16 %v627
        %v1783 = vunpack.c.l.b16 %v628
        %v1784 = vunpack.c.h.b16 %v628
        %v1785 = vunpack.c.l.b16 %v629
        %v1786 = vunpack.c.h.b16 %v629
        %v1787 = vunpack.c.l.b16 %v630
        %v1788 = vunpack.c.h.b16 %v630
        %v1789 = vunpack.c.l.b16 %v631
        %v1790 = vunpack.c.h.b16 %v631
        %v1791 = vunpack.c.l.b16 %v632
        %v1792 = vunpack.c.h.b16 %v632
        %v1793 = vunpack.c.l.b16 %v633
        %v1794 = vunpack.c.h.b16 %v633
        %v1795 = vunpack.c.l.b16 %v634
        %v1796 = vunpack.c.h.b16 %v634
        %v1797 = vunpack.c.l.b16 %v635
        %v1798 = vunpack.c.h.b16 %v635
        %v1799 = vunpack.c.l.b16 %v636
        %v1800 = vunpack.c.h.b16 %v636
        %v1801 = vunpack.c.l.b16 %v637
        %v1802 = vunpack.c.h.b16 %v637
        %v1803 = vunpack.c.l.b16 %v638
        %v1804 = vunpack.c.h.b16 %v638
        %v1805 = vunpack.c.l.b16 %v639
        %v1806 = vunpack.c.h.b16 %v639
        %v1807 = vunpack.c.l.b16 %v640
        %v1808 = vunpack.c.h.b16 %v640
        %v1809 = vunpack.c.l.b16 %v641
        %v1810 = vunpack.c.h.b16 %v641
        %v1811 = vunpack.c.l.b16 %v642
        %v1812 = vunpack.c.h.b16 %v642
        %v1813 = vunpack.c.l.b16 %v643
        %v1814 = vunpack.c.h.b16 %v643
        %v1815 = vunpack.c.l.b16 %v644
        %v1816 = vunpack.c.h.b16 %v644
        %v1817 = vunpack.c.l.b16 %v645
        %v1818 = vunpack.c.h.b16 %v645
        %v1819 = vunpack.c.l.b16 %v646
        %v1820 = vunpack.c.h.b16 %v646
        %v1821 = vunpack.c.l.b16 %v647
        %v1822 = vunpack.c.h.b16 %v647
        %v1823 = vunpack.c.l.b16 %v648
        %v1824 = vunpack.c.h.b16 %v648
        %v1825 = vunpack.c.l.b16 %v649
        %v1826 = vunpack.c.h.b16 %v649
        %v1827 = vunpack.c.l.b16 %v650
        %v1828 = vunpack.c.h.b16 %v650
        %v1829 = vunpack.c.l.b16 %v651
        %v1830 = vunpack.c.h.b16 %v651
        %v1831 = vunpack.c.l.b16 %v652
        %v1832 = vunpack.c.h.b16 %v652
        %v1833 = vunpack.c.l.b16 %v653
        %v1834 = vunpack.c.h.b16 %v653
        %v1835 = vunpack.c.l.b16 %v654
        %v1836 = vunpack.c.h.b16 %v654
        %v1837 = vunpack.c.l.b16 %v655
        %v1838 = vunpack.c.h.b16 %v655
        %v1839 = vunpack.c.l.b16 %v656
        %v1840 = vunpack.c.h.b16 %v656
        %v1841 = vunpack.c.l.b16 %v657
        %v1842 = vunpack.c.h.b16 %v657
        %v1843 = vunpack.c.l.b16 %v658
        %v1844 = vunpack.c.h.b16 %v658
        %v1845 = vunpack.c.l.b16 %v659
        %v1846 = vunpack.c.h.b16 %v659
        %v1847 = vunpack.c.l.b16 %v660
        %v1848 = vunpack.c.h.b16 %v660
        %v1849 = vunpack.c.l.b16 %v661
        %v1850 = vunpack.c.h.b16 %v661
        %v1851 = vunpack.c.l.b16 %v662
        %v1852 = vunpack.c.h.b16 %v662
        %v1853 = vunpack.c.l.b16 %v663
        %v1854 = vunpack.c.h.b16 %v663
        %v1855 = vunpack.c.l.b16 %v664
        %v1856 = vunpack.c.h.b16 %v664
        %v1857 = vunpack.c.l.b16 %v665
        %v1858 = vunpack.c.h.b16 %v665
        %v1859 = vunpack.c.l.b16 %v666
        %v1860 = vunpack.c.h.b16 %v666
        %v1861 = vunpack.c.l.b16 %v667
        %v1862 = vunpack.c.h.b16 %v667
        %v1863 = vunpack.c.l.b16 %v668
        %v1864 = vunpack.c.h.b16 %v668
        %v1865 = vunpack.c.l.b16 %v669
        %v1866 = vunpack.c.h.b16 %v669
        %v1867 = vunpack.c.l.b16 %v670
        %v1868 = vunpack.c.h.b16 %v670
        %v1869 = vunpack.c.l.b16 %v671
        %v1870 = vunpack.c.h.b16 %v671
        %v1871 = vunpack.c.l.b16 %v672
        %v1872 = vunpack.c.h.b16 %v672
        %v1873 = vunpack.c.l.b16 %v673
        %v1874 = vunpack.c.h.b16 %v673
        %v1875 = vunpack.c.l.b16 %v674
        %v1876 = vunpack.c.h.b16 %v674
        %v1877 = vunpack.c.l.b16 %v675
        %v1878 = vunpack.c.h.b16 %v675
        %v1879 = vunpack.c.l.b16 %v676
        %v1880 = vunpack.c.h.b16 %v676
        %v1881 = vunpack.c.l.b16 %v677
        %v1882 = vunpack.c.h.b16 %v677
        %v1883 = vunpack.c.l.b16 %v678
        %v1884 = vunpack.c.h.b16 %v678
        %v1885 = vunpack.c.l.b16 %v679
        %v1886 = vunpack.c.h.b16 %v679
        %v1887 = vunpack.c.l.b16 %v680
        %v1888 = vunpack.c.h.b16 %v680
        %v1889 = vunpack.c.l.b16 %v681
        %v1890 = vunpack.c.h.b16 %v681
        %v1891 = vunpack.c.l.b16 %v682
        %v1892 = vunpack.c.h.b16 %v682
        %v1893 = vunpack.c.l.b16 %v683
        %v1894 = vunpack.c.h.b16 %v683
        %v1895 = vunpack.c.l.b16 %v684
        %v1896 = vunpack.c.h.b16 %v684
        %v1897 = vunpack.c.l.b16 %v685
        %v1898 = vunpack.c.h.b16 %v685
        %v1899 = vunpack.c.l.b16 %v686
        %v1900 = vunpack.c.h.b16 %v686
        %v1901 = vunpack.c.l.b16 %v687
        %v1902 = vunpack.c.h.b16 %v687
        %v1903 = vunpack.c.l.b16 %v688
        %v1904 = vunpack.c.h.b16 %v688
        %v1905 = vunpack.c.l.b16 %v689
        %v1906 = vunpack.c.h.b16 %v689
        %v1907 = vunpack.c.l.b16 %v690
        %v1908 = vunpack.c.h.b16 %v690
        %v1909 = vunpack.c.l.b16 %v691
        %v1910 = vunpack.c.h.b16 %v691
        %v1911 = vunpack.c.l.b16 %v692
        %v1912 = vunpack.c.h.b16 %v692
        %v1913 = vunpack.c.l.b16 %v693
        %v1914 = vunpack.c.h.b16 %v693
        %v1915 = vunpack.c.l.b16 %v694
        %v1916 = vunpack.c.h.b16 %v694
        %v1917 = vunpack.c.l.b16 %v695
        %v1918 = vunpack.c.h.b16 %v695
        %v1919 = vunpack.c.l.b16 %v696
        %v1920 = vunpack.c.h.b16 %v696
        %v1921 = vunpack.c.l.b16 %v697
        %v1922 = vunpack.c.h.b16 %v697
        %v1923 = vunpack.c.l.b16 %v698
        %v1924 = vunpack.c.h.b16 %v698
        %v1925 = vunpack.c.l.b16 %v699
        %v1926 = vunpack.c.h.b16 %v699
        %v1927 = vunpack.c.l.b16 %v700
        %v1928 = vunpack.c.h.b16 %v700
        %v1929 = vunpack.c.l.b16 %v701
        %v1930 = vunpack.c.h.b16 %v701
        %v1931 = vunpack.c.l.b16 %v702
        %v1932 = vunpack.c.h.b16 %v702
        %v1933 = vunpack.c.l.b16 %v703
        %v1934 = vunpack.c.h.b16 %v703
        %v1935 = vunpack.c.l.b16 %v704
        %v1936 = vunpack.c.h.b16 %v704
        %v1937 = vunpack.c.l.b16 %v705
        %v1938 = vunpack.c.h.b16 %v705
        %v1939 = vunpack.c.l.b16 %v706
        %v1940 = vunpack.c.h.b16 %v706
        %v1941 = vunpack.c.l.b16 %v707
        %v1942 = vunpack.c.h.b16 %v707
        %v1943 = vunpack.c.l.b16 %v708
        %v1944 = vunpack.c.h.b16 %v708
        %v1945 = vunpack.c.l.b16 %v709
        %v1946 = vunpack.c.h.b16 %v709
        %v1947 = vunpack.c.l.b16 %v710
        %v1948 = vunpack.c.h.b16 %v710
        %v1949 = vunpack.c.l.b16 %v711
        %v1950 = vunpack.c.h.b16 %v711
        %v1951 = vunpack.c.l.b16 %v712
        %v1952 = vunpack.c.h.b16 %v712
        %v1953 = vunpack.c.l.b16 %v713
        %v1954 = vunpack.c.h.b16 %v713
        %v1955 = vunpack.c.l.b16 %v714
        %v1956 = vunpack.c.h.b16 %v714
        %v1957 = vunpack.c.l.b16 %v715
        %v1958 = vunpack.c.h.b16 %v715
        %v1959 = vunpack.c.l.b16 %v716
        %v1960 = vunpack.c.h.b16 %v716
        %v1961 = vunpack.c.l.b16 %v717
        %v1962 = vunpack.c.h.b16 %v717
        %v1963 = vunpack.c.l.b16 %v718
        %v1964 = vunpack.c.h.b16 %v718
        %v1965 = vunpack.c.l.b16 %v719
        %v1966 = vunpack.c.h.b16 %v719
        %v1967 = vunpack.c.l.b16 %v720
        %v1968 = vunpack.c.h.b16 %v720
        %v1969 = vunpack.c.l.b16 %v721
        %v1970 = vunpack.c.h.b16 %v721
        %v1971 = vunpack.c.l.b16 %v722
        %v1972 = vunpack.c.h.b16 %v722
        %v1973 = vunpack.c.l.b16 %v723
        %v1974 = vunpack.c.h.b16 %v723
        %v1975 = vunpack.c.l.b16 %v724
        %v1976 = vunpack.c.h.b16 %v724
        %v1977 = vunpack.c.l.b16 %v725
        %v1978 = vunpack.c.h.b16 %v725
        %v1979 = vunpack.c.l.b16 %v726
        %v1980 = vunpack.c.h.b16 %v726
        %v1981 = vunpack.c.l.b16 %v727
        %v1982 = vunpack.c.h.b16 %v727
        %v1983 = vunpack.c.l.b16 %v728
        %v1984 = vunpack.c.h.b16 %v728
        %v1985 = vunpack.c.l.b16 %v729
        %v1986 = vunpack.c.h.b16 %v729
        %v1987 = vunpack.c.l.b16 %v730
        %v1988 = vunpack.c.h.b16 %v730
        %v1989 = vunpack.c.l.b16 %v731
        %v1990 = vunpack.c.h.b16 %v731
        %v1991 = vunpack.c.l.b16 %v732
        %v1992 = vunpack.c.h.b16 %v732
        %v1993 = vunpack.c.l.b16 %v733
        %v1994 = vunpack.c.h.b16 %v733
        %v1995 = vunpack.c.l.b16 %v734
        %v1996 = vunpack.c.h.b16 %v734
        %v1997 = vunpack.c.l.b16 %v735
        %v1998 = vunpack.c.h.b16 %v735
        %v1999 = vunpack.c.l.b16 %v736
        %v2000 = vunpack.c.h.b16 %v736
        %v2001 = vunpack.c.l.b16 %v737
        %v2002 = vunpack.c.h.b16 %v737
        %v2003 = vunpack.c.l.b16 %v738
        %v2004 = vunpack.c.h.b16 %v738
        %v2005 = vunpack.c.l.b16 %v739
        %v2006 = vunpack.c.h.b16 %v739
        %v2007 = vunpack.c.l.b16 %v740
        %v2008 = vunpack.c.h.b16 %v740
        %v2009 = vunpack.c.l.b16 %v741
        %v2010 = vunpack.c.h.b16 %v741
        %v2011 = vunpack.c.l.b16 %v742
        %v2012 = vunpack.c.h.b16 %v742
        %v2013 = vunpack.c.l.b16 %v743
        %v2014 = vunpack.c.h.b16 %v743
        %v2015 = vunpack.c.l.b16 %v744
        %v2016 = vunpack.c.h.b16 %v744
        %v2017 = vunpack.c.l.b16 %v745
        %v2018 = vunpack.c.h.b16 %v745
        %v2019 = vunpack.c.l.b16 %v746
        %v2020 = vunpack.c.h.b16 %v746
        %v2021 = vunpack.c.l.b16 %v747
        %v2022 = vunpack.c.h.b16 %v747
        %v2023 = vunpack.c.l.b16 %v748
        %v2024 = vunpack.c.h.b16 %v748
        %v2025 = vunpack.c.l.b16 %v749
        %v2026 = vunpack.c.h.b16 %v749
        %v2027 = vunpack.c.l.b16 %v750
        %v2028 = vunpack.c.h.b16 %v750
        %v2029 = vunpack.c.l.b16 %v751
        %v2030 = vunpack.c.h.b16 %v751
        %v2031 = vunpack.c.l.b16 %v752
        %v2032 = vunpack.c.h.b16 %v752
        %v2033 = vunpack.c.l.b16 %v753
        %v2034 = vunpack.c.h.b16 %v753
        %v2035 = vunpack.c.l.b16 %v754
        %v2036 = vunpack.c.h.b16 %v754
        %v2037 = vunpack.c.l.b16 %v755
        %v2038 = vunpack.c.h.b16 %v755
        %v2039 = vunpack.c.l.b16 %v756
        %v2040 = vunpack.c.h.b16 %v756
        %v2041 = vunpack.c.l.b16 %v757
        %v2042 = vunpack.c.h.b16 %v757
        %v2043 = vunpack.c.l.b16 %v758
        %v2044 = vunpack.c.h.b16 %v758
        %v2045 = vunpack.c.l.b16 %v759
        %v2046 = vunpack.c.h.b16 %v759
        %v2047 = vunpack.c.l.b16 %v760
        %v2048 = vunpack.c.h.b16 %v760
        %v2049 = vunpack.c.l.b16 %v761
        %v2050 = vunpack.c.h.b16 %v761
        %v2051 = vunpack.c.l.b16 %v762
        %v2052 = vunpack.c.h.b16 %v762
        %v2053 = vunpack.c.l.b16 %v763
        %v2054 = vunpack.c.h.b16 %v763
        %v2055 = vunpack.c.l.b16 %v764
        %v2056 = vunpack.c.h.b16 %v764
        %v2057 = vunpack.c.l.b16 %v765
        %v2058 = vunpack.c.h.b16 %v765
        %v2059 = vunpack.c.l.b16 %v766
        %v2060 = vunpack.c.h.b16 %v766
        %v2061 = vunpack.c.l.b16 %v767
        %v2062 = vunpack.c.h.b16 %v767
        %v2063 = vunpack.c.l.b16 %v768
        %v2064 = vunpack.c.h.b16 %v768
        %v2065 = vunpack.c.l.b16 %v769
        %v2066 = vunpack.c.h.b16 %v769
        %v2067 = vunpack.c.l.b16 %v770
        %v2068 = vunpack.c.h.b16 %v770
        %v2069 = vunpack.c.l.b16 %v771
        %v2070 = vunpack.c.h.b16 %v771
        %v2071 = vunpack.c.l.b16 %v772
        %v2072 = vunpack.c.h.b16 %v772
        %v2073 = vunpack.c.l.b16 %v773
        %v2074 = vunpack.c.h.b16 %v773
        %v2075 = vunpack.c.l.b16 %v774
        %v2076 = vunpack.c.h.b16 %v774
        %v2077 = vunpack.c.l.b16 %v775
        %v2078 = vunpack.c.h.b16 %v775
        %v2079 = vunpack.c.l.b16 %v776
        %v2080 = vunpack.c.h.b16 %v776
        %v2081 = vunpack.c.l.b16 %v777
        %v2082 = vunpack.c.h.b16 %v777
        %v2083 = vunpack.c.l.b16 %v778
        %v2084 = vunpack.c.h.b16 %v778
        %v2085 = vunpack.c.l.b16 %v779
        %v2086 = vunpack.c.h.b16 %v779
        %v2087 = vunpack.c.l.b16 %v780
        %v2088 = vunpack.c.h.b16 %v780
        %v2089 = vunpack.c.l.b16 %v781
        %v2090 = vunpack.c.h.b16 %v781
        %v2091 = vunpack.c.l.b16 %v782
        %v2092 = vunpack.c.h.b16 %v782
        %v2093 = vunpack.c.l.b16 %v783
        %v2094 = vunpack.c.h.b16 %v783
        %v2095 = vunpack.c.l.b16 %v784
        %v2096 = vunpack.c.h.b16 %v784
        %v2097 = vunpack.c.l.b16 %v785
        %v2098 = vunpack.c.h.b16 %v785
        %v2099 = vunpack.c.l.b16 %v786
        %v2100 = vunpack.c.h.b16 %v786
        %v2101 = vunpack.c.l.b16 %v787
        %v2102 = vunpack.c.h.b16 %v787
        %v2103 = vunpack.c.l.b16 %v788
        %v2104 = vunpack.c.h.b16 %v788
        %v2105 = vunpack.c.l.b16 %v789
        %v2106 = vunpack.c.h.b16 %v789
        %v2107 = vunpack.c.l.b16 %v790
        %v2108 = vunpack.c.h.b16 %v790
        %v2109 = vunpack.c.l.b16 %v791
        %v2110 = vunpack.c.h.b16 %v791
        %v2111 = vunpack.c.l.b16 %v792
        %v2112 = vunpack.c.h.b16 %v792
        %v2113 = vunpack.c.l.b16 %v793
        %v2114 = vunpack.c.h.b16 %v793
        %v2115 = vunpack.c.l.b16 %v794
        %v2116 = vunpack.c.h.b16 %v794
        %v2117 = vunpack.c.l.b16 %v795
        %v2118 = vunpack.c.h.b16 %v795
        %v2119 = vunpack.c.l.b16 %v796
        %v2120 = vunpack.c.h.b16 %v796
        %v2121 = vunpack.c.l.b16 %v797
        %v2122 = vunpack.c.h.b16 %v797
        %v2123 = vunpack.c.l.b16 %v798
        %v2124 = vunpack.c.h.b16 %v798
        %v2125 = vunpack.c.l.b16 %v799
        %v2126 = vunpack.c.h.b16 %v799
        %v2127 = vunpack.c.l.b16 %v800
        %v2128 = vunpack.c.h.b16 %v800
        %v2129 = vunpack.c.l.b16 %v801
        %v2130 = vunpack.c.h.b16 %v801
        %v2131 = vunpack.c.l.b16 %v802
        %v2132 = vunpack.c.h.b16 %v802
        %v2133 = vunpack.c.l.b16 %v803
        %v2134 = vunpack.c.h.b16 %v803
        %v2135 = vunpack.c.l.b16 %v804
        %v2136 = vunpack.c.h.b16 %v804
        %v2137 = vunpack.c.l.b16 %v805
        %v2138 = vunpack.c.h.b16 %v805
        %v2139 = vunpack.c.l.b16 %v806
        %v2140 = vunpack.c.h.b16 %v806
        %v2141 = vunpack.c.l.b16 %v807
        %v2142 = vunpack.c.h.b16 %v807
        %v2143 = vunpack.c.l.b16 %v808
        %v2144 = vunpack.c.h.b16 %v808
        %v2145 = vunpack.c.l.b16 %v809
        %v2146 = vunpack.c.h.b16 %v809
        %v2147 = vunpack.c.l.b16 %v810
        %v2148 = vunpack.c.h.b16 %v810
        %v2149 = vunpack.c.l.b16 %v811
        %v2150 = vunpack.c.h.b16 %v811
        %v2151 = vunpack.c.l.b16 %v812
        %v2152 = vunpack.c.h.b16 %v812
        %v2153 = vunpack.c.l.b16 %v813
        %v2154 = vunpack.c.h.b16 %v813
        %v2155 = vunpack.c.l.b16 %v814
        %v2156 = vunpack.c.h.b16 %v814
        %v2157 = vunpack.c.l.b16 %v815
        %v2158 = vunpack.c.h.b16 %v815
        %v2159 = vunpack.c.l.b16 %v816
        %v2160 = vunpack.c.h.b16 %v816
        %v2161 = vunpack.c.l.b16 %v817
        %v2162 = vunpack.c.h.b16 %v817
        %v2163 = vunpack.c.l.b16 %v818
        %v2164 = vunpack.c.h.b16 %v818
        %v2165 = vunpack.c.l.b16 %v819
        %v2166 = vunpack.c.h.b16 %v819
        %v2167 = vunpack.c.l.b16 %v820
        %v2168 = vunpack.c.h.b16 %v820
        %v2169 = vunpack.c.l.b16 %v821
        %v2170 = vunpack.c.h.b16 %v821
        %v2171 = vunpack.c.l.b16 %v822
        %v2172 = vunpack.c.h.b16 %v822
        %v2173 = vunpack.c.l.b16 %v823
        %v2174 = vunpack.c.h.b16 %v823
        %v2175 = vunpack.c.l.b16 %v824
        %v2176 = vunpack.c.h.b16 %v824
        %v2177 = vunpack.c.l.b16 %v825
        %v2178 = vunpack.c.h.b16 %v825
        %v2179 = vunpack.c.l.b16 %v826
        %v2180 = vunpack.c.h.b16 %v826
        %v2181 = vunpack.c.l.b16 %v827
        %v2182 = vunpack.c.h.b16 %v827
        %v2183 = vunpack.c.l.b16 %v828
        %v2184 = vunpack.c.h.b16 %v828
        %v2185 = vunpack.c.l.b16 %v829
        %v2186 = vunpack.c.h.b16 %v829
        %v2187 = vunpack.c.l.b16 %v830
        %v2188 = vunpack.c.h.b16 %v830
        %v2189 = vunpack.c.l.b16 %v831
        %v2190 = vunpack.c.h.b16 %v831
        %v2191 = vunpack.c.l.b16 %v832
        %v2192 = vunpack.c.h.b16 %v832
        %v2193 = vunpack.c.l.b16 %v833
        %v2194 = vunpack.c.h.b16 %v833
        %v2195 = vunpack.c.l.b16 %v834
        %v2196 = vunpack.c.h.b16 %v834
        %v2197 = vunpack.c.l.b16 %v835
        %v2198 = vunpack.c.h.b16 %v835
        %v2199 = vunpack.c.l.b16 %v836
        %v2200 = vunpack.c.h.b16 %v836
        %v2201 = vunpack.c.l.b16 %v837
        %v2202 = vunpack.c.h.b16 %v837
        %v2203 = vunpack.c.l.b16 %v838
        %v2204 = vunpack.c.h.b16 %v838
        %v2205 = vunpack.c.l.b16 %v839
        %v2206 = vunpack.c.h.b16 %v839
        %v2207 = vunpack.c.l.b16 %v840
        %v2208 = vunpack.c.h.b16 %v840
        %v2209 = vunpack.c.l.b16 %v841
        %v2210 = vunpack.c.h.b16 %v841
        %v2211 = vunpack.c.l.b16 %v842
        %v2212 = vunpack.c.h.b16 %v842
        %v2213 = vunpack.c.l.b16 %v843
        %v2214 = vunpack.c.h.b16 %v843
        %v2215 = vunpack.c.l.b16 %v844
        %v2216 = vunpack.c.h.b16 %v844
        %v2217 = vunpack.c.l.b16 %v845
        %v2218 = vunpack.c.h.b16 %v845
        %v2219 = vunpack.c.l.b16 %v846
        %v2220 = vunpack.c.h.b16 %v846
        %v2221 = vunpack.c.l.b16 %v847
        %v2222 = vunpack.c.h.b16 %v847
        %v2223 = vunpack.c.l.b16 %v848
        %v2224 = vunpack.c.h.b16 %v848
        %v2225 = vunpack.c.l.b16 %v849
        %v2226 = vunpack.c.h.b16 %v849
        %v2227 = vunpack.c.l.b16 %v850
        %v2228 = vunpack.c.h.b16 %v850
        %v2229 = vunpack.c.l.b16 %v851
        %v2230 = vunpack.c.h.b16 %v851
        %v2231 = vunpack.c.l.b16 %v852
        %v2232 = vunpack.c.h.b16 %v852
        %v2233 = vunpack.c.l.b16 %v853
        %v2234 = vunpack.c.h.b16 %v853
        %v2235 = vunpack.c.l.b16 %v854
        %v2236 = vunpack.c.h.b16 %v854
        %v2237 = vunpack.c.l.b16 %v855
        %v2238 = vunpack.c.h.b16 %v855
        %v2239 = vunpack.c.l.b16 %v856
        %v2240 = vunpack.c.h.b16 %v856
        %v2241 = vunpack.c.l.b16 %v857
        %v2242 = vunpack.c.h.b16 %v857
        %v2243 = vunpack.c.l.b16 %v858
        %v2244 = vunpack.c.h.b16 %v858
        %v2245 = vunpack.c.l.b16 %v859
        %v2246 = vunpack.c.h.b16 %v859
        %v2247 = vunpack.c.l.b16 %v860
        %v2248 = vunpack.c.h.b16 %v860
        %v2249 = vunpack.c.l.b16 %v861
        %v2250 = vunpack.c.h.b16 %v861
        %v2251 = vunpack.c.l.b16 %v862
        %v2252 = vunpack.c.h.b16 %v862
        %v2253 = vunpack.c.l.b16 %v863
        %v2254 = vunpack.c.h.b16 %v863
        %v2255 = vunpack.c.l.b16 %v864
        %v2256 = vunpack.c.h.b16 %v864
        %v2257 = vunpack.c.l.b16 %v865
        %v2258 = vunpack.c.h.b16 %v865
        %v2259 = vunpack.c.l.b16 %v866
        %v2260 = vunpack.c.h.b16 %v866
        %v2261 = vunpack.c.l.b16 %v867
        %v2262 = vunpack.c.h.b16 %v867
        %v2263 = vunpack.c.l.b16 %v868
        %v2264 = vunpack.c.h.b16 %v868
        %v2265 = vunpack.c.l.b16 %v869
        %v2266 = vunpack.c.h.b16 %v869
        %v2267 = vunpack.c.l.b16 %v870
        %v2268 = vunpack.c.h.b16 %v870
        %v2269 = vunpack.c.l.b16 %v871
        %v2270 = vunpack.c.h.b16 %v871
        %v2271 = vunpack.c.l.b16 %v872
        %v2272 = vunpack.c.h.b16 %v872
        %v2273 = vunpack.c.l.b16 %v873
        %v2274 = vunpack.c.h.b16 %v873
        %v2275 = vunpack.c.l.b16 %v874
        %v2276 = vunpack.c.h.b16 %v874
        %v2277 = vunpack.c.l.b16 %v875
        %v2278 = vunpack.c.h.b16 %v875
        %v2279 = vunpack.c.l.b16 %v876
        %v2280 = vunpack.c.h.b16 %v876
        %v2281 = vunpack.c.l.b16 %v877
        %v2282 = vunpack.c.h.b16 %v877
        %v2283 = vunpack.c.l.b16 %v878
        %v2284 = vunpack.c.h.b16 %v878
        %v2285 = vunpack.c.l.b16 %v879
        %v2286 = vunpack.c.h.b16 %v879
        %v2287 = vunpack.c.l.b16 %v880
        %v2288 = vunpack.c.h.b16 %v880
        %v2289 = vunpack.c.l.b16 %v881
        %v2290 = vunpack.c.h.b16 %v881
        %v2291 = vunpack.c.l.b16 %v882
        %v2292 = vunpack.c.h.b16 %v882
        %v2293 = vunpack.c.l.b16 %v883
        %v2294 = vunpack.c.h.b16 %v883
        %v2295 = vunpack.c.l.b16 %v884
        %v2296 = vunpack.c.h.b16 %v884
        %v2297 = vunpack.c.l.b16 %v885
        %v2298 = vunpack.c.h.b16 %v885
        %v2299 = vunpack.c.l.b16 %v886
        %v2300 = vunpack.c.h.b16 %v886
        %v2301 = vunpack.c.l.b16 %v887
        %v2302 = vunpack.c.h.b16 %v887
        %v2303 = vunpack.c.l.b16 %v888
        %v2304 = vunpack.c.h.b16 %v888
        %v2305 = vunpack.c.l.b16 %v889
        %v2306 = vunpack.c.h.b16 %v889
        %v2307 = vunpack.c.l.b16 %v890
        %v2308 = vunpack.c.h.b16 %v890
        %v2309 = vunpack.c.l.b16 %v891
        %v2310 = vunpack.c.h.b16 %v891
        %v2311 = vunpack.c.l.b16 %v892
        %v2312 = vunpack.c.h.b16 %v892
        %v2313 = vunpack.c.l.b16 %v893
        %v2314 = vunpack.c.h.b16 %v893
        %v2315 = vunpack.c.l.b16 %v894
        %v2316 = vunpack.c.h.b16 %v894
        %v2317 = vunpack.c.l.b16 %v895
        %v2318 = vunpack.c.h.b16 %v895
        %v2319 = vunpack.c.l.b16 %v896
        %v2320 = vunpack.c.h.b16 %v896
        %v2321 = vunpack.c.l.b16 %v897
        %v2322 = vunpack.c.h.b16 %v897
        %v2323 = vunpack.c.l.b16 %v898
        %v2324 = vunpack.c.h.b16 %v898
        %v2325 = vunpack.c.l.b16 %v899
        %v2326 = vunpack.c.h.b16 %v899
        %v2327 = vunpack.c.l.b16 %v900
        %v2328 = vunpack.c.h.b16 %v900
        %v2329 = vunpack.c.l.b16 %v901
        %v2330 = vunpack.c.h.b16 %v901
        %v2331 = vunpack.c.l.b16 %v902
        %v2332 = vunpack.c.h.b16 %v902
        %v2333 = vunpack.c.l.b16 %v903
        %v2334 = vunpack.c.h.b16 %v903
        %v2335 = vunpack.c.l.b16 %v904
        %v2336 = vunpack.c.h.b16 %v904
        %v2337 = vunpack.c.l.b16 %v905
        %v2338 = vunpack.c.h.b16 %v905
        %v2339 = vunpack.c.l.b16 %v906
        %v2340 = vunpack.c.h.b16 %v906
        %v2341 = vunpack.c.l.b16 %v907
        %v2342 = vunpack.c.h.b16 %v907
        %v2343 = vunpack.c.l.b16 %v908
        %v2344 = vunpack.c.h.b16 %v908
        %v2345 = vunpack.c.l.b16 %v909
        %v2346 = vunpack.c.h.b16 %v909
        %v2347 = vunpack.c.l.b16 %v910
        %v2348 = vunpack.c.h.b16 %v910
        %v2349 = vunpack.c.l.b16 %v911
        %v2350 = vunpack.c.h.b16 %v911
        %v2351 = vunpack.c.l.b16 %v912
        %v2352 = vunpack.c.h.b16 %v912
        %v2353 = vunpack.c.l.b16 %v913
        %v2354 = vunpack.c.h.b16 %v913
        %v2355 = vunpack.c.l.b16 %v914
        %v2356 = vunpack.c.h.b16 %v914
        %v2357 = vunpack.c.l.b16 %v915
        %v2358 = vunpack.c.h.b16 %v915
        %v2359 = vunpack.c.l.b16 %v916
        %v2360 = vunpack.c.h.b16 %v916
        %v2361 = vunpack.c.l.b16 %v917
        %v2362 = vunpack.c.h.b16 %v917
        %v2363 = vunpack.c.l.b16 %v918
        %v2364 = vunpack.c.h.b16 %v918
        %v2365 = vunpack.c.l.b16 %v919
        %v2366 = vunpack.c.h.b16 %v919
        %v2367 = vunpack.c.l.b16 %v920
        %v2368 = vunpack.c.h.b16 %v920
        %v2369 = vunpack.c.l.b16 %v921
        %v2370 = vunpack.c.h.b16 %v921
        %v2371 = vunpack.c.l.b16 %v922
        %v2372 = vunpack.c.h.b16 %v922
        %v2373 = vunpack.c.l.b16 %v923
        %v2374 = vunpack.c.h.b16 %v923
        %v2375 = vunpack.c.l.b16 %v924
        %v2376 = vunpack.c.h.b16 %v924
        %v2377 = vunpack.c.l.b16 %v925
        %v2378 = vunpack.c.h.b16 %v925
        %v2379 = vunpack.c.l.b16 %v926
        %v2380 = vunpack.c.h.b16 %v926
        %v2381 = vunpack.c.l.b16 %v927
        %v2382 = vunpack.c.h.b16 %v927
        %v2383 = vunpack.c.l.b16 %v928
        %v2384 = vunpack.c.h.b16 %v928
        %v2385 = vunpack.c.l.b16 %v929
        %v2386 = vunpack.c.h.b16 %v929
        %v2387 = vunpack.c.l.b16 %v930
        %v2388 = vunpack.c.h.b16 %v930
        %v2389 = vunpack.c.l.b16 %v931
        %v2390 = vunpack.c.h.b16 %v931
        %v2391 = vunpack.c.l.b16 %v932
        %v2392 = vunpack.c.h.b16 %v932
        %v2393 = vunpack.c.l.b16 %v933
        %v2394 = vunpack.c.h.b16 %v933
        %v2395 = vunpack.c.l.b16 %v934
        %v2396 = vunpack.c.h.b16 %v934
        %v2397 = vunpack.c.l.b16 %v935
        %v2398 = vunpack.c.h.b16 %v935
        %v2399 = vunpack.c.l.b16 %v936
        %v2400 = vunpack.c.h.b16 %v936
        %v2401 = vunpack.c.l.b16 %v937
        %v2402 = vunpack.c.h.b16 %v937
        %v2403 = vunpack.c.l.b16 %v938
        %v2404 = vunpack.c.h.b16 %v938
        %v2405 = vunpack.c.l.b16 %v939
        %v2406 = vunpack.c.h.b16 %v939
        %v2407 = vunpack.c.l.b16 %v940
        %v2408 = vunpack.c.h.b16 %v940
        %v2409 = vunpack.c.l.b16 %v941
        %v2410 = vunpack.c.h.b16 %v941
        %v2411 = vunpack.c.l.b16 %v942
        %v2412 = vunpack.c.h.b16 %v942
        %v2413 = vunpack.c.l.b16 %v943
        %v2414 = vunpack.c.h.b16 %v943
        %v2415 = vunpack.c.l.b16 %v944
        %v2416 = vunpack.c.h.b16 %v944
        %v2417 = vunpack.c.l.b16 %v945
        %v2418 = vunpack.c.h.b16 %v945
        %v2419 = vunpack.c.l.b16 %v946
        %v2420 = vunpack.c.h.b16 %v946
        %v2421 = vunpack.c.l.b16 %v947
        %v2422 = vunpack.c.h.b16 %v947
        %v2423 = vunpack.c.l.b16 %v948
        %v2424 = vunpack.c.h.b16 %v948
        %v2425 = vunpack.c.l.b16 %v949
        %v2426 = vunpack.c.h.b16 %v949
        %v2427 = vunpack.c.l.b16 %v950
        %v2428 = vunpack.c.h.b16 %v950
        %v2429 = vunpack.c.l.b16 %v951
        %v2430 = vunpack.c.h.b16 %v951
        %v2431 = vunpack.c.l.b16 %v952
        %v2432 = vunpack.c.h.b16 %v952
        %v2433 = vunpack.c.l.b16 %v953
        %v2434 = vunpack.c.h.b16 %v953
        %v2435 = vunpack.c.l.b16 %v954
        %v2436 = vunpack.c.h.b16 %v954
        %v2437 = vunpack.c.l.b16 %v955
        %v2438 = vunpack.c.h.b16 %v955
        %v2439 = vunpack.c.l.b16 %v956
        %v2440 = vunpack.c.h.b16 %v956
        %v2441 = vunpack.c.l.b16 %v957
        %v2442 = vunpack.c.h.b16 %v957
        %v2443 = vunpack.c.l.b16 %v958
        %v2444 = vunpack.c.h.b16 %v958
        %v2445 = vunpack.c.l.b16 %v959
        %v2446 = vunpack.c.h.b16 %v959
        %v2447 = vunpack.c.l.b16 %v960
        %v2448 = vunpack.c.h.b16 %v960
        %v2449 = vunpack.c.l.b16 %v961
        %v2450 = vunpack.c.h.b16 %v961
        %v2451 = vunpack.c.l.b16 %v962
        %v2452 = vunpack.c.h.b16 %v962
        %v2453 = vunpack.c.l.b16 %v963
        %v2454 = vunpack.c.h.b16 %v963
        %v2455 = vunpack.c.l.b16 %v964
        %v2456 = vunpack.c.h.b16 %v964
        %v2457 = vunpack.c.l.b16 %v965
        %v2458 = vunpack.c.h.b16 %v965
        %v2459 = vunpack.c.l.b16 %v966
        %v2460 = vunpack.c.h.b16 %v966
        %v2461 = vunpack.c.l.b16 %v967
        %v2462 = vunpack.c.h.b16 %v967
        %v2463 = vunpack.c.l.b16 %v968
        %v2464 = vunpack.c.h.b16 %v968
        %v2465 = vunpack.c.l.b16 %v969
        %v2466 = vunpack.c.h.b16 %v969
        %v2467 = vunpack.c.l.b16 %v970
        %v2468 = vunpack.c.h.b16 %v970
        %v2469 = vunpack.c.l.b16 %v971
        %v2470 = vunpack.c.h.b16 %v971
        %v2471 = vunpack.c.l.b16 %v972
        %v2472 = vunpack.c.h.b16 %v972
        %v2473 = vunpack.c.l.b16 %v973
        %v2474 = vunpack.c.h.b16 %v973
        %v2475 = vunpack.c.l.b16 %v974
        %v2476 = vunpack.c.h.b16 %v974
        %v2477 = vunpack.c.l.b16 %v975
        %v2478 = vunpack.c.h.b16 %v975
        %v2479 = vunpack.c.l.b16 %v976
        %v2480 = vunpack.c.h.b16 %v976
        %v2481 = vunpack.c.l.b16 %v977
        %v2482 = vunpack.c.h.b16 %v977
        %v2483 = vunpack.c.l.b16 %v978
        %v2484 = vunpack.c.h.b16 %v978
        %v2485 = vunpack.c.l.b16 %v979
        %v2486 = vunpack.c.h.b16 %v979
        %v2487 = vunpack.c.l.b16 %v980
        %v2488 = vunpack.c.h.b16 %v980
        %v2489 = vunpack.c.l.b16 %v981
        %v2490 = vunpack.c.h.b16 %v981
        %v2491 = vunpack.c.l.b16 %v982
        %v2492 = vunpack.c.h.b16 %v982
        %v2493 = vunpack.c.l.b16 %v983
        %v2494 = vunpack.c.h.b16 %v983
        %v2495 = vunpack.c.l.b16 %v984
        %v2496 = vunpack.c.h.b16 %v984
        %v2497 = vunpack.c.l.b16 %v985
        %v2498 = vunpack.c.h.b16 %v985
        %v2499 = vunpack.c.l.b16 %v986
        %v2500 = vunpack.c.h.b16 %v986
        %v2501 = vunpack.c.l.b16 %v987
        %v2502 = vunpack.c.h.b16 %v987
        %v2503 = vunpack.c.l.b16 %v988
        %v2504 = vunpack.c.h.b16 %v988
        %v2505 = vunpack.c.l.b16 %v989
        %v2506 = vunpack.c.h.b16 %v989
        %v2507 = vunpack.c.l.b16 %v990
        %v2508 = vunpack.c.h.b16 %v990
        %v2509 = vunpack.c.l.b16 %v991
        %v2510 = vunpack.c.h.b16 %v991
        %v2511 = vunpack.c.l.b16 %v992
        %v2512 = vunpack.c.h.b16 %v992
        %v2513 = vunpack.c.l.b16 %v993
        %v2514 = vunpack.c.h.b16 %v993
        %v2515 = vunpack.c.l.b16 %v994
        %v2516 = vunpack.c.h.b16 %v994
        %v2517 = vunpack.c.l.b16 %v995
        %v2518 = vunpack.c.h.b16 %v995
        %v2519 = vunpack.c.l.b16 %v996
        %v2520 = vunpack.c.h.b16 %v996
        %v2521 = vunpack.c.l.b16 %v997
        %v2522 = vunpack.c.h.b16 %v997
        %v2523 = vunpack.c.l.b16 %v998
        %v2524 = vunpack.c.h.b16 %v998
        %v2525 = vunpack.c.l.b16 %v999
        %v2526 = vunpack.c.h.b16 %v999
        %v2527 = vunpack.c.l.b16 %v1000
        %v2528 = vunpack.c.h.b16 %v1000
        %v2529 = vunpack.c.l.b16 %v1001
        %v2530 = vunpack.c.h.b16 %v1001
        %v2531 = vunpack.c.l.b16 %v1002
        %v2532 = vunpack.c.h.b16 %v1002
        %v2533 = vunpack.c.l.b16 %v1003
        %v2534 = vunpack.c.h.b16 %v1003
        %v2535 = vunpack.c.l.b16 %v1004
        %v2536 = vunpack.c.h.b16 %v1004
        %v2537 = vunpack.c.l.b16 %v1005
        %v2538 = vunpack.c.h.b16 %v1005
        %v2539 = vunpack.c.l.b16 %v1006
        %v2540 = vunpack.c.h.b16 %v1006
        %v2541 = vunpack.c.l.b16 %v1007
        %v2542 = vunpack.c.h.b16 %v1007
        %v2543 = vunpack.c.l.b16 %v1008
        %v2544 = vunpack.c.h.b16 %v1008
        %v2545 = vunpack.c.l.b16 %v1009
        %v2546 = vunpack.c.h.b16 %v1009
        %v2547 = vunpack.c.l.b16 %v1010
        %v2548 = vunpack.c.h.b16 %v1010
        %v2549 = vunpack.c.l.b16 %v1011
        %v2550 = vunpack.c.h.b16 %v1011
        %v2551 = vunpack.c.l.b16 %v1012
        %v2552 = vunpack.c.h.b16 %v1012
        %v2553 = vunpack.c.l.b16 %v1013
        %v2554 = vunpack.c.h.b16 %v1013
        %v2555 = vunpack.c.l.b16 %v1014
        %v2556 = vunpack.c.h.b16 %v1014
        %v2557 = vunpack.c.l.b16 %v1015
        %v2558 = vunpack.c.h.b16 %v1015
        %v2559 = vunpack.c.l.b16 %v1016
        %v2560 = vunpack.c.h.b16 %v1016
        %v2561 = vunpack.c.l.b16 %v1017
        %v2562 = vunpack.c.h.b16 %v1017
        %v2563 = vunpack.c.l.b16 %v1018
        %v2564 = vunpack.c.h.b16 %v1018
        %v2565 = vunpack.c.l.b16 %v1019
        %v2566 = vunpack.c.h.b16 %v1019
        %v2567 = vunpack.c.l.b16 %v1020
        %v2568 = vunpack.c.h.b16 %v1020
        %v2569 = vunpack.c.l.b16 %v1021
        %v2570 = vunpack.c.h.b16 %v1021
        %v2571 = vunpack.c.l.b16 %v1022
        %v2572 = vunpack.c.h.b16 %v1022
        %v2573 = vunpack.c.l.b16 %v1023
        %v2574 = vunpack.c.h.b16 %v1023
        %v2575 = vunpack.c.l.b16 %v1024
        %v2576 = vunpack.c.h.b16 %v1024
        %v2577 = vunpack.c.l.b16 %v1025
        %v2578 = vunpack.c.h.b16 %v1025
        %v2579 = vunpack.c.l.b16 %v1026
        %v2580 = vunpack.c.h.b16 %v1026
        %v2581 = vunpack.c.l.b16 %v1027
        %v2582 = vunpack.c.h.b16 %v1027
        %v2583 = vunpack.c.l.b16 %v1028
        %v2584 = vunpack.c.h.b16 %v1028
        %v2585 = vunpack.c.l.b16 %v1029
        %v2586 = vunpack.c.h.b16 %v1029
        %v2587 = vunpack.c.l.b16 %v1030
        %v2588 = vunpack.c.h.b16 %v1030
        %v2589 = vunpack.c.l.b16 %v1031
        %v2590 = vunpack.c.h.b16 %v1031
        %v2591 = vunpack.c.l.b16 %v1032
        %v2592 = vunpack.c.h.b16 %v1032
        %v2593 = vunpack.c.l.b16 %v1033
        %v2594 = vunpack.c.h.b16 %v1033
        %v2595 = vunpack.c.l.b16 %v1034
        %v2596 = vunpack.c.h.b16 %v1034
        %v2597 = vunpack.c.l.b16 %v1035
        %v2598 = vunpack.c.h.b16 %v1035
        %v2599 = vunpack.c.l.b16 %v1036
        %v2600 = vunpack.c.h.b16 %v1036
        %v2601 = vunpack.c.l.b16 %v1037
        %v2602 = vunpack.c.h.b16 %v1037
        %v2603 = vunpack.c.l.b16 %v1038
        %v2604 = vunpack.c.h.b16 %v1038
        %v2605 = vunpack.c.l.b16 %v1039
        %v2606 = vunpack.c.h.b16 %v1039
        %v2607 = vunpack.c.l.b16 %v1040
        %v2608 = vunpack.c.h.b16 %v1040
        %v2609 = vunpack.c.l.b16 %v1041
        %v2610 = vunpack.c.h.b16 %v1041
        %v2611 = vunpack.c.l.b16 %v1042
        %v2612 = vunpack.c.h.b16 %v1042
        %v2613 = vunpack.c.l.b16 %v1043
        %v2614 = vunpack.c.h.b16 %v1043
        %v2615 = vunpack.c.l.b16 %v1044
        %v2616 = vunpack.c.h.b16 %v1044
        %v2617 = vunpack.c.l.b16 %v1045
        %v2618 = vunpack.c.h.b16 %v1045
        %v2619 = vunpack.c.l.b16 %v1046
        %v2620 = vunpack.c.h.b16 %v1046
        %v2621 = vunpack.c.l.b16 %v1047
        %v2622 = vunpack.c.h.b16 %v1047
        %v2623 = vunpack.c.l.b16 %v1048
        %v2624 = vunpack.c.h.b16 %v1048
        %v2625 = vpack.c.b16 %v1609, %v1601
        %v2626 = vpack.c.b16 %v1610, %v1602
        %v2627 = vpack.c.b16 %v1611, %v1603
        %v2628 = vpack.c.b16 %v1612, %v1604
        %v2629 = vpack.c.b16 %v1613, %v1605
        %v2630 = vpack.c.b16 %v1614, %v1606
        %v2631 = vpack.c.b16 %v1615, %v1607
        %v2632 = vpack.c.b16 %v1616, %v1608
        %v2633 = vpack.c.b16 %v1625, %v1617
        %v2634 = vpack.c.b16 %v1626, %v1618
        %v2635 = vpack.c.b16 %v1627, %v1619
        %v2636 = vpack.c.b16 %v1628, %v1620
        %v2637 = vpack.c.b16 %v1629, %v1621
        %v2638 = vpack.c.b16 %v1630, %v1622
        %v2639 = vpack.c.b16 %v1631, %v1623
        %v2640 = vpack.c.b16 %v1632, %v1624
        %v2641 = vpack.c.b16 %v1641, %v1633
        %v2642 = vpack.c.b16 %v1642, %v1634
        %v2643 = vpack.c.b16 %v1643, %v1635
        %v2644 = vpack.c.b16 %v1644, %v1636
        %v2645 = vpack.c.b16 %v1645, %v1637
        %v2646 = vpack.c.b16 %v1646, %v1638
        %v2647 = vpack.c.b16 %v1647, %v1639
        %v2648 = vpack.c.b16 %v1648, %v1640
        %v2649 = vpack.c.b16 %v1657, %v1649
        %v2650 = vpack.c.b16 %v1658, %v1650
        %v2651 = vpack.c.b16 %v1659, %v1651
        %v2652 = vpack.c.b16 %v1660, %v1652
        %v2653 = vpack.c.b16 %v1661, %v1653
        %v2654 = vpack.c.b16 %v1662, %v1654
        %v2655 = vpack.c.b16 %v1663, %v1655
        %v2656 = vpack.c.b16 %v1664, %v1656
        %v2657 = vpack.c.b16 %v1673, %v1665
        %v2658 = vpack.c.b16 %v1674, %v1666
        %v2659 = vpack.c.b16 %v1675, %v1667
        %v2660 = vpack.c.b16 %v1676, %v1668
        %v2661 = vpack.c.b16 %v1677, %v1669
        %v2662 = vpack.c.b16 %v1678, %v1670
        %v2663 = vpack.c.b16 %v1679, %v1671
        %v2664 = vpack.c.b16 %v1680, %v1672
        %v2665 = vpack.c.b16 %v1689, %v1681
        %v2666 = vpack.c.b16 %v1690, %v1682
        %v2667 = vpack.c.b16 %v1691, %v1683
        %v2668 = vpack.c.b16 %v1692, %v1684
        %v2669 = vpack.c.b16 %v1693, %v1685
        %v2670 = vpack.c.b16 %v1694, %v1686
        %v2671 = vpack.c.b16 %v1695, %v1687
        %v2672 = vpack.c.b16 %v1696, %v1688
        %v2673 = vpack.c.b16 %v1705, %v1697
        %v2674 = vpack.c.b16 %v1706, %v1698
        %v2675 = vpack.c.b16 %v1707, %v1699
        %v2676 = vpack.c.b16 %v1708, %v1700
        %v2677 = vpack.c.b16 %v1709, %v1701
        %v2678 = vpack.c.b16 %v1710, %v1702
        %v2679 = vpack.c.b16 %v1711, %v1703
        %v2680 = vpack.c.b16 %v1712, %v1704
        %v2681 = vpack.c.b16 %v1721, %v1713
        %v2682 = vpack.c.b16 %v1722, %v1714
        %v2683 = vpack.c.b16 %v1723, %v1715
        %v2684 = vpack.c.b16 %v1724, %v1716
        %v2685 = vpack.c.b16 %v1725, %v1717
        %v2686 = vpack.c.b16 %v1726, %v1718
        %v2687 = vpack.c.b16 %v1727, %v1719
        %v2688 = vpack.c.b16 %v1728, %v1720
        %v2689 = vpack.c.b16 %v1737, %v1729
        %v2690 = vpack.c.b16 %v1738, %v1730
        %v2691 = vpack.c.b16 %v1739, %v1731
        %v2692 = vpack.c.b16 %v1740, %v1732
        %v2693 = vpack.c.b16 %v1741, %v1733
        %v2694 = vpack.c.b16 %v1742, %v1734
        %v2695 = vpack.c.b16 %v1743, %v1735
        %v2696 = vpack.c.b16 %v1744, %v1736
        %v2697 = vpack.c.b16 %v1753, %v1745
        %v2698 = vpack.c.b16 %v1754, %v1746
        %v2699 = vpack.c.b16 %v1755, %v1747
        %v2700 = vpack.c.b16 %v1756, %v1748
        %v2701 = vpack.c.b16 %v1757, %v1749
        %v2702 = vpack.c.b16 %v1758, %v1750
        %v2703 = vpack.c.b16 %v1759, %v1751
        %v2704 = vpack.c.b16 %v1760, %v1752
        %v2705 = vpack.c.b16 %v1769, %v1761
        %v2706 = vpack.c.b16 %v1770, %v1762
        %v2707 = vpack.c.b16 %v1771, %v1763
        %v2708 = vpack.c.b16 %v1772, %v1764
        %v2709 = vpack.c.b16 %v1773, %v1765
        %v2710 = vpack.c.b16 %v1774, %v1766
        %v2711 = vpack.c.b16 %v1775, %v1767
        %v2712 = vpack.c.b16 %v1776, %v1768
        %v2713 = vpack.c.b16 %v1785, %v1777
        %v2714 = vpack.c.b16 %v1786, %v1778
        %v2715 = vpack.c.b16 %v1787, %v1779
        %v2716 = vpack.c.b16 %v1788, %v1780
        %v2717 = vpack.c.b16 %v1789, %v1781
        %v2718 = vpack.c.b16 %v1790, %v1782
        %v2719 = vpack.c.b16 %v1791, %v1783
        %v2720 = vpack.c.b16 %v1792, %v1784
        %v2721 = vpack.c.b16 %v1801, %v1793
        %v2722 = vpack.c.b16 %v1802, %v1794
        %v2723 = vpack.c.b16 %v1803, %v1795
        %v2724 = vpack.c.b16 %v1804, %v1796
        %v2725 = vpack.c.b16 %v1805, %v1797
        %v2726 = vpack.c.b16 %v1806, %v1798
        %v2727 = vpack.c.b16 %v1807, %v1799
        %v2728 = vpack.c.b16 %v1808, %v1800
        %v2729 = vpack.c.b16 %v1817, %v1809
        %v2730 = vpack.c.b16 %v1818, %v1810
        %v2731 = vpack.c.b16 %v1819, %v1811
        %v2732 = vpack.c.b16 %v1820, %v1812
        %v2733 = vpack.c.b16 %v1821, %v1813
        %v2734 = vpack.c.b16 %v1822, %v1814
        %v2735 = vpack.c.b16 %v1823, %v1815
        %v2736 = vpack.c.b16 %v1824, %v1816
        %v2737 = vpack.c.b16 %v1833, %v1825
        %v2738 = vpack.c.b16 %v1834, %v1826
        %v2739 = vpack.c.b16 %v1835, %v1827
        %v2740 = vpack.c.b16 %v1836, %v1828
        %v2741 = vpack.c.b16 %v1837, %v1829
        %v2742 = vpack.c.b16 %v1838, %v1830
        %v2743 = vpack.c.b16 %v1839, %v1831
        %v2744 = vpack.c.b16 %v1840, %v1832
        %v2745 = vpack.c.b16 %v1849, %v1841
        %v2746 = vpack.c.b16 %v1850, %v1842
        %v2747 = vpack.c.b16 %v1851, %v1843
        %v2748 = vpack.c.b16 %v1852, %v1844
        %v2749 = vpack.c.b16 %v1853, %v1845
        %v2750 = vpack.c.b16 %v1854, %v1846
        %v2751 = vpack.c.b16 %v1855, %v1847
        %v2752 = vpack.c.b16 %v1856, %v1848
        %v2753 = vpack.c.b16 %v1865, %v1857
        %v2754 = vpack.c.b16 %v1866, %v1858
        %v2755 = vpack.c.b16 %v1867, %v1859
        %v2756 = vpack.c.b16 %v1868, %v1860
        %v2757 = vpack.c.b16 %v1869, %v1861
        %v2758 = vpack.c.b16 %v1870, %v1862
        %v2759 = vpack.c.b16 %v1871, %v1863
        %v2760 = vpack.c.b16 %v1872, %v1864
        %v2761 = vpack.c.b16 %v1881, %v1873
        %v2762 = vpack.c.b16 %v1882, %v1874
        %v2763 = vpack.c.b16 %v1883, %v1875
        %v2764 = vpack.c.b16 %v1884, %v1876
        %v2765 = vpack.c.b16 %v1885, %v1877
        %v2766 = vpack.c.b16 %v1886, %v1878
        %v2767 = vpack.c.b16 %v1887, %v1879
        %v2768 = vpack.c.b16 %v1888, %v1880
        %v2769 = vpack.c.b16 %v1897, %v1889
        %v2770 = vpack.c.b16 %v1898, %v1890
        %v2771 = vpack.c.b16 %v1899, %v1891
        %v2772 = vpack.c.b16 %v1900, %v1892
        %v2773 = vpack.c.b16 %v1901, %v1893
        %v2774 = vpack.c.b16 %v1902, %v1894
        %v2775 = vpack.c.b16 %v1903, %v1895
        %v2776 = vpack.c.b16 %v1904, %v1896
        %v2777 = vpack.c.b16 %v1913, %v1905
        %v2778 = vpack.c.b16 %v1914, %v1906
        %v2779 = vpack.c.b16 %v1915, %v1907
        %v2780 = vpack.c.b16 %v1916, %v1908
        %v2781 = vpack.c.b16 %v1917, %v1909
        %v2782 = vpack.c.b16 %v1918, %v1910
        %v2783 = vpack.c.b16 %v1919, %v1911
        %v2784 = vpack.c.b16 %v1920, %v1912
        %v2785 = vpack.c.b16 %v1929, %v1921
        %v2786 = vpack.c.b16 %v1930, %v1922
        %v2787 = vpack.c.b16 %v1931, %v1923
        %v2788 = vpack.c.b16 %v1932, %v1924
        %v2789 = vpack.c.b16 %v1933, %v1925
        %v2790 = vpack.c.b16 %v1934, %v1926
        %v2791 = vpack.c.b16 %v1935, %v1927
        %v2792 = vpack.c.b16 %v1936, %v1928
        %v2793 = vpack.c.b16 %v1945, %v1937
        %v2794 = vpack.c.b16 %v1946, %v1938
        %v2795 = vpack.c.b16 %v1947, %v1939
        %v2796 = vpack.c.b16 %v1948, %v1940
        %v2797 = vpack.c.b16 %v1949, %v1941
        %v2798 = vpack.c.b16 %v1950, %v1942
        %v2799 = vpack.c.b16 %v1951, %v1943
        %v2800 = vpack.c.b16 %v1952, %v1944
        %v2801 = vpack.c.b16 %v1961, %v1953
        %v2802 = vpack.c.b16 %v1962, %v1954
        %v2803 = vpack.c.b16 %v1963, %v1955
        %v2804 = vpack.c.b16 %v1964, %v1956
        %v2805 = vpack.c.b16 %v1965, %v1957
        %v2806 = vpack.c.b16 %v1966, %v1958
        %v2807 = vpack.c.b16 %v1967, %v1959
        %v2808 = vpack.c.b16 %v1968, %v1960
        %v2809 = vpack.c.b16 %v1977, %v1969
        %v2810 = vpack.c.b16 %v1978, %v1970
        %v2811 = vpack.c.b16 %v1979, %v1971
        %v2812 = vpack.c.b16 %v1980, %v1972
        %v2813 = vpack.c.b16 %v1981, %v1973
        %v2814 = vpack.c.b16 %v1982, %v1974
        %v2815 = vpack.c.b16 %v1983, %v1975
        %v2816 = vpack.c.b16 %v1984, %v1976
        %v2817 = vpack.c.b16 %v1993, %v1985
        %v2818 = vpack.c.b16 %v1994, %v1986
        %v2819 = vpack.c.b16 %v1995, %v1987
        %v2820 = vpack.c.b16 %v1996, %v1988
        %v2821 = vpack.c.b16 %v1997, %v1989
        %v2822 = vpack.c.b16 %v1998, %v1990
        %v2823 = vpack.c.b16 %v1999, %v1991
        %v2824 = vpack.c.b16 %v2000, %v1992
        %v2825 = vpack.c.b16 %v2009, %v2001
        %v2826 = vpack.c.b16 %v2010, %v2002
        %v2827 = vpack.c.b16 %v2011, %v2003
        %v2828 = vpack.c.b16 %v2012, %v2004
        %v2829 = vpack.c.b16 %v2013, %v2005
        %v2830 = vpack.c.b16 %v2014, %v2006
        %v2831 = vpack.c.b16 %v2015, %v2007
        %v2832 = vpack.c.b16 %v2016, %v2008
        %v2833 = vpack.c.b16 %v2025, %v2017
        %v2834 = vpack.c.b16 %v2026, %v2018
        %v2835 = vpack.c.b16 %v2027, %v2019
        %v2836 = vpack.c.b16 %v2028, %v2020
        %v2837 = vpack.c.b16 %v2029, %v2021
        %v2838 = vpack.c.b16 %v2030, %v2022
        %v2839 = vpack.c.b16 %v2031, %v2023
        %v2840 = vpack.c.b16 %v2032, %v2024
        %v2841 = vpack.c.b16 %v2041, %v2033
        %v2842 = vpack.c.b16 %v2042, %v2034
        %v2843 = vpack.c.b16 %v2043, %v2035
        %v2844 = vpack.c.b16 %v2044, %v2036
        %v2845 = vpack.c.b16 %v2045, %v2037
        %v2846 = vpack.c.b16 %v2046, %v2038
        %v2847 = vpack.c.b16 %v2047, %v2039
        %v2848 = vpack.c.b16 %v2048, %v2040
        %v2849 = vpack.c.b16 %v2057, %v2049
        %v2850 = vpack.c.b16 %v2058, %v2050
        %v2851 = vpack.c.b16 %v2059, %v2051
        %v2852 = vpack.c.b16 %v2060, %v2052
        %v2853 = vpack.c.b16 %v2061, %v2053
        %v2854 = vpack.c.b16 %v2062, %v2054
        %v2855 = vpack.c.b16 %v2063, %v2055
        %v2856 = vpack.c.b16 %v2064, %v2056
        %v2857 = vpack.c.b16 %v2073, %v2065
        %v2858 = vpack.c.b16 %v2074, %v2066
        %v2859 = vpack.c.b16 %v2075, %v2067
        %v2860 = vpack.c.b16 %v2076, %v2068
        %v2861 = vpack.c.b16 %v2077, %v2069
        %v2862 = vpack.c.b16 %v2078, %v2070
        %v2863 = vpack.c.b16 %v2079, %v2071
        %v2864 = vpack.c.b16 %v2080, %v2072
        %v2865 = vpack.c.b16 %v2089, %v2081
        %v2866 = vpack.c.b16 %v2090, %v2082
        %v2867 = vpack.c.b16 %v2091, %v2083
        %v2868 = vpack.c.b16 %v2092, %v2084
        %v2869 = vpack.c.b16 %v2093, %v2085
        %v2870 = vpack.c.b16 %v2094, %v2086
        %v2871 = vpack.c.b16 %v2095, %v2087
        %v2872 = vpack.c.b16 %v2096, %v2088
        %v2873 = vpack.c.b16 %v2105, %v2097
        %v2874 = vpack.c.b16 %v2106, %v2098
        %v2875 = vpack.c.b16 %v2107, %v2099
        %v2876 = vpack.c.b16 %v2108, %v2100
        %v2877 = vpack.c.b16 %v2109, %v2101
        %v2878 = vpack.c.b16 %v2110, %v2102
        %v2879 = vpack.c.b16 %v2111, %v2103
        %v2880 = vpack.c.b16 %v2112, %v2104
        %v2881 = vpack.c.b16 %v2121, %v2113
        %v2882 = vpack.c.b16 %v2122, %v2114
        %v2883 = vpack.c.b16 %v2123, %v2115
        %v2884 = vpack.c.b16 %v2124, %v2116
        %v2885 = vpack.c.b16 %v2125, %v2117
        %v2886 = vpack.c.b16 %v2126, %v2118
        %v2887 = vpack.c.b16 %v2127, %v2119
        %v2888 = vpack.c.b16 %v2128, %v2120
        %v2889 = vpack.c.b16 %v2137, %v2129
        %v2890 = vpack.c.b16 %v2138, %v2130
        %v2891 = vpack.c.b16 %v2139, %v2131
        %v2892 = vpack.c.b16 %v2140, %v2132
        %v2893 = vpack.c.b16 %v2141, %v2133
        %v2894 = vpack.c.b16 %v2142, %v2134
        %v2895 = vpack.c.b16 %v2143, %v2135
        %v2896 = vpack.c.b16 %v2144, %v2136
        %v2897 = vpack.c.b16 %v2153, %v2145
        %v2898 = vpack.c.b16 %v2154, %v2146
        %v2899 = vpack.c.b16 %v2155, %v2147
        %v2900 = vpack.c.b16 %v2156, %v2148
        %v2901 = vpack.c.b16 %v2157, %v2149
        %v2902 = vpack.c.b16 %v2158, %v2150
        %v2903 = vpack.c.b16 %v2159, %v2151
        %v2904 = vpack.c.b16 %v2160, %v2152
        %v2905 = vpack.c.b16 %v2169, %v2161
        %v2906 = vpack.c.b16 %v2170, %v2162
        %v2907 = vpack.c.b16 %v2171, %v2163
        %v2908 = vpack.c.b16 %v2172, %v2164
        %v2909 = vpack.c.b16 %v2173, %v2165
        %v2910 = vpack.c.b16 %v2174, %v2166
        %v2911 = vpack.c.b16 %v2175, %v2167
        %v2912 = vpack.c.b16 %v2176, %v2168
        %v2913 = vpack.c.b16 %v2185, %v2177
        %v2914 = vpack.c.b16 %v2186, %v2178
        %v2915 = vpack.c.b16 %v2187, %v2179
        %v2916 = vpack.c.b16 %v2188, %v2180
        %v2917 = vpack.c.b16 %v2189, %v2181
        %v2918 = vpack.c.b16 %v2190, %v2182
        %v2919 = vpack.c.b16 %v2191, %v2183
        %v2920 = vpack.c.b16 %v2192, %v2184
        %v2921 = vpack.c.b16 %v2201, %v2193
        %v2922 = vpack.c.b16 %v2202, %v2194
        %v2923 = vpack.c.b16 %v2203, %v2195
        %v2924 = vpack.c.b16 %v2204, %v2196
        %v2925 = vpack.c.b16 %v2205, %v2197
        %v2926 = vpack.c.b16 %v2206, %v2198
        %v2927 = vpack.c.b16 %v2207, %v2199
        %v2928 = vpack.c.b16 %v2208, %v2200
        %v2929 = vpack.c.b16 %v2217, %v2209
        %v2930 = vpack.c.b16 %v2218, %v2210
        %v2931 = vpack.c.b16 %v2219, %v2211
        %v2932 = vpack.c.b16 %v2220, %v2212
        %v2933 = vpack.c.b16 %v2221, %v2213
        %v2934 = vpack.c.b16 %v2222, %v2214
        %v2935 = vpack.c.b16 %v2223, %v2215
        %v2936 = vpack.c.b16 %v2224, %v2216
        %v2937 = vpack.c.b16 %v2233, %v2225
        %v2938 = vpack.c.b16 %v2234, %v2226
        %v2939 = vpack.c.b16 %v2235, %v2227
        %v2940 = vpack.c.b16 %v2236, %v2228
        %v2941 = vpack.c.b16 %v2237, %v2229
        %v2942 = vpack.c.b16 %v2238, %v2230
        %v2943 = vpack.c.b16 %v2239, %v2231
        %v2944 = vpack.c.b16 %v2240, %v2232
        %v2945 = vpack.c.b16 %v2249, %v2241
        %v2946 = vpack.c.b16 %v2250, %v2242
        %v2947 = vpack.c.b16 %v2251, %v2243
        %v2948 = vpack.c.b16 %v2252, %v2244
        %v2949 = vpack.c.b16 %v2253, %v2245
        %v2950 = vpack.c.b16 %v2254, %v2246
        %v2951 = vpack.c.b16 %v2255, %v2247
        %v2952 = vpack.c.b16 %v2256, %v2248
        %v2953 = vpack.c.b16 %v2265, %v2257
        %v2954 = vpack.c.b16 %v2266, %v2258
        %v2955 = vpack.c.b16 %v2267, %v2259
        %v2956 = vpack.c.b16 %v2268, %v2260
        %v2957 = vpack.c.b16 %v2269, %v2261
        %v2958 = vpack.c.b16 %v2270, %v2262
        %v2959 = vpack.c.b16 %v2271, %v2263
        %v2960 = vpack.c.b16 %v2272, %v2264
        %v2961 = vpack.c.b16 %v2281, %v2273
        %v2962 = vpack.c.b16 %v2282, %v2274
        %v2963 = vpack.c.b16 %v2283, %v2275
        %v2964 = vpack.c.b16 %v2284, %v2276
        %v2965 = vpack.c.b16 %v2285, %v2277
        %v2966 = vpack.c.b16 %v2286, %v2278
        %v2967 = vpack.c.b16 %v2287, %v2279
        %v2968 = vpack.c.b16 %v2288, %v2280
        %v2969 = vpack.c.b16 %v2297, %v2289
        %v2970 = vpack.c.b16 %v2298, %v2290
        %v2971 = vpack.c.b16 %v2299, %v2291
        %v2972 = vpack.c.b16 %v2300, %v2292
        %v2973 = vpack.c.b16 %v2301, %v2293
        %v2974 = vpack.c.b16 %v2302, %v2294
        %v2975 = vpack.c.b16 %v2303, %v2295
        %v2976 = vpack.c.b16 %v2304, %v2296
        %v2977 = vpack.c.b16 %v2313, %v2305
        %v2978 = vpack.c.b16 %v2314, %v2306
        %v2979 = vpack.c.b16 %v2315, %v2307
        %v2980 = vpack.c.b16 %v2316, %v2308
        %v2981 = vpack.c.b16 %v2317, %v2309
        %v2982 = vpack.c.b16 %v2318, %v2310
        %v2983 = vpack.c.b16 %v2319, %v2311
        %v2984 = vpack.c.b16 %v2320, %v2312
        %v2985 = vpack.c.b16 %v2329, %v2321
        %v2986 = vpack.c.b16 %v2330, %v2322
        %v2987 = vpack.c.b16 %v2331, %v2323
        %v2988 = vpack.c.b16 %v2332, %v2324
        %v2989 = vpack.c.b16 %v2333, %v2325
        %v2990 = vpack.c.b16 %v2334, %v2326
        %v2991 = vpack.c.b16 %v2335, %v2327
        %v2992 = vpack.c.b16 %v2336, %v2328
        %v2993 = vpack.c.b16 %v2345, %v2337
        %v2994 = vpack.c.b16 %v2346, %v2338
        %v2995 = vpack.c.b16 %v2347, %v2339
        %v2996 = vpack.c.b16 %v2348, %v2340
        %v2997 = vpack.c.b16 %v2349, %v2341
        %v2998 = vpack.c.b16 %v2350, %v2342
        %v2999 = vpack.c.b16 %v2351, %v2343
        %v3000 = vpack.c.b16 %v2352, %v2344
        %v3001 = vpack.c.b16 %v2361, %v2353
        %v3002 = vpack.c.b16 %v2362, %v2354
        %v3003 = vpack.c.b16 %v2363, %v2355
        %v3004 = vpack.c.b16 %v2364, %v2356
        %v3005 = vpack.c.b16 %v2365, %v2357
        %v3006 = vpack.c.b16 %v2366, %v2358
        %v3007 = vpack.c.b16 %v2367, %v2359
        %v3008 = vpack.c.b16 %v2368, %v2360
        %v3009 = vpack.c.b16 %v2377, %v2369
        %v3010 = vpack.c.b16 %v2378, %v2370
        %v3011 = vpack.c.b16 %v2379, %v2371
        %v3012 = vpack.c.b16 %v2380, %v2372
        %v3013 = vpack.c.b16 %v2381, %v2373
        %v3014 = vpack.c.b16 %v2382, %v2374
        %v3015 = vpack.c.b16 %v2383, %v2375
        %v3016 = vpack.c.b16 %v2384, %v2376
        %v3017 = vpack.c.b16 %v2393, %v2385
        %v3018 = vpack.c.b16 %v2394, %v2386
        %v3019 = vpack.c.b16 %v2395, %v2387
        %v3020 = vpack.c.b16 %v2396, %v2388
        %v3021 = vpack.c.b16 %v2397, %v2389
        %v3022 = vpack.c.b16 %v2398, %v2390
        %v3023 = vpack.c.b16 %v2399, %v2391
        %v3024 = vpack.c.b16 %v2400, %v2392
        %v3025 = vpack.c.b16 %v2409, %v2401
        %v3026 = vpack.c.b16 %v2410, %v2402
        %v3027 = vpack.c.b16 %v2411, %v2403
        %v3028 = vpack.c.b16 %v2412, %v2404
        %v3029 = vpack.c.b16 %v2413, %v2405
        %v3030 = vpack.c.b16 %v2414, %v2406
        %v3031 = vpack.c.b16 %v2415, %v2407
        %v3032 = vpack.c.b16 %v2416, %v2408
        %v3033 = vpack.c.b16 %v2425, %v2417
        %v3034 = vpack.c.b16 %v2426, %v2418
        %v3035 = vpack.c.b16 %v2427, %v2419
        %v3036 = vpack.c.b16 %v2428, %v2420
        %v3037 = vpack.c.b16 %v2429, %v2421
        %v3038 = vpack.c.b16 %v2430, %v2422
        %v3039 = vpack.c.b16 %v2431, %v2423
        %v3040 = vpack.c.b16 %v2432, %v2424
        %v3041 = vpack.c.b16 %v2441, %v2433
        %v3042 = vpack.c.b16 %v2442, %v2434
        %v3043 = vpack.c.b16 %v2443, %v2435
        %v3044 = vpack.c.b16 %v2444, %v2436
        %v3045 = vpack.c.b16 %v2445, %v2437
        %v3046 = vpack.c.b16 %v2446, %v2438
        %v3047 = vpack.c.b16 %v2447, %v2439
        %v3048 = vpack.c.b16 %v2448, %v2440
        %v3049 = vpack.c.b16 %v2457, %v2449
        %v3050 = vpack.c.b16 %v2458, %v2450
        %v3051 = vpack.c.b16 %v2459, %v2451
        %v3052 = vpack.c.b16 %v2460, %v2452
        %v3053 = vpack.c.b16 %v2461, %v2453
        %v3054 = vpack.c.b16 %v2462, %v2454
        %v3055 = vpack.c.b16 %v2463, %v2455
        %v3056 = vpack.c.b16 %v2464, %v2456
        %v3057 = vpack.c.b16 %v2473, %v2465
        %v3058 = vpack.c.b16 %v2474, %v2466
        %v3059 = vpack.c.b16 %v2475, %v2467
        %v3060 = vpack.c.b16 %v2476, %v2468
        %v3061 = vpack.c.b16 %v2477, %v2469
        %v3062 = vpack.c.b16 %v2478, %v2470
        %v3063 = vpack.c.b16 %v2479, %v2471
        %v3064 = vpack.c.b16 %v2480, %v2472
        %v3065 = vpack.c.b16 %v2489, %v2481
        %v3066 = vpack.c.b16 %v2490, %v2482
        %v3067 = vpack.c.b16 %v2491, %v2483
        %v3068 = vpack.c.b16 %v2492, %v2484
        %v3069 = vpack.c.b16 %v2493, %v2485
        %v3070 = vpack.c.b16 %v2494, %v2486
        %v3071 = vpack.c.b16 %v2495, %v2487
        %v3072 = vpack.c.b16 %v2496, %v2488
        %v3073 = vpack.c.b16 %v2505, %v2497
        %v3074 = vpack.c.b16 %v2506, %v2498
        %v3075 = vpack.c.b16 %v2507, %v2499
        %v3076 = vpack.c.b16 %v2508, %v2500
        %v3077 = vpack.c.b16 %v2509, %v2501
        %v3078 = vpack.c.b16 %v2510, %v2502
        %v3079 = vpack.c.b16 %v2511, %v2503
        %v3080 = vpack.c.b16 %v2512, %v2504
        %v3081 = vpack.c.b16 %v2521, %v2513
        %v3082 = vpack.c.b16 %v2522, %v2514
        %v3083 = vpack.c.b16 %v2523, %v2515
        %v3084 = vpack.c.b16 %v2524, %v2516
        %v3085 = vpack.c.b16 %v2525, %v2517
        %v3086 = vpack.c.b16 %v2526, %v2518
        %v3087 = vpack.c.b16 %v2527, %v2519
        %v3088 = vpack.c.b16 %v2528, %v2520
        %v3089 = vpack.c.b16 %v2537, %v2529
        %v3090 = vpack.c.b16 %v2538, %v2530
        %v3091 = vpack.c.b16 %v2539, %v2531
        %v3092 = vpack.c.b16 %v2540, %v2532
        %v3093 = vpack.c.b16 %v2541, %v2533
        %v3094 = vpack.c.b16 %v2542, %v2534
        %v3095 = vpack.c.b16 %v2543, %v2535
        %v3096 = vpack.c.b16 %v2544, %v2536
        %v3097 = vpack.c.b16 %v2553, %v2545
        %v3098 = vpack.c.b16 %v2554, %v2546
        %v3099 = vpack.c.b16 %v2555, %v2547
        %v3100 = vpack.c.b16 %v2556, %v2548
        %v3101 = vpack.c.b16 %v2557, %v2549
        %v3102 = vpack.c.b16 %v2558, %v2550
        %v3103 = vpack.c.b16 %v2559, %v2551
        %v3104 = vpack.c.b16 %v2560, %v2552
        %v3105 = vpack.c.b16 %v2569, %v2561
        %v3106 = vpack.c.b16 %v2570, %v2562
        %v3107 = vpack.c.b16 %v2571, %v2563
        %v3108 = vpack.c.b16 %v2572, %v2564
        %v3109 = vpack.c.b16 %v2573, %v2565
        %v3110 = vpack.c.b16 %v2574, %v2566
        %v3111 = vpack.c.b16 %v2575, %v2567
        %v3112 = vpack.c.b16 %v2576, %v2568
        %v3113 = vpack.c.b16 %v2585, %v2577
        %v3114 = vpack.c.b16 %v2586, %v2578
        %v3115 = vpack.c.b16 %v2587, %v2579
        %v3116 = vpack.c.b16 %v2588, %v2580
        %v3117 = vpack.c.b16 %v2589, %v2581
        %v3118 = vpack.c.b16 %v2590, %v2582
        %v3119 = vpack.c.b16 %v2591, %v2583
        %v3120 = vpack.c.b16 %v2592, %v2584
        %v3121 = vpack.c.b16 %v2601, %v2593
        %v3122 = vpack.c.b16 %v2602, %v2594
        %v3123 = vpack.c.b16 %v2603, %v2595
        %v3124 = vpack.c.b16 %v2604, %v2596
        %v3125 = vpack.c.b16 %v2605, %v2597
        %v3126 = vpack.c.b16 %v2606, %v2598
        %v3127 = vpack.c.b16 %v2607, %v2599
        %v3128 = vpack.c.b16 %v2608, %v2600
        %v3129 = vpack.c.b16 %v2617, %v2609
        %v3130 = vpack.c.b16 %v2618, %v2610
        %v3131 = vpack.c.b16 %v2619, %v2611
        %v3132 = vpack.c.b16 %v2620, %v2612
        %v3133 = vpack.c.b16 %v2621, %v2613
        %v3134 = vpack.c.b16 %v2622, %v2614
        %v3135 = vpack.c.b16 %v2623, %v2615
        %v3136 = vpack.c.b16 %v2624, %v2616
        %3649 = vmatpush.bf16.msra.mxu0 %v2681
        %3650 = vmatpush.bf16.msra.mxu0 %v2673
        %3651 = vmatpush.bf16.msra.mxu0 %v2665
        %3652 = vmatpush.bf16.msra.mxu0 %v2657
        %3653 = vmatpush.bf16.msra.mxu0 %v2649
        %3654 = vmatpush.bf16.msra.mxu0 %v2641
        %3655 = vmatpush.bf16.msra.mxu0 %v2633
        %3656 = vmatpush.bf16.msra.mxu0 %v2625
        %3657 = vmatmul.bf16.gmra.mxu0 %v1073
        %v3658 = vpop.f32.mrf.mxu0
        %v3659 = vadd.f32 0.0, %v3658
        %v3660 = vpop.f32.mrf.mxu0
        %v3661 = vadd.f32 0.0, %v3660
        %3662 = vdwg.mxu0
        %3663 = vmatpush.bf16.msra.mxu0 %v2745
        %3664 = vmatpush.bf16.msra.mxu0 %v2737
        %3665 = vmatpush.bf16.msra.mxu0 %v2729
        %3666 = vmatpush.bf16.msra.mxu0 %v2721
        %3667 = vmatpush.bf16.msra.mxu0 %v2713
        %3668 = vmatpush.bf16.msra.mxu0 %v2705
        %3669 = vmatpush.bf16.msra.mxu0 %v2697
        %3670 = vmatpush.bf16.msra.mxu0 %v2689
        %3671 = vmatmul.bf16.gmra.mxu0 %v1074
        %v3672 = vpop.f32.mrf.mxu0
        %v3673 = vadd.f32 %v3659, %v3672
        %v3674 = vpop.f32.mrf.mxu0
        %v3675 = vadd.f32 %v3661, %v3674
        %3676 = vdwg.mxu0
        %3677 = vmatpush.bf16.msra.mxu0 %v2809
        %3678 = vmatpush.bf16.msra.mxu0 %v2801
        %3679 = vmatpush.bf16.msra.mxu0 %v2793
        %3680 = vmatpush.bf16.msra.mxu0 %v2785
        %3681 = vmatpush.bf16.msra.mxu0 %v2777
        %3682 = vmatpush.bf16.msra.mxu0 %v2769
        %3683 = vmatpush.bf16.msra.mxu0 %v2761
        %3684 = vmatpush.bf16.msra.mxu0 %v2753
        %3685 = vmatmul.bf16.gmra.mxu0 %v1075
        %v3686 = vpop.f32.mrf.mxu0
        %v3687 = vadd.f32 %v3673, %v3686
        %v3688 = vpop.f32.mrf.mxu0
        %v3689 = vadd.f32 %v3675, %v3688
        %3690 = vdwg.mxu0
        %3691 = vmatpush.bf16.msra.mxu0 %v2873
        %3692 = vmatpush.bf16.msra.mxu0 %v2865
        %3693 = vmatpush.bf16.msra.mxu0 %v2857
        %3694 = vmatpush.bf16.msra.mxu0 %v2849
        %3695 = vmatpush.bf16.msra.mxu0 %v2841
        %3696 = vmatpush.bf16.msra.mxu0 %v2833
        %3697 = vmatpush.bf16.msra.mxu0 %v2825
        %3698 = vmatpush.bf16.msra.mxu0 %v2817
        %3699 = vmatmul.bf16.gmra.mxu0 %v1076
        %v3700 = vpop.f32.mrf.mxu0
        %v3701 = vadd.f32 %v3687, %v3700
        %v3702 = vpop.f32.mrf.mxu0
        %v3703 = vadd.f32 %v3689, %v3702
        %3704 = vdwg.mxu0
        %3705 = vmatpush.bf16.msra.mxu0 %v2937
        %3706 = vmatpush.bf16.msra.mxu0 %v2929
        %3707 = vmatpush.bf16.msra.mxu0 %v2921
        %3708 = vmatpush.bf16.msra.mxu0 %v2913
        %3709 = vmatpush.bf16.msra.mxu0 %v2905
        %3710 = vmatpush.bf16.msra.mxu0 %v2897
        %3711 = vmatpush.bf16.msra.mxu0 %v2889
        %3712 = vmatpush.bf16.msra.mxu0 %v2881
        %3713 = vmatmul.bf16.gmra.mxu0 %v1077
        %v3714 = vpop.f32.mrf.mxu0
        %v3715 = vadd.f32 %v3701, %v3714
        %v3716 = vpop.f32.mrf.mxu0
        %v3717 = vadd.f32 %v3703, %v3716
        %3718 = vdwg.mxu0
        %3719 = vmatpush.bf16.msra.mxu0 %v3001
        %3720 = vmatpush.bf16.msra.mxu0 %v2993
        %3721 = vmatpush.bf16.msra.mxu0 %v2985
        %3722 = vmatpush.bf16.msra.mxu0 %v2977
        %3723 = vmatpush.bf16.msra.mxu0 %v2969
        %3724 = vmatpush.bf16.msra.mxu0 %v2961
        %3725 = vmatpush.bf16.msra.mxu0 %v2953
        %3726 = vmatpush.bf16.msra.mxu0 %v2945
        %3727 = vmatmul.bf16.gmra.mxu0 %v1078
        %v3728 = vpop.f32.mrf.mxu0
        %v3729 = vadd.f32 %v3715, %v3728
        %v3730 = vpop.f32.mrf.mxu0
        %v3731 = vadd.f32 %v3717, %v3730
        %3732 = vdwg.mxu0
        %3733 = vmatpush.bf16.msra.mxu0 %v3065
        %3734 = vmatpush.bf16.msra.mxu0 %v3057
        %3735 = vmatpush.bf16.msra.mxu0 %v3049
        %3736 = vmatpush.bf16.msra.mxu0 %v3041
        %3737 = vmatpush.bf16.msra.mxu0 %v3033
        %3738 = vmatpush.bf16.msra.mxu0 %v3025
        %3739 = vmatpush.bf16.msra.mxu0 %v3017
        %3740 = vmatpush.bf16.msra.mxu0 %v3009
        %3741 = vmatmul.bf16.gmra.mxu0 %v1079
        %v3742 = vpop.f32.mrf.mxu0
        %v3743 = vadd.f32 %v3729, %v3742
        %v3744 = vpop.f32.mrf.mxu0
        %v3745 = vadd.f32 %v3731, %v3744
        %3746 = vdwg.mxu0
        %3747 = vmatpush.bf16.msra.mxu0 %v3129
        %3748 = vmatpush.bf16.msra.mxu0 %v3121
        %3749 = vmatpush.bf16.msra.mxu0 %v3113
        %3750 = vmatpush.bf16.msra.mxu0 %v3105
        %3751 = vmatpush.bf16.msra.mxu0 %v3097
        %3752 = vmatpush.bf16.msra.mxu0 %v3089
        %3753 = vmatpush.bf16.msra.mxu0 %v3081
        %3754 = vmatpush.bf16.msra.mxu0 %v3073
        %3755 = vmatmul.bf16.gmra.mxu0 %v1080
        %v3756 = vpop.f32.mrf.mxu0
        %v3757 = vadd.f32 %v3743, %v3756
        %v3758 = vpop.f32.mrf.mxu0
        %v3759 = vadd.f32 %v3745, %v3758
        %3760 = vdwg.mxu0
        %3761 = vmatpush.bf16.msra.mxu0 %v2682
        %3762 = vmatpush.bf16.msra.mxu0 %v2674
        %3763 = vmatpush.bf16.msra.mxu0 %v2666
        %3764 = vmatpush.bf16.msra.mxu0 %v2658
        %3765 = vmatpush.bf16.msra.mxu0 %v2650
        %3766 = vmatpush.bf16.msra.mxu0 %v2642
        %3767 = vmatpush.bf16.msra.mxu0 %v2634
        %3768 = vmatpush.bf16.msra.mxu0 %v2626
        %3769 = vmatmul.bf16.gmra.mxu0 %v1073
        %v3770 = vpop.f32.mrf.mxu0
        %v3771 = vadd.f32 0.0, %v3770
        %v3772 = vpop.f32.mrf.mxu0
        %v3773 = vadd.f32 0.0, %v3772
        %3774 = vdwg.mxu0
        %3775 = vmatpush.bf16.msra.mxu0 %v2746
        %3776 = vmatpush.bf16.msra.mxu0 %v2738
        %3777 = vmatpush.bf16.msra.mxu0 %v2730
        %3778 = vmatpush.bf16.msra.mxu0 %v2722
        %3779 = vmatpush.bf16.msra.mxu0 %v2714
        %3780 = vmatpush.bf16.msra.mxu0 %v2706
        %3781 = vmatpush.bf16.msra.mxu0 %v2698
        %3782 = vmatpush.bf16.msra.mxu0 %v2690
        %3783 = vmatmul.bf16.gmra.mxu0 %v1074
        %v3784 = vpop.f32.mrf.mxu0
        %v3785 = vadd.f32 %v3771, %v3784
        %v3786 = vpop.f32.mrf.mxu0
        %v3787 = vadd.f32 %v3773, %v3786
        %3788 = vdwg.mxu0
        %3789 = vmatpush.bf16.msra.mxu0 %v2810
        %3790 = vmatpush.bf16.msra.mxu0 %v2802
        %3791 = vmatpush.bf16.msra.mxu0 %v2794
        %3792 = vmatpush.bf16.msra.mxu0 %v2786
        %3793 = vmatpush.bf16.msra.mxu0 %v2778
        %3794 = vmatpush.bf16.msra.mxu0 %v2770
        %3795 = vmatpush.bf16.msra.mxu0 %v2762
        %3796 = vmatpush.bf16.msra.mxu0 %v2754
        %3797 = vmatmul.bf16.gmra.mxu0 %v1075
        %v3798 = vpop.f32.mrf.mxu0
        %v3799 = vadd.f32 %v3785, %v3798
        %v3800 = vpop.f32.mrf.mxu0
        %v3801 = vadd.f32 %v3787, %v3800
        %3802 = vdwg.mxu0
        %3803 = vmatpush.bf16.msra.mxu0 %v2874
        %3804 = vmatpush.bf16.msra.mxu0 %v2866
        %3805 = vmatpush.bf16.msra.mxu0 %v2858
        %3806 = vmatpush.bf16.msra.mxu0 %v2850
        %3807 = vmatpush.bf16.msra.mxu0 %v2842
        %3808 = vmatpush.bf16.msra.mxu0 %v2834
        %3809 = vmatpush.bf16.msra.mxu0 %v2826
        %3810 = vmatpush.bf16.msra.mxu0 %v2818
        %3811 = vmatmul.bf16.gmra.mxu0 %v1076
        %v3812 = vpop.f32.mrf.mxu0
        %v3813 = vadd.f32 %v3799, %v3812
        %v3814 = vpop.f32.mrf.mxu0
        %v3815 = vadd.f32 %v3801, %v3814
        %3816 = vdwg.mxu0
        %3817 = vmatpush.bf16.msra.mxu0 %v2938
        %3818 = vmatpush.bf16.msra.mxu0 %v2930
        %3819 = vmatpush.bf16.msra.mxu0 %v2922
        %3820 = vmatpush.bf16.msra.mxu0 %v2914
        %3821 = vmatpush.bf16.msra.mxu0 %v2906
        %3822 = vmatpush.bf16.msra.mxu0 %v2898
        %3823 = vmatpush.bf16.msra.mxu0 %v2890
        %3824 = vmatpush.bf16.msra.mxu0 %v2882
        %3825 = vmatmul.bf16.gmra.mxu0 %v1077
        %v3826 = vpop.f32.mrf.mxu0
        %v3827 = vadd.f32 %v3813, %v3826
        %v3828 = vpop.f32.mrf.mxu0
        %v3829 = vadd.f32 %v3815, %v3828
        %3830 = vdwg.mxu0
        %3831 = vmatpush.bf16.msra.mxu0 %v3002
        %3832 = vmatpush.bf16.msra.mxu0 %v2994
        %3833 = vmatpush.bf16.msra.mxu0 %v2986
        %3834 = vmatpush.bf16.msra.mxu0 %v2978
        %3835 = vmatpush.bf16.msra.mxu0 %v2970
        %3836 = vmatpush.bf16.msra.mxu0 %v2962
        %3837 = vmatpush.bf16.msra.mxu0 %v2954
        %3838 = vmatpush.bf16.msra.mxu0 %v2946
        %3839 = vmatmul.bf16.gmra.mxu0 %v1078
        %v3840 = vpop.f32.mrf.mxu0
        %v3841 = vadd.f32 %v3827, %v3840
        %v3842 = vpop.f32.mrf.mxu0
        %v3843 = vadd.f32 %v3829, %v3842
        %3844 = vdwg.mxu0
        %3845 = vmatpush.bf16.msra.mxu0 %v3066
        %3846 = vmatpush.bf16.msra.mxu0 %v3058
        %3847 = vmatpush.bf16.msra.mxu0 %v3050
        %3848 = vmatpush.bf16.msra.mxu0 %v3042
        %3849 = vmatpush.bf16.msra.mxu0 %v3034
        %3850 = vmatpush.bf16.msra.mxu0 %v3026
        %3851 = vmatpush.bf16.msra.mxu0 %v3018
        %3852 = vmatpush.bf16.msra.mxu0 %v3010
        %3853 = vmatmul.bf16.gmra.mxu0 %v1079
        %v3854 = vpop.f32.mrf.mxu0
        %v3855 = vadd.f32 %v3841, %v3854
        %v3856 = vpop.f32.mrf.mxu0
        %v3857 = vadd.f32 %v3843, %v3856
        %3858 = vdwg.mxu0
        %3859 = vmatpush.bf16.msra.mxu0 %v3130
        %3860 = vmatpush.bf16.msra.mxu0 %v3122
        %3861 = vmatpush.bf16.msra.mxu0 %v3114
        %3862 = vmatpush.bf16.msra.mxu0 %v3106
        %3863 = vmatpush.bf16.msra.mxu0 %v3098
        %3864 = vmatpush.bf16.msra.mxu0 %v3090
        %3865 = vmatpush.bf16.msra.mxu0 %v3082
        %3866 = vmatpush.bf16.msra.mxu0 %v3074
        %3867 = vmatmul.bf16.gmra.mxu0 %v1080
        %v3868 = vpop.f32.mrf.mxu0
        %v3869 = vadd.f32 %v3855, %v3868
        %v3870 = vpop.f32.mrf.mxu0
        %v3871 = vadd.f32 %v3857, %v3870
        %3872 = vdwg.mxu0
        %3873 = vmatpush.bf16.msra.mxu0 %v2683
        %3874 = vmatpush.bf16.msra.mxu0 %v2675
        %3875 = vmatpush.bf16.msra.mxu0 %v2667
        %3876 = vmatpush.bf16.msra.mxu0 %v2659
        %3877 = vmatpush.bf16.msra.mxu0 %v2651
        %3878 = vmatpush.bf16.msra.mxu0 %v2643
        %3879 = vmatpush.bf16.msra.mxu0 %v2635
        %3880 = vmatpush.bf16.msra.mxu0 %v2627
        %3881 = vmatmul.bf16.gmra.mxu0 %v1073
        %v3882 = vpop.f32.mrf.mxu0
        %v3883 = vadd.f32 0.0, %v3882
        %v3884 = vpop.f32.mrf.mxu0
        %v3885 = vadd.f32 0.0, %v3884
        %3886 = vdwg.mxu0
        %3887 = vmatpush.bf16.msra.mxu0 %v2747
        %3888 = vmatpush.bf16.msra.mxu0 %v2739
        %3889 = vmatpush.bf16.msra.mxu0 %v2731
        %3890 = vmatpush.bf16.msra.mxu0 %v2723
        %3891 = vmatpush.bf16.msra.mxu0 %v2715
        %3892 = vmatpush.bf16.msra.mxu0 %v2707
        %3893 = vmatpush.bf16.msra.mxu0 %v2699
        %3894 = vmatpush.bf16.msra.mxu0 %v2691
        %3895 = vmatmul.bf16.gmra.mxu0 %v1074
        %v3896 = vpop.f32.mrf.mxu0
        %v3897 = vadd.f32 %v3883, %v3896
        %v3898 = vpop.f32.mrf.mxu0
        %v3899 = vadd.f32 %v3885, %v3898
        %3900 = vdwg.mxu0
        %3901 = vmatpush.bf16.msra.mxu0 %v2811
        %3902 = vmatpush.bf16.msra.mxu0 %v2803
        %3903 = vmatpush.bf16.msra.mxu0 %v2795
        %3904 = vmatpush.bf16.msra.mxu0 %v2787
        %3905 = vmatpush.bf16.msra.mxu0 %v2779
        %3906 = vmatpush.bf16.msra.mxu0 %v2771
        %3907 = vmatpush.bf16.msra.mxu0 %v2763
        %3908 = vmatpush.bf16.msra.mxu0 %v2755
        %3909 = vmatmul.bf16.gmra.mxu0 %v1075
        %v3910 = vpop.f32.mrf.mxu0
        %v3911 = vadd.f32 %v3897, %v3910
        %v3912 = vpop.f32.mrf.mxu0
        %v3913 = vadd.f32 %v3899, %v3912
        %3914 = vdwg.mxu0
        %3915 = vmatpush.bf16.msra.mxu0 %v2875
        %3916 = vmatpush.bf16.msra.mxu0 %v2867
        %3917 = vmatpush.bf16.msra.mxu0 %v2859
        %3918 = vmatpush.bf16.msra.mxu0 %v2851
        %3919 = vmatpush.bf16.msra.mxu0 %v2843
        %3920 = vmatpush.bf16.msra.mxu0 %v2835
        %3921 = vmatpush.bf16.msra.mxu0 %v2827
        %3922 = vmatpush.bf16.msra.mxu0 %v2819
        %3923 = vmatmul.bf16.gmra.mxu0 %v1076
        %v3924 = vpop.f32.mrf.mxu0
        %v3925 = vadd.f32 %v3911, %v3924
        %v3926 = vpop.f32.mrf.mxu0
        %v3927 = vadd.f32 %v3913, %v3926
        %3928 = vdwg.mxu0
        %3929 = vmatpush.bf16.msra.mxu0 %v2939
        %3930 = vmatpush.bf16.msra.mxu0 %v2931
        %3931 = vmatpush.bf16.msra.mxu0 %v2923
        %3932 = vmatpush.bf16.msra.mxu0 %v2915
        %3933 = vmatpush.bf16.msra.mxu0 %v2907
        %3934 = vmatpush.bf16.msra.mxu0 %v2899
        %3935 = vmatpush.bf16.msra.mxu0 %v2891
        %3936 = vmatpush.bf16.msra.mxu0 %v2883
        %3937 = vmatmul.bf16.gmra.mxu0 %v1077
        %v3938 = vpop.f32.mrf.mxu0
        %v3939 = vadd.f32 %v3925, %v3938
        %v3940 = vpop.f32.mrf.mxu0
        %v3941 = vadd.f32 %v3927, %v3940
        %3942 = vdwg.mxu0
        %3943 = vmatpush.bf16.msra.mxu0 %v3003
        %3944 = vmatpush.bf16.msra.mxu0 %v2995
        %3945 = vmatpush.bf16.msra.mxu0 %v2987
        %3946 = vmatpush.bf16.msra.mxu0 %v2979
        %3947 = vmatpush.bf16.msra.mxu0 %v2971
        %3948 = vmatpush.bf16.msra.mxu0 %v2963
        %3949 = vmatpush.bf16.msra.mxu0 %v2955
        %3950 = vmatpush.bf16.msra.mxu0 %v2947
        %3951 = vmatmul.bf16.gmra.mxu0 %v1078
        %v3952 = vpop.f32.mrf.mxu0
        %v3953 = vadd.f32 %v3939, %v3952
        %v3954 = vpop.f32.mrf.mxu0
        %v3955 = vadd.f32 %v3941, %v3954
        %3956 = vdwg.mxu0
        %3957 = vmatpush.bf16.msra.mxu0 %v3067
        %3958 = vmatpush.bf16.msra.mxu0 %v3059
        %3959 = vmatpush.bf16.msra.mxu0 %v3051
        %3960 = vmatpush.bf16.msra.mxu0 %v3043
        %3961 = vmatpush.bf16.msra.mxu0 %v3035
        %3962 = vmatpush.bf16.msra.mxu0 %v3027
        %3963 = vmatpush.bf16.msra.mxu0 %v3019
        %3964 = vmatpush.bf16.msra.mxu0 %v3011
        %3965 = vmatmul.bf16.gmra.mxu0 %v1079
        %v3966 = vpop.f32.mrf.mxu0
        %v3967 = vadd.f32 %v3953, %v3966
        %v3968 = vpop.f32.mrf.mxu0
        %v3969 = vadd.f32 %v3955, %v3968
        %3970 = vdwg.mxu0
        %3971 = vmatpush.bf16.msra.mxu0 %v3131
        %3972 = vmatpush.bf16.msra.mxu0 %v3123
        %3973 = vmatpush.bf16.msra.mxu0 %v3115
        %3974 = vmatpush.bf16.msra.mxu0 %v3107
        %3975 = vmatpush.bf16.msra.mxu0 %v3099
        %3976 = vmatpush.bf16.msra.mxu0 %v3091
        %3977 = vmatpush.bf16.msra.mxu0 %v3083
        %3978 = vmatpush.bf16.msra.mxu0 %v3075
        %3979 = vmatmul.bf16.gmra.mxu0 %v1080
        %v3980 = vpop.f32.mrf.mxu0
        %v3981 = vadd.f32 %v3967, %v3980
        %v3982 = vpop.f32.mrf.mxu0
        %v3983 = vadd.f32 %v3969, %v3982
        %3984 = vdwg.mxu0
        %3985 = vmatpush.bf16.msra.mxu0 %v2684
        %3986 = vmatpush.bf16.msra.mxu0 %v2676
        %3987 = vmatpush.bf16.msra.mxu0 %v2668
        %3988 = vmatpush.bf16.msra.mxu0 %v2660
        %3989 = vmatpush.bf16.msra.mxu0 %v2652
        %3990 = vmatpush.bf16.msra.mxu0 %v2644
        %3991 = vmatpush.bf16.msra.mxu0 %v2636
        %3992 = vmatpush.bf16.msra.mxu0 %v2628
        %3993 = vmatmul.bf16.gmra.mxu0 %v1073
        %v3994 = vpop.f32.mrf.mxu0
        %v3995 = vadd.f32 0.0, %v3994
        %v3996 = vpop.f32.mrf.mxu0
        %v3997 = vadd.f32 0.0, %v3996
        %3998 = vdwg.mxu0
        %3999 = vmatpush.bf16.msra.mxu0 %v2748
        %4000 = vmatpush.bf16.msra.mxu0 %v2740
        %4001 = vmatpush.bf16.msra.mxu0 %v2732
        %4002 = vmatpush.bf16.msra.mxu0 %v2724
        %4003 = vmatpush.bf16.msra.mxu0 %v2716
        %4004 = vmatpush.bf16.msra.mxu0 %v2708
        %4005 = vmatpush.bf16.msra.mxu0 %v2700
        %4006 = vmatpush.bf16.msra.mxu0 %v2692
        %4007 = vmatmul.bf16.gmra.mxu0 %v1074
        %v4008 = vpop.f32.mrf.mxu0
        %v4009 = vadd.f32 %v3995, %v4008
        %v4010 = vpop.f32.mrf.mxu0
        %v4011 = vadd.f32 %v3997, %v4010
        %4012 = vdwg.mxu0
        %4013 = vmatpush.bf16.msra.mxu0 %v2812
        %4014 = vmatpush.bf16.msra.mxu0 %v2804
        %4015 = vmatpush.bf16.msra.mxu0 %v2796
        %4016 = vmatpush.bf16.msra.mxu0 %v2788
        %4017 = vmatpush.bf16.msra.mxu0 %v2780
        %4018 = vmatpush.bf16.msra.mxu0 %v2772
        %4019 = vmatpush.bf16.msra.mxu0 %v2764
        %4020 = vmatpush.bf16.msra.mxu0 %v2756
        %4021 = vmatmul.bf16.gmra.mxu0 %v1075
        %v4022 = vpop.f32.mrf.mxu0
        %v4023 = vadd.f32 %v4009, %v4022
        %v4024 = vpop.f32.mrf.mxu0
        %v4025 = vadd.f32 %v4011, %v4024
        %4026 = vdwg.mxu0
        %4027 = vmatpush.bf16.msra.mxu0 %v2876
        %4028 = vmatpush.bf16.msra.mxu0 %v2868
        %4029 = vmatpush.bf16.msra.mxu0 %v2860
        %4030 = vmatpush.bf16.msra.mxu0 %v2852
        %4031 = vmatpush.bf16.msra.mxu0 %v2844
        %4032 = vmatpush.bf16.msra.mxu0 %v2836
        %4033 = vmatpush.bf16.msra.mxu0 %v2828
        %4034 = vmatpush.bf16.msra.mxu0 %v2820
        %4035 = vmatmul.bf16.gmra.mxu0 %v1076
        %v4036 = vpop.f32.mrf.mxu0
        %v4037 = vadd.f32 %v4023, %v4036
        %v4038 = vpop.f32.mrf.mxu0
        %v4039 = vadd.f32 %v4025, %v4038
        %4040 = vdwg.mxu0
        %4041 = vmatpush.bf16.msra.mxu0 %v2940
        %4042 = vmatpush.bf16.msra.mxu0 %v2932
        %4043 = vmatpush.bf16.msra.mxu0 %v2924
        %4044 = vmatpush.bf16.msra.mxu0 %v2916
        %4045 = vmatpush.bf16.msra.mxu0 %v2908
        %4046 = vmatpush.bf16.msra.mxu0 %v2900
        %4047 = vmatpush.bf16.msra.mxu0 %v2892
        %4048 = vmatpush.bf16.msra.mxu0 %v2884
        %4049 = vmatmul.bf16.gmra.mxu0 %v1077
        %v4050 = vpop.f32.mrf.mxu0
        %v4051 = vadd.f32 %v4037, %v4050
        %v4052 = vpop.f32.mrf.mxu0
        %v4053 = vadd.f32 %v4039, %v4052
        %4054 = vdwg.mxu0
        %4055 = vmatpush.bf16.msra.mxu0 %v3004
        %4056 = vmatpush.bf16.msra.mxu0 %v2996
        %4057 = vmatpush.bf16.msra.mxu0 %v2988
        %4058 = vmatpush.bf16.msra.mxu0 %v2980
        %4059 = vmatpush.bf16.msra.mxu0 %v2972
        %4060 = vmatpush.bf16.msra.mxu0 %v2964
        %4061 = vmatpush.bf16.msra.mxu0 %v2956
        %4062 = vmatpush.bf16.msra.mxu0 %v2948
        %4063 = vmatmul.bf16.gmra.mxu0 %v1078
        %v4064 = vpop.f32.mrf.mxu0
        %v4065 = vadd.f32 %v4051, %v4064
        %v4066 = vpop.f32.mrf.mxu0
        %v4067 = vadd.f32 %v4053, %v4066
        %4068 = vdwg.mxu0
        %4069 = vmatpush.bf16.msra.mxu0 %v3068
        %4070 = vmatpush.bf16.msra.mxu0 %v3060
        %4071 = vmatpush.bf16.msra.mxu0 %v3052
        %4072 = vmatpush.bf16.msra.mxu0 %v3044
        %4073 = vmatpush.bf16.msra.mxu0 %v3036
        %4074 = vmatpush.bf16.msra.mxu0 %v3028
        %4075 = vmatpush.bf16.msra.mxu0 %v3020
        %4076 = vmatpush.bf16.msra.mxu0 %v3012
        %4077 = vmatmul.bf16.gmra.mxu0 %v1079
        %v4078 = vpop.f32.mrf.mxu0
        %v4079 = vadd.f32 %v4065, %v4078
        %v4080 = vpop.f32.mrf.mxu0
        %v4081 = vadd.f32 %v4067, %v4080
        %4082 = vdwg.mxu0
        %4083 = vmatpush.bf16.msra.mxu0 %v3132
        %4084 = vmatpush.bf16.msra.mxu0 %v3124
        %4085 = vmatpush.bf16.msra.mxu0 %v3116
        %4086 = vmatpush.bf16.msra.mxu0 %v3108
        %4087 = vmatpush.bf16.msra.mxu0 %v3100
        %4088 = vmatpush.bf16.msra.mxu0 %v3092
        %4089 = vmatpush.bf16.msra.mxu0 %v3084
        %4090 = vmatpush.bf16.msra.mxu0 %v3076
        %4091 = vmatmul.bf16.gmra.mxu0 %v1080
        %v4092 = vpop.f32.mrf.mxu0
        %v4093 = vadd.f32 %v4079, %v4092
        %v4094 = vpop.f32.mrf.mxu0
        %v4095 = vadd.f32 %v4081, %v4094
        %4096 = vdwg.mxu0
        %4097 = vmatpush.bf16.msra.mxu0 %v2685
        %4098 = vmatpush.bf16.msra.mxu0 %v2677
        %4099 = vmatpush.bf16.msra.mxu0 %v2669
        %4100 = vmatpush.bf16.msra.mxu0 %v2661
        %4101 = vmatpush.bf16.msra.mxu0 %v2653
        %4102 = vmatpush.bf16.msra.mxu0 %v2645
        %4103 = vmatpush.bf16.msra.mxu0 %v2637
        %4104 = vmatpush.bf16.msra.mxu0 %v2629
        %4105 = vmatmul.bf16.gmra.mxu0 %v1073
        %v4106 = vpop.f32.mrf.mxu0
        %v4107 = vadd.f32 0.0, %v4106
        %v4108 = vpop.f32.mrf.mxu0
        %v4109 = vadd.f32 0.0, %v4108
        %4110 = vdwg.mxu0
        %4111 = vmatpush.bf16.msra.mxu0 %v2749
        %4112 = vmatpush.bf16.msra.mxu0 %v2741
        %4113 = vmatpush.bf16.msra.mxu0 %v2733
        %4114 = vmatpush.bf16.msra.mxu0 %v2725
        %4115 = vmatpush.bf16.msra.mxu0 %v2717
        %4116 = vmatpush.bf16.msra.mxu0 %v2709
        %4117 = vmatpush.bf16.msra.mxu0 %v2701
        %4118 = vmatpush.bf16.msra.mxu0 %v2693
        %4119 = vmatmul.bf16.gmra.mxu0 %v1074
        %v4120 = vpop.f32.mrf.mxu0
        %v4121 = vadd.f32 %v4107, %v4120
        %v4122 = vpop.f32.mrf.mxu0
        %v4123 = vadd.f32 %v4109, %v4122
        %4124 = vdwg.mxu0
        %4125 = vmatpush.bf16.msra.mxu0 %v2813
        %4126 = vmatpush.bf16.msra.mxu0 %v2805
        %4127 = vmatpush.bf16.msra.mxu0 %v2797
        %4128 = vmatpush.bf16.msra.mxu0 %v2789
        %4129 = vmatpush.bf16.msra.mxu0 %v2781
        %4130 = vmatpush.bf16.msra.mxu0 %v2773
        %4131 = vmatpush.bf16.msra.mxu0 %v2765
        %4132 = vmatpush.bf16.msra.mxu0 %v2757
        %4133 = vmatmul.bf16.gmra.mxu0 %v1075
        %v4134 = vpop.f32.mrf.mxu0
        %v4135 = vadd.f32 %v4121, %v4134
        %v4136 = vpop.f32.mrf.mxu0
        %v4137 = vadd.f32 %v4123, %v4136
        %4138 = vdwg.mxu0
        %4139 = vmatpush.bf16.msra.mxu0 %v2877
        %4140 = vmatpush.bf16.msra.mxu0 %v2869
        %4141 = vmatpush.bf16.msra.mxu0 %v2861
        %4142 = vmatpush.bf16.msra.mxu0 %v2853
        %4143 = vmatpush.bf16.msra.mxu0 %v2845
        %4144 = vmatpush.bf16.msra.mxu0 %v2837
        %4145 = vmatpush.bf16.msra.mxu0 %v2829
        %4146 = vmatpush.bf16.msra.mxu0 %v2821
        %4147 = vmatmul.bf16.gmra.mxu0 %v1076
        %v4148 = vpop.f32.mrf.mxu0
        %v4149 = vadd.f32 %v4135, %v4148
        %v4150 = vpop.f32.mrf.mxu0
        %v4151 = vadd.f32 %v4137, %v4150
        %4152 = vdwg.mxu0
        %4153 = vmatpush.bf16.msra.mxu0 %v2941
        %4154 = vmatpush.bf16.msra.mxu0 %v2933
        %4155 = vmatpush.bf16.msra.mxu0 %v2925
        %4156 = vmatpush.bf16.msra.mxu0 %v2917
        %4157 = vmatpush.bf16.msra.mxu0 %v2909
        %4158 = vmatpush.bf16.msra.mxu0 %v2901
        %4159 = vmatpush.bf16.msra.mxu0 %v2893
        %4160 = vmatpush.bf16.msra.mxu0 %v2885
        %4161 = vmatmul.bf16.gmra.mxu0 %v1077
        %v4162 = vpop.f32.mrf.mxu0
        %v4163 = vadd.f32 %v4149, %v4162
        %v4164 = vpop.f32.mrf.mxu0
        %v4165 = vadd.f32 %v4151, %v4164
        %4166 = vdwg.mxu0
        %4167 = vmatpush.bf16.msra.mxu0 %v3005
        %4168 = vmatpush.bf16.msra.mxu0 %v2997
        %4169 = vmatpush.bf16.msra.mxu0 %v2989
        %4170 = vmatpush.bf16.msra.mxu0 %v2981
        %4171 = vmatpush.bf16.msra.mxu0 %v2973
        %4172 = vmatpush.bf16.msra.mxu0 %v2965
        %4173 = vmatpush.bf16.msra.mxu0 %v2957
        %4174 = vmatpush.bf16.msra.mxu0 %v2949
        %4175 = vmatmul.bf16.gmra.mxu0 %v1078
        %v4176 = vpop.f32.mrf.mxu0
        %v4177 = vadd.f32 %v4163, %v4176
        %v4178 = vpop.f32.mrf.mxu0
        %v4179 = vadd.f32 %v4165, %v4178
        %4180 = vdwg.mxu0
        %4181 = vmatpush.bf16.msra.mxu0 %v3069
        %4182 = vmatpush.bf16.msra.mxu0 %v3061
        %4183 = vmatpush.bf16.msra.mxu0 %v3053
        %4184 = vmatpush.bf16.msra.mxu0 %v3045
        %4185 = vmatpush.bf16.msra.mxu0 %v3037
        %4186 = vmatpush.bf16.msra.mxu0 %v3029
        %4187 = vmatpush.bf16.msra.mxu0 %v3021
        %4188 = vmatpush.bf16.msra.mxu0 %v3013
        %4189 = vmatmul.bf16.gmra.mxu0 %v1079
        %v4190 = vpop.f32.mrf.mxu0
        %v4191 = vadd.f32 %v4177, %v4190
        %v4192 = vpop.f32.mrf.mxu0
        %v4193 = vadd.f32 %v4179, %v4192
        %4194 = vdwg.mxu0
        %4195 = vmatpush.bf16.msra.mxu0 %v3133
        %4196 = vmatpush.bf16.msra.mxu0 %v3125
        %4197 = vmatpush.bf16.msra.mxu0 %v3117
        %4198 = vmatpush.bf16.msra.mxu0 %v3109
        %4199 = vmatpush.bf16.msra.mxu0 %v3101
        %4200 = vmatpush.bf16.msra.mxu0 %v3093
        %4201 = vmatpush.bf16.msra.mxu0 %v3085
        %4202 = vmatpush.bf16.msra.mxu0 %v3077
        %4203 = vmatmul.bf16.gmra.mxu0 %v1080
        %v4204 = vpop.f32.mrf.mxu0
        %v4205 = vadd.f32 %v4191, %v4204
        %v4206 = vpop.f32.mrf.mxu0
        %v4207 = vadd.f32 %v4193, %v4206
        %4208 = vdwg.mxu0
        %4209 = vmatpush.bf16.msra.mxu0 %v2686
        %4210 = vmatpush.bf16.msra.mxu0 %v2678
        %4211 = vmatpush.bf16.msra.mxu0 %v2670
        %4212 = vmatpush.bf16.msra.mxu0 %v2662
        %4213 = vmatpush.bf16.msra.mxu0 %v2654
        %4214 = vmatpush.bf16.msra.mxu0 %v2646
        %4215 = vmatpush.bf16.msra.mxu0 %v2638
        %4216 = vmatpush.bf16.msra.mxu0 %v2630
        %4217 = vmatmul.bf16.gmra.mxu0 %v1073
        %v4218 = vpop.f32.mrf.mxu0
        %v4219 = vadd.f32 0.0, %v4218
        %v4220 = vpop.f32.mrf.mxu0
        %v4221 = vadd.f32 0.0, %v4220
        %4222 = vdwg.mxu0
        %4223 = vmatpush.bf16.msra.mxu0 %v2750
        %4224 = vmatpush.bf16.msra.mxu0 %v2742
        %4225 = vmatpush.bf16.msra.mxu0 %v2734
        %4226 = vmatpush.bf16.msra.mxu0 %v2726
        %4227 = vmatpush.bf16.msra.mxu0 %v2718
        %4228 = vmatpush.bf16.msra.mxu0 %v2710
        %4229 = vmatpush.bf16.msra.mxu0 %v2702
        %4230 = vmatpush.bf16.msra.mxu0 %v2694
        %4231 = vmatmul.bf16.gmra.mxu0 %v1074
        %v4232 = vpop.f32.mrf.mxu0
        %v4233 = vadd.f32 %v4219, %v4232
        %v4234 = vpop.f32.mrf.mxu0
        %v4235 = vadd.f32 %v4221, %v4234
        %4236 = vdwg.mxu0
        %4237 = vmatpush.bf16.msra.mxu0 %v2814
        %4238 = vmatpush.bf16.msra.mxu0 %v2806
        %4239 = vmatpush.bf16.msra.mxu0 %v2798
        %4240 = vmatpush.bf16.msra.mxu0 %v2790
        %4241 = vmatpush.bf16.msra.mxu0 %v2782
        %4242 = vmatpush.bf16.msra.mxu0 %v2774
        %4243 = vmatpush.bf16.msra.mxu0 %v2766
        %4244 = vmatpush.bf16.msra.mxu0 %v2758
        %4245 = vmatmul.bf16.gmra.mxu0 %v1075
        %v4246 = vpop.f32.mrf.mxu0
        %v4247 = vadd.f32 %v4233, %v4246
        %v4248 = vpop.f32.mrf.mxu0
        %v4249 = vadd.f32 %v4235, %v4248
        %4250 = vdwg.mxu0
        %4251 = vmatpush.bf16.msra.mxu0 %v2878
        %4252 = vmatpush.bf16.msra.mxu0 %v2870
        %4253 = vmatpush.bf16.msra.mxu0 %v2862
        %4254 = vmatpush.bf16.msra.mxu0 %v2854
        %4255 = vmatpush.bf16.msra.mxu0 %v2846
        %4256 = vmatpush.bf16.msra.mxu0 %v2838
        %4257 = vmatpush.bf16.msra.mxu0 %v2830
        %4258 = vmatpush.bf16.msra.mxu0 %v2822
        %4259 = vmatmul.bf16.gmra.mxu0 %v1076
        %v4260 = vpop.f32.mrf.mxu0
        %v4261 = vadd.f32 %v4247, %v4260
        %v4262 = vpop.f32.mrf.mxu0
        %v4263 = vadd.f32 %v4249, %v4262
        %4264 = vdwg.mxu0
        %4265 = vmatpush.bf16.msra.mxu0 %v2942
        %4266 = vmatpush.bf16.msra.mxu0 %v2934
        %4267 = vmatpush.bf16.msra.mxu0 %v2926
        %4268 = vmatpush.bf16.msra.mxu0 %v2918
        %4269 = vmatpush.bf16.msra.mxu0 %v2910
        %4270 = vmatpush.bf16.msra.mxu0 %v2902
        %4271 = vmatpush.bf16.msra.mxu0 %v2894
        %4272 = vmatpush.bf16.msra.mxu0 %v2886
        %4273 = vmatmul.bf16.gmra.mxu0 %v1077
        %v4274 = vpop.f32.mrf.mxu0
        %v4275 = vadd.f32 %v4261, %v4274
        %v4276 = vpop.f32.mrf.mxu0
        %v4277 = vadd.f32 %v4263, %v4276
        %4278 = vdwg.mxu0
        %4279 = vmatpush.bf16.msra.mxu0 %v3006
        %4280 = vmatpush.bf16.msra.mxu0 %v2998
        %4281 = vmatpush.bf16.msra.mxu0 %v2990
        %4282 = vmatpush.bf16.msra.mxu0 %v2982
        %4283 = vmatpush.bf16.msra.mxu0 %v2974
        %4284 = vmatpush.bf16.msra.mxu0 %v2966
        %4285 = vmatpush.bf16.msra.mxu0 %v2958
        %4286 = vmatpush.bf16.msra.mxu0 %v2950
        %4287 = vmatmul.bf16.gmra.mxu0 %v1078
        %v4288 = vpop.f32.mrf.mxu0
        %v4289 = vadd.f32 %v4275, %v4288
        %v4290 = vpop.f32.mrf.mxu0
        %v4291 = vadd.f32 %v4277, %v4290
        %4292 = vdwg.mxu0
        %4293 = vmatpush.bf16.msra.mxu0 %v3070
        %4294 = vmatpush.bf16.msra.mxu0 %v3062
        %4295 = vmatpush.bf16.msra.mxu0 %v3054
        %4296 = vmatpush.bf16.msra.mxu0 %v3046
        %4297 = vmatpush.bf16.msra.mxu0 %v3038
        %4298 = vmatpush.bf16.msra.mxu0 %v3030
        %4299 = vmatpush.bf16.msra.mxu0 %v3022
        %4300 = vmatpush.bf16.msra.mxu0 %v3014
        %4301 = vmatmul.bf16.gmra.mxu0 %v1079
        %v4302 = vpop.f32.mrf.mxu0
        %v4303 = vadd.f32 %v4289, %v4302
        %v4304 = vpop.f32.mrf.mxu0
        %v4305 = vadd.f32 %v4291, %v4304
        %4306 = vdwg.mxu0
        %4307 = vmatpush.bf16.msra.mxu0 %v3134
        %4308 = vmatpush.bf16.msra.mxu0 %v3126
        %4309 = vmatpush.bf16.msra.mxu0 %v3118
        %4310 = vmatpush.bf16.msra.mxu0 %v3110
        %4311 = vmatpush.bf16.msra.mxu0 %v3102
        %4312 = vmatpush.bf16.msra.mxu0 %v3094
        %4313 = vmatpush.bf16.msra.mxu0 %v3086
        %4314 = vmatpush.bf16.msra.mxu0 %v3078
        %4315 = vmatmul.bf16.gmra.mxu0 %v1080
        %v4316 = vpop.f32.mrf.mxu0
        %v4317 = vadd.f32 %v4303, %v4316
        %v4318 = vpop.f32.mrf.mxu0
        %v4319 = vadd.f32 %v4305, %v4318
        %4320 = vdwg.mxu0
        %4321 = vmatpush.bf16.msra.mxu0 %v2687
        %4322 = vmatpush.bf16.msra.mxu0 %v2679
        %4323 = vmatpush.bf16.msra.mxu0 %v2671
        %4324 = vmatpush.bf16.msra.mxu0 %v2663
        %4325 = vmatpush.bf16.msra.mxu0 %v2655
        %4326 = vmatpush.bf16.msra.mxu0 %v2647
        %4327 = vmatpush.bf16.msra.mxu0 %v2639
        %4328 = vmatpush.bf16.msra.mxu0 %v2631
        %4329 = vmatmul.bf16.gmra.mxu0 %v1073
        %v4330 = vpop.f32.mrf.mxu0
        %v4331 = vadd.f32 0.0, %v4330
        %v4332 = vpop.f32.mrf.mxu0
        %v4333 = vadd.f32 0.0, %v4332
        %4334 = vdwg.mxu0
        %4335 = vmatpush.bf16.msra.mxu0 %v2751
        %4336 = vmatpush.bf16.msra.mxu0 %v2743
        %4337 = vmatpush.bf16.msra.mxu0 %v2735
        %4338 = vmatpush.bf16.msra.mxu0 %v2727
        %4339 = vmatpush.bf16.msra.mxu0 %v2719
        %4340 = vmatpush.bf16.msra.mxu0 %v2711
        %4341 = vmatpush.bf16.msra.mxu0 %v2703
        %4342 = vmatpush.bf16.msra.mxu0 %v2695
        %4343 = vmatmul.bf16.gmra.mxu0 %v1074
        %v4344 = vpop.f32.mrf.mxu0
        %v4345 = vadd.f32 %v4331, %v4344
        %v4346 = vpop.f32.mrf.mxu0
        %v4347 = vadd.f32 %v4333, %v4346
        %4348 = vdwg.mxu0
        %4349 = vmatpush.bf16.msra.mxu0 %v2815
        %4350 = vmatpush.bf16.msra.mxu0 %v2807
        %4351 = vmatpush.bf16.msra.mxu0 %v2799
        %4352 = vmatpush.bf16.msra.mxu0 %v2791
        %4353 = vmatpush.bf16.msra.mxu0 %v2783
        %4354 = vmatpush.bf16.msra.mxu0 %v2775
        %4355 = vmatpush.bf16.msra.mxu0 %v2767
        %4356 = vmatpush.bf16.msra.mxu0 %v2759
        %4357 = vmatmul.bf16.gmra.mxu0 %v1075
        %v4358 = vpop.f32.mrf.mxu0
        %v4359 = vadd.f32 %v4345, %v4358
        %v4360 = vpop.f32.mrf.mxu0
        %v4361 = vadd.f32 %v4347, %v4360
        %4362 = vdwg.mxu0
        %4363 = vmatpush.bf16.msra.mxu0 %v2879
        %4364 = vmatpush.bf16.msra.mxu0 %v2871
        %4365 = vmatpush.bf16.msra.mxu0 %v2863
        %4366 = vmatpush.bf16.msra.mxu0 %v2855
        %4367 = vmatpush.bf16.msra.mxu0 %v2847
        %4368 = vmatpush.bf16.msra.mxu0 %v2839
        %4369 = vmatpush.bf16.msra.mxu0 %v2831
        %4370 = vmatpush.bf16.msra.mxu0 %v2823
        %4371 = vmatmul.bf16.gmra.mxu0 %v1076
        %v4372 = vpop.f32.mrf.mxu0
        %v4373 = vadd.f32 %v4359, %v4372
        %v4374 = vpop.f32.mrf.mxu0
        %v4375 = vadd.f32 %v4361, %v4374
        %4376 = vdwg.mxu0
        %4377 = vmatpush.bf16.msra.mxu0 %v2943
        %4378 = vmatpush.bf16.msra.mxu0 %v2935
        %4379 = vmatpush.bf16.msra.mxu0 %v2927
        %4380 = vmatpush.bf16.msra.mxu0 %v2919
        %4381 = vmatpush.bf16.msra.mxu0 %v2911
        %4382 = vmatpush.bf16.msra.mxu0 %v2903
        %4383 = vmatpush.bf16.msra.mxu0 %v2895
        %4384 = vmatpush.bf16.msra.mxu0 %v2887
        %4385 = vmatmul.bf16.gmra.mxu0 %v1077
        %v4386 = vpop.f32.mrf.mxu0
        %v4387 = vadd.f32 %v4373, %v4386
        %v4388 = vpop.f32.mrf.mxu0
        %v4389 = vadd.f32 %v4375, %v4388
        %4390 = vdwg.mxu0
        %4391 = vmatpush.bf16.msra.mxu0 %v3007
        %4392 = vmatpush.bf16.msra.mxu0 %v2999
        %4393 = vmatpush.bf16.msra.mxu0 %v2991
        %4394 = vmatpush.bf16.msra.mxu0 %v2983
        %4395 = vmatpush.bf16.msra.mxu0 %v2975
        %4396 = vmatpush.bf16.msra.mxu0 %v2967
        %4397 = vmatpush.bf16.msra.mxu0 %v2959
        %4398 = vmatpush.bf16.msra.mxu0 %v2951
        %4399 = vmatmul.bf16.gmra.mxu0 %v1078
        %v4400 = vpop.f32.mrf.mxu0
        %v4401 = vadd.f32 %v4387, %v4400
        %v4402 = vpop.f32.mrf.mxu0
        %v4403 = vadd.f32 %v4389, %v4402
        %4404 = vdwg.mxu0
        %4405 = vmatpush.bf16.msra.mxu0 %v3071
        %4406 = vmatpush.bf16.msra.mxu0 %v3063
        %4407 = vmatpush.bf16.msra.mxu0 %v3055
        %4408 = vmatpush.bf16.msra.mxu0 %v3047
        %4409 = vmatpush.bf16.msra.mxu0 %v3039
        %4410 = vmatpush.bf16.msra.mxu0 %v3031
        %4411 = vmatpush.bf16.msra.mxu0 %v3023
        %4412 = vmatpush.bf16.msra.mxu0 %v3015
        %4413 = vmatmul.bf16.gmra.mxu0 %v1079
        %v4414 = vpop.f32.mrf.mxu0
        %v4415 = vadd.f32 %v4401, %v4414
        %v4416 = vpop.f32.mrf.mxu0
        %v4417 = vadd.f32 %v4403, %v4416
        %4418 = vdwg.mxu0
        %4419 = vmatpush.bf16.msra.mxu0 %v3135
        %4420 = vmatpush.bf16.msra.mxu0 %v3127
        %4421 = vmatpush.bf16.msra.mxu0 %v3119
        %4422 = vmatpush.bf16.msra.mxu0 %v3111
        %4423 = vmatpush.bf16.msra.mxu0 %v3103
        %4424 = vmatpush.bf16.msra.mxu0 %v3095
        %4425 = vmatpush.bf16.msra.mxu0 %v3087
        %4426 = vmatpush.bf16.msra.mxu0 %v3079
        %4427 = vmatmul.bf16.gmra.mxu0 %v1080
        %v4428 = vpop.f32.mrf.mxu0
        %v4429 = vadd.f32 %v4415, %v4428
        %v4430 = vpop.f32.mrf.mxu0
        %v4431 = vadd.f32 %v4417, %v4430
        %4432 = vdwg.mxu0
        %4433 = vmatpush.bf16.msra.mxu0 %v2688
        %4434 = vmatpush.bf16.msra.mxu0 %v2680
        %4435 = vmatpush.bf16.msra.mxu0 %v2672
        %4436 = vmatpush.bf16.msra.mxu0 %v2664
        %4437 = vmatpush.bf16.msra.mxu0 %v2656
        %4438 = vmatpush.bf16.msra.mxu0 %v2648
        %4439 = vmatpush.bf16.msra.mxu0 %v2640
        %4440 = vmatpush.bf16.msra.mxu0 %v2632
        %4441 = vmatmul.bf16.gmra.mxu0 %v1073
        %v4442 = vpop.f32.mrf.mxu0
        %v4443 = vadd.f32 0.0, %v4442
        %v4444 = vpop.f32.mrf.mxu0
        %v4445 = vadd.f32 0.0, %v4444
        %4446 = vdwg.mxu0
        %4447 = vmatpush.bf16.msra.mxu0 %v2752
        %4448 = vmatpush.bf16.msra.mxu0 %v2744
        %4449 = vmatpush.bf16.msra.mxu0 %v2736
        %4450 = vmatpush.bf16.msra.mxu0 %v2728
        %4451 = vmatpush.bf16.msra.mxu0 %v2720
        %4452 = vmatpush.bf16.msra.mxu0 %v2712
        %4453 = vmatpush.bf16.msra.mxu0 %v2704
        %4454 = vmatpush.bf16.msra.mxu0 %v2696
        %4455 = vmatmul.bf16.gmra.mxu0 %v1074
        %v4456 = vpop.f32.mrf.mxu0
        %v4457 = vadd.f32 %v4443, %v4456
        %v4458 = vpop.f32.mrf.mxu0
        %v4459 = vadd.f32 %v4445, %v4458
        %4460 = vdwg.mxu0
        %4461 = vmatpush.bf16.msra.mxu0 %v2816
        %4462 = vmatpush.bf16.msra.mxu0 %v2808
        %4463 = vmatpush.bf16.msra.mxu0 %v2800
        %4464 = vmatpush.bf16.msra.mxu0 %v2792
        %4465 = vmatpush.bf16.msra.mxu0 %v2784
        %4466 = vmatpush.bf16.msra.mxu0 %v2776
        %4467 = vmatpush.bf16.msra.mxu0 %v2768
        %4468 = vmatpush.bf16.msra.mxu0 %v2760
        %4469 = vmatmul.bf16.gmra.mxu0 %v1075
        %v4470 = vpop.f32.mrf.mxu0
        %v4471 = vadd.f32 %v4457, %v4470
        %v4472 = vpop.f32.mrf.mxu0
        %v4473 = vadd.f32 %v4459, %v4472
        %4474 = vdwg.mxu0
        %4475 = vmatpush.bf16.msra.mxu0 %v2880
        %4476 = vmatpush.bf16.msra.mxu0 %v2872
        %4477 = vmatpush.bf16.msra.mxu0 %v2864
        %4478 = vmatpush.bf16.msra.mxu0 %v2856
        %4479 = vmatpush.bf16.msra.mxu0 %v2848
        %4480 = vmatpush.bf16.msra.mxu0 %v2840
        %4481 = vmatpush.bf16.msra.mxu0 %v2832
        %4482 = vmatpush.bf16.msra.mxu0 %v2824
        %4483 = vmatmul.bf16.gmra.mxu0 %v1076
        %v4484 = vpop.f32.mrf.mxu0
        %v4485 = vadd.f32 %v4471, %v4484
        %v4486 = vpop.f32.mrf.mxu0
        %v4487 = vadd.f32 %v4473, %v4486
        %4488 = vdwg.mxu0
        %4489 = vmatpush.bf16.msra.mxu0 %v2944
        %4490 = vmatpush.bf16.msra.mxu0 %v2936
        %4491 = vmatpush.bf16.msra.mxu0 %v2928
        %4492 = vmatpush.bf16.msra.mxu0 %v2920
        %4493 = vmatpush.bf16.msra.mxu0 %v2912
        %4494 = vmatpush.bf16.msra.mxu0 %v2904
        %4495 = vmatpush.bf16.msra.mxu0 %v2896
        %4496 = vmatpush.bf16.msra.mxu0 %v2888
        %4497 = vmatmul.bf16.gmra.mxu0 %v1077
        %v4498 = vpop.f32.mrf.mxu0
        %v4499 = vadd.f32 %v4485, %v4498
        %v4500 = vpop.f32.mrf.mxu0
        %v4501 = vadd.f32 %v4487, %v4500
        %4502 = vdwg.mxu0
        %4503 = vmatpush.bf16.msra.mxu0 %v3008
        %4504 = vmatpush.bf16.msra.mxu0 %v3000
        %4505 = vmatpush.bf16.msra.mxu0 %v2992
        %4506 = vmatpush.bf16.msra.mxu0 %v2984
        %4507 = vmatpush.bf16.msra.mxu0 %v2976
        %4508 = vmatpush.bf16.msra.mxu0 %v2968
        %4509 = vmatpush.bf16.msra.mxu0 %v2960
        %4510 = vmatpush.bf16.msra.mxu0 %v2952
        %4511 = vmatmul.bf16.gmra.mxu0 %v1078
        %v4512 = vpop.f32.mrf.mxu0
        %v4513 = vadd.f32 %v4499, %v4512
        %v4514 = vpop.f32.mrf.mxu0
        %v4515 = vadd.f32 %v4501, %v4514
        %4516 = vdwg.mxu0
        %4517 = vmatpush.bf16.msra.mxu0 %v3072
        %4518 = vmatpush.bf16.msra.mxu0 %v3064
        %4519 = vmatpush.bf16.msra.mxu0 %v3056
        %4520 = vmatpush.bf16.msra.mxu0 %v3048
        %4521 = vmatpush.bf16.msra.mxu0 %v3040
        %4522 = vmatpush.bf16.msra.mxu0 %v3032
        %4523 = vmatpush.bf16.msra.mxu0 %v3024
        %4524 = vmatpush.bf16.msra.mxu0 %v3016
        %4525 = vmatmul.bf16.gmra.mxu0 %v1079
        %v4526 = vpop.f32.mrf.mxu0
        %v4527 = vadd.f32 %v4513, %v4526
        %v4528 = vpop.f32.mrf.mxu0
        %v4529 = vadd.f32 %v4515, %v4528
        %4530 = vdwg.mxu0
        %4531 = vmatpush.bf16.msra.mxu0 %v3136
        %4532 = vmatpush.bf16.msra.mxu0 %v3128
        %4533 = vmatpush.bf16.msra.mxu0 %v3120
        %4534 = vmatpush.bf16.msra.mxu0 %v3112
        %4535 = vmatpush.bf16.msra.mxu0 %v3104
        %4536 = vmatpush.bf16.msra.mxu0 %v3096
        %4537 = vmatpush.bf16.msra.mxu0 %v3088
        %4538 = vmatpush.bf16.msra.mxu0 %v3080
        %4539 = vmatmul.bf16.gmra.mxu0 %v1080
        %v4540 = vpop.f32.mrf.mxu0
        %v4541 = vadd.f32 %v4527, %v4540
        %v4542 = vpop.f32.mrf.mxu0
        %v4543 = vadd.f32 %v4529, %v4542
        %4544 = vdwg.mxu0
        %v4545 = vadd.f32 %v513, %v3757
        %v4546 = vadd.f32 %v514, %v3869
        %v4547 = vadd.f32 %v515, %v3981
        %v4548 = vadd.f32 %v516, %v4093
        %v4549 = vadd.f32 %v517, %v4205
        %v4550 = vadd.f32 %v518, %v4317
        %v4551 = vadd.f32 %v519, %v4429
        %v4552 = vadd.f32 %v520, %v4541
        %v4553 = vadd.f32 %v521, %v3759
        %v4554 = vadd.f32 %v522, %v3871
        %v4555 = vadd.f32 %v523, %v3983
        %v4556 = vadd.f32 %v524, %v4095
        %v4557 = vadd.f32 %v525, %v4207
        %v4558 = vadd.f32 %v526, %v4319
        %v4559 = vadd.f32 %v527, %v4431
        %v4560 = vadd.f32 %v528, %v4543
        %4561 = vst [vmem:[#allocation2] sm:$0xff] %v4545
        %4562 = vst [vmem:[#allocation2 + $0x8] sm:$0xff] %v4546
        %4563 = vst [vmem:[#allocation2 + $0x10] sm:$0xff] %v4547
        %4564 = vst [vmem:[#allocation2 + $0x18] sm:$0xff] %v4548
        %4565 = vst [vmem:[#allocation2 + $0x20] sm:$0xff] %v4549
        %4566 = vst [vmem:[#allocation2 + $0x28] sm:$0xff] %v4550
        %4567 = vst [vmem:[#allocation2 + $0x30] sm:$0xff] %v4551
        %4568 = vst [vmem:[#allocation2 + $0x38] sm:$0xff] %v4552
        %4569 = vst [vmem:[#allocation2 + $0x40] sm:$0xff] %v4553
        %4570 = vst [vmem:[#allocation2 + $0x48] sm:$0xff] %v4554
        %4571 = vst [vmem:[#allocation2 + $0x50] sm:$0xff] %v4555
        %4572 = vst [vmem:[#allocation2 + $0x58] sm:$0xff] %v4556
        %4573 = vst [vmem:[#allocation2 + $0x60] sm:$0xff] %v4557
        %4574 = vst [vmem:[#allocation2 + $0x68] sm:$0xff] %v4558
        %4575 = vst [vmem:[#allocation2 + $0x70] sm:$0xff] %v4559
        %4576 = vst [vmem:[#allocation2 + $0x78] sm:$0xff] %v4560
        %p4577 = scmp.eq.s32.totalorder %s30, 4
        // Predicated region
        $region97: #{tpu_custom_call.1} parent=55 // pred_check
          %p4578 = pneg %p4577
        $region98: #{tpu_custom_call.1} parent=55 // pred_check_branch
          %4580 = sbr.rel (%p4578) target = $region100
        $region99: #{tpu_custom_call.1} parent=55 // pred_region
          %v4581 = vld [vmem:[#allocation2] sm:$0xff]
          %v4582 = vld [vmem:[#allocation2 + $0x8] sm:$0xff]
          %v4583 = vld [vmem:[#allocation2 + $0x10] sm:$0xff]
          %v4584 = vld [vmem:[#allocation2 + $0x18] sm:$0xff]
          %v4585 = vld [vmem:[#allocation2 + $0x20] sm:$0xff]
          %v4586 = vld [vmem:[#allocation2 + $0x28] sm:$0xff]
          %v4587 = vld [vmem:[#allocation2 + $0x30] sm:$0xff]
          %v4588 = vld [vmem:[#allocation2 + $0x38] sm:$0xff]
          %v4589 = vld [vmem:[#allocation2 + $0x40] sm:$0xff]
          %v4590 = vld [vmem:[#allocation2 + $0x48] sm:$0xff]
          %v4591 = vld [vmem:[#allocation2 + $0x50] sm:$0xff]
          %v4592 = vld [vmem:[#allocation2 + $0x58] sm:$0xff]
          %v4593 = vld [vmem:[#allocation2 + $0x60] sm:$0xff]
          %v4594 = vld [vmem:[#allocation2 + $0x68] sm:$0xff]
          %v4595 = vld [vmem:[#allocation2 + $0x70] sm:$0xff]
          %v4596 = vld [vmem:[#allocation2 + $0x78] sm:$0xff]
          %v4597 = vld [vmem:[#allocation8] sm:$0xff]
          %v4599 = vperm.slane %v4597, 0
          %v4600 = vperm.slane %v4597, 1
          %v4601 = vperm.slane %v4597, 2
          %v4602 = vperm.slane %v4597, 3
          %v4603 = vperm.slane %v4597, 4
          %v4604 = vperm.slane %v4597, 5
          %v4605 = vperm.slane %v4597, 6
          %v4606 = vperm.slane %v4597, 7
          %v4615 = vadd.f32 %v4581, %v4599
          %v4616 = vadd.f32 %v4582, %v4600
          %v4617 = vadd.f32 %v4583, %v4601
          %v4618 = vadd.f32 %v4584, %v4602
          %v4619 = vadd.f32 %v4585, %v4603
          %v4620 = vadd.f32 %v4586, %v4604
          %v4621 = vadd.f32 %v4587, %v4605
          %v4622 = vadd.f32 %v4588, %v4606
          %v4623 = vadd.f32 %v4589, %v4599
          %v4624 = vadd.f32 %v4590, %v4600
          %v4625 = vadd.f32 %v4591, %v4601
          %v4626 = vadd.f32 %v4592, %v4602
          %v4627 = vadd.f32 %v4593, %v4603
          %v4628 = vadd.f32 %v4594, %v4604
          %v4629 = vadd.f32 %v4595, %v4605
          %v4630 = vadd.f32 %v4596, %v4606
          %v4631 = vmax.f32 %v4615, 0.0
          %v4632 = vmax.f32 %v4616, 0.0
          %v4633 = vmax.f32 %v4617, 0.0
          %v4634 = vmax.f32 %v4618, 0.0
          %v4635 = vmax.f32 %v4619, 0.0
          %v4636 = vmax.f32 %v4620, 0.0
          %v4637 = vmax.f32 %v4621, 0.0
          %v4638 = vmax.f32 %v4622, 0.0
          %v4639 = vmax.f32 %v4623, 0.0
          %v4640 = vmax.f32 %v4624, 0.0
          %v4641 = vmax.f32 %v4625, 0.0
          %v4642 = vmax.f32 %v4626, 0.0
          %v4643 = vmax.f32 %v4627, 0.0
          %v4644 = vmax.f32 %v4628, 0.0
          %v4645 = vmax.f32 %v4629, 0.0
          %v4646 = vmax.f32 %v4630, 0.0
          %v4647 = vpack.c.bf16 %v4639, %v4631
          %v4648 = vpack.c.bf16 %v4640, %v4632
          %v4649 = vpack.c.bf16 %v4641, %v4633
          %v4650 = vpack.c.bf16 %v4642, %v4634
          %v4651 = vpack.c.bf16 %v4643, %v4635
          %v4652 = vpack.c.bf16 %v4644, %v4636
          %v4653 = vpack.c.bf16 %v4645, %v4637
          %v4654 = vpack.c.bf16 %v4646, %v4638
          %v4655 = vld [vmem:[#allocation9] sm:$0xff]
          %v4656 = vld [vmem:[#allocation9 + $0x8] sm:$0xff]
          %v4657 = vld [vmem:[#allocation9 + $0x10] sm:$0xff]
          %v4658 = vld [vmem:[#allocation9 + $0x18] sm:$0xff]
          %v4659 = vld [vmem:[#allocation9 + $0x20] sm:$0xff]
          %v4660 = vld [vmem:[#allocation9 + $0x28] sm:$0xff]
          %v4661 = vld [vmem:[#allocation9 + $0x30] sm:$0xff]
          %v4662 = vld [vmem:[#allocation9 + $0x38] sm:$0xff]
          %v4663 = vld [vmem:[#allocation9 + $0x40] sm:$0xff]
          %v4664 = vld [vmem:[#allocation9 + $0x48] sm:$0xff]
          %v4665 = vld [vmem:[#allocation9 + $0x50] sm:$0xff]
          %v4666 = vld [vmem:[#allocation9 + $0x58] sm:$0xff]
          %v4667 = vld [vmem:[#allocation9 + $0x60] sm:$0xff]
          %v4668 = vld [vmem:[#allocation9 + $0x68] sm:$0xff]
          %v4669 = vld [vmem:[#allocation9 + $0x70] sm:$0xff]
          %v4670 = vld [vmem:[#allocation9 + $0x78] sm:$0xff]
          %v4671 = vld [vmem:[#allocation9 + $0x80] sm:$0xff]
          %v4672 = vld [vmem:[#allocation9 + $0x88] sm:$0xff]
          %v4673 = vld [vmem:[#allocation9 + $0x90] sm:$0xff]
          %v4674 = vld [vmem:[#allocation9 + $0x98] sm:$0xff]
          %v4675 = vld [vmem:[#allocation9 + $0xa0] sm:$0xff]
          %v4676 = vld [vmem:[#allocation9 + $0xa8] sm:$0xff]
          %v4677 = vld [vmem:[#allocation9 + $0xb0] sm:$0xff]
          %v4678 = vld [vmem:[#allocation9 + $0xb8] sm:$0xff]
          %v4679 = vld [vmem:[#allocation9 + $0xc0] sm:$0xff]
          %v4680 = vld [vmem:[#allocation9 + $0xc8] sm:$0xff]
          %v4681 = vld [vmem:[#allocation9 + $0xd0] sm:$0xff]
          %v4682 = vld [vmem:[#allocation9 + $0xd8] sm:$0xff]
          %v4683 = vld [vmem:[#allocation9 + $0xe0] sm:$0xff]
          %v4684 = vld [vmem:[#allocation9 + $0xe8] sm:$0xff]
          %v4685 = vld [vmem:[#allocation9 + $0xf0] sm:$0xff]
          %v4686 = vld [vmem:[#allocation9 + $0xf8] sm:$0xff]
          %v4687 = vld [vmem:[#allocation9 + $0x100] sm:$0xff]
          %v4688 = vld [vmem:[#allocation9 + $0x108] sm:$0xff]
          %v4689 = vld [vmem:[#allocation9 + $0x110] sm:$0xff]
          %v4690 = vld [vmem:[#allocation9 + $0x118] sm:$0xff]
          %v4691 = vld [vmem:[#allocation9 + $0x120] sm:$0xff]
          %v4692 = vld [vmem:[#allocation9 + $0x128] sm:$0xff]
          %v4693 = vld [vmem:[#allocation9 + $0x130] sm:$0xff]
          %v4694 = vld [vmem:[#allocation9 + $0x138] sm:$0xff]
          %v4695 = vld [vmem:[#allocation9 + $0x140] sm:$0xff]
          %v4696 = vld [vmem:[#allocation9 + $0x148] sm:$0xff]
          %v4697 = vld [vmem:[#allocation9 + $0x150] sm:$0xff]
          %v4698 = vld [vmem:[#allocation9 + $0x158] sm:$0xff]
          %v4699 = vld [vmem:[#allocation9 + $0x160] sm:$0xff]
          %v4700 = vld [vmem:[#allocation9 + $0x168] sm:$0xff]
          %v4701 = vld [vmem:[#allocation9 + $0x170] sm:$0xff]
          %v4702 = vld [vmem:[#allocation9 + $0x178] sm:$0xff]
          %v4703 = vld [vmem:[#allocation9 + $0x180] sm:$0xff]
          %v4704 = vld [vmem:[#allocation9 + $0x188] sm:$0xff]
          %v4705 = vld [vmem:[#allocation9 + $0x190] sm:$0xff]
          %v4706 = vld [vmem:[#allocation9 + $0x198] sm:$0xff]
          %v4707 = vld [vmem:[#allocation9 + $0x1a0] sm:$0xff]
          %v4708 = vld [vmem:[#allocation9 + $0x1a8] sm:$0xff]
          %v4709 = vld [vmem:[#allocation9 + $0x1b0] sm:$0xff]
          %v4710 = vld [vmem:[#allocation9 + $0x1b8] sm:$0xff]
          %v4711 = vld [vmem:[#allocation9 + $0x1c0] sm:$0xff]
          %v4712 = vld [vmem:[#allocation9 + $0x1c8] sm:$0xff]
          %v4713 = vld [vmem:[#allocation9 + $0x1d0] sm:$0xff]
          %v4714 = vld [vmem:[#allocation9 + $0x1d8] sm:$0xff]
          %v4715 = vld [vmem:[#allocation9 + $0x1e0] sm:$0xff]
          %v4716 = vld [vmem:[#allocation9 + $0x1e8] sm:$0xff]
          %v4717 = vld [vmem:[#allocation9 + $0x1f0] sm:$0xff]
          %v4718 = vld [vmem:[#allocation9 + $0x1f8] sm:$0xff]
          %v4719 = vld [vmem:[#allocation9 + $0x200] sm:$0xff]
          %v4720 = vld [vmem:[#allocation9 + $0x208] sm:$0xff]
          %v4721 = vld [vmem:[#allocation9 + $0x210] sm:$0xff]
          %v4722 = vld [vmem:[#allocation9 + $0x218] sm:$0xff]
          %v4723 = vld [vmem:[#allocation9 + $0x220] sm:$0xff]
          %v4724 = vld [vmem:[#allocation9 + $0x228] sm:$0xff]
          %v4725 = vld [vmem:[#allocation9 + $0x230] sm:$0xff]
          %v4726 = vld [vmem:[#allocation9 + $0x238] sm:$0xff]
          %v4727 = vld [vmem:[#allocation9 + $0x240] sm:$0xff]
          %v4728 = vld [vmem:[#allocation9 + $0x248] sm:$0xff]
          %v4729 = vld [vmem:[#allocation9 + $0x250] sm:$0xff]
          %v4730 = vld [vmem:[#allocation9 + $0x258] sm:$0xff]
          %v4731 = vld [vmem:[#allocation9 + $0x260] sm:$0xff]
          %v4732 = vld [vmem:[#allocation9 + $0x268] sm:$0xff]
          %v4733 = vld [vmem:[#allocation9 + $0x270] sm:$0xff]
          %v4734 = vld [vmem:[#allocation9 + $0x278] sm:$0xff]
          %v4735 = vld [vmem:[#allocation9 + $0x280] sm:$0xff]
          %v4736 = vld [vmem:[#allocation9 + $0x288] sm:$0xff]
          %v4737 = vld [vmem:[#allocation9 + $0x290] sm:$0xff]
          %v4738 = vld [vmem:[#allocation9 + $0x298] sm:$0xff]
          %v4739 = vld [vmem:[#allocation9 + $0x2a0] sm:$0xff]
          %v4740 = vld [vmem:[#allocation9 + $0x2a8] sm:$0xff]
          %v4741 = vld [vmem:[#allocation9 + $0x2b0] sm:$0xff]
          %v4742 = vld [vmem:[#allocation9 + $0x2b8] sm:$0xff]
          %v4743 = vld [vmem:[#allocation9 + $0x2c0] sm:$0xff]
          %v4744 = vld [vmem:[#allocation9 + $0x2c8] sm:$0xff]
          %v4745 = vld [vmem:[#allocation9 + $0x2d0] sm:$0xff]
          %v4746 = vld [vmem:[#allocation9 + $0x2d8] sm:$0xff]
          %v4747 = vld [vmem:[#allocation9 + $0x2e0] sm:$0xff]
          %v4748 = vld [vmem:[#allocation9 + $0x2e8] sm:$0xff]
          %v4749 = vld [vmem:[#allocation9 + $0x2f0] sm:$0xff]
          %v4750 = vld [vmem:[#allocation9 + $0x2f8] sm:$0xff]
          %v4751 = vld [vmem:[#allocation9 + $0x300] sm:$0xff]
          %v4752 = vld [vmem:[#allocation9 + $0x308] sm:$0xff]
          %v4753 = vld [vmem:[#allocation9 + $0x310] sm:$0xff]
          %v4754 = vld [vmem:[#allocation9 + $0x318] sm:$0xff]
          %v4755 = vld [vmem:[#allocation9 + $0x320] sm:$0xff]
          %v4756 = vld [vmem:[#allocation9 + $0x328] sm:$0xff]
          %v4757 = vld [vmem:[#allocation9 + $0x330] sm:$0xff]
          %v4758 = vld [vmem:[#allocation9 + $0x338] sm:$0xff]
          %v4759 = vld [vmem:[#allocation9 + $0x340] sm:$0xff]
          %v4760 = vld [vmem:[#allocation9 + $0x348] sm:$0xff]
          %v4761 = vld [vmem:[#allocation9 + $0x350] sm:$0xff]
          %v4762 = vld [vmem:[#allocation9 + $0x358] sm:$0xff]
          %v4763 = vld [vmem:[#allocation9 + $0x360] sm:$0xff]
          %v4764 = vld [vmem:[#allocation9 + $0x368] sm:$0xff]
          %v4765 = vld [vmem:[#allocation9 + $0x370] sm:$0xff]
          %v4766 = vld [vmem:[#allocation9 + $0x378] sm:$0xff]
          %v4767 = vld [vmem:[#allocation9 + $0x380] sm:$0xff]
          %v4768 = vld [vmem:[#allocation9 + $0x388] sm:$0xff]
          %v4769 = vld [vmem:[#allocation9 + $0x390] sm:$0xff]
          %v4770 = vld [vmem:[#allocation9 + $0x398] sm:$0xff]
          %v4771 = vld [vmem:[#allocation9 + $0x3a0] sm:$0xff]
          %v4772 = vld [vmem:[#allocation9 + $0x3a8] sm:$0xff]
          %v4773 = vld [vmem:[#allocation9 + $0x3b0] sm:$0xff]
          %v4774 = vld [vmem:[#allocation9 + $0x3b8] sm:$0xff]
          %v4775 = vld [vmem:[#allocation9 + $0x3c0] sm:$0xff]
          %v4776 = vld [vmem:[#allocation9 + $0x3c8] sm:$0xff]
          %v4777 = vld [vmem:[#allocation9 + $0x3d0] sm:$0xff]
          %v4778 = vld [vmem:[#allocation9 + $0x3d8] sm:$0xff]
          %v4779 = vld [vmem:[#allocation9 + $0x3e0] sm:$0xff]
          %v4780 = vld [vmem:[#allocation9 + $0x3e8] sm:$0xff]
          %v4781 = vld [vmem:[#allocation9 + $0x3f0] sm:$0xff]
          %v4782 = vld [vmem:[#allocation9 + $0x3f8] sm:$0xff]
          %v4783 = vld [vmem:[#allocation9 + $0x400] sm:$0xff]
          %v4784 = vld [vmem:[#allocation9 + $0x408] sm:$0xff]
          %v4785 = vld [vmem:[#allocation9 + $0x410] sm:$0xff]
          %v4786 = vld [vmem:[#allocation9 + $0x418] sm:$0xff]
          %v4787 = vld [vmem:[#allocation9 + $0x420] sm:$0xff]
          %v4788 = vld [vmem:[#allocation9 + $0x428] sm:$0xff]
          %v4789 = vld [vmem:[#allocation9 + $0x430] sm:$0xff]
          %v4790 = vld [vmem:[#allocation9 + $0x438] sm:$0xff]
          %v4791 = vld [vmem:[#allocation9 + $0x440] sm:$0xff]
          %v4792 = vld [vmem:[#allocation9 + $0x448] sm:$0xff]
          %v4793 = vld [vmem:[#allocation9 + $0x450] sm:$0xff]
          %v4794 = vld [vmem:[#allocation9 + $0x458] sm:$0xff]
          %v4795 = vld [vmem:[#allocation9 + $0x460] sm:$0xff]
          %v4796 = vld [vmem:[#allocation9 + $0x468] sm:$0xff]
          %v4797 = vld [vmem:[#allocation9 + $0x470] sm:$0xff]
          %v4798 = vld [vmem:[#allocation9 + $0x478] sm:$0xff]
          %v4799 = vld [vmem:[#allocation9 + $0x480] sm:$0xff]
          %v4800 = vld [vmem:[#allocation9 + $0x488] sm:$0xff]
          %v4801 = vld [vmem:[#allocation9 + $0x490] sm:$0xff]
          %v4802 = vld [vmem:[#allocation9 + $0x498] sm:$0xff]
          %v4803 = vld [vmem:[#allocation9 + $0x4a0] sm:$0xff]
          %v4804 = vld [vmem:[#allocation9 + $0x4a8] sm:$0xff]
          %v4805 = vld [vmem:[#allocation9 + $0x4b0] sm:$0xff]
          %v4806 = vld [vmem:[#allocation9 + $0x4b8] sm:$0xff]
          %v4807 = vld [vmem:[#allocation9 + $0x4c0] sm:$0xff]
          %v4808 = vld [vmem:[#allocation9 + $0x4c8] sm:$0xff]
          %v4809 = vld [vmem:[#allocation9 + $0x4d0] sm:$0xff]
          %v4810 = vld [vmem:[#allocation9 + $0x4d8] sm:$0xff]
          %v4811 = vld [vmem:[#allocation9 + $0x4e0] sm:$0xff]
          %v4812 = vld [vmem:[#allocation9 + $0x4e8] sm:$0xff]
          %v4813 = vld [vmem:[#allocation9 + $0x4f0] sm:$0xff]
          %v4814 = vld [vmem:[#allocation9 + $0x4f8] sm:$0xff]
          %v4815 = vld [vmem:[#allocation9 + $0x500] sm:$0xff]
          %v4816 = vld [vmem:[#allocation9 + $0x508] sm:$0xff]
          %v4817 = vld [vmem:[#allocation9 + $0x510] sm:$0xff]
          %v4818 = vld [vmem:[#allocation9 + $0x518] sm:$0xff]
          %v4819 = vld [vmem:[#allocation9 + $0x520] sm:$0xff]
          %v4820 = vld [vmem:[#allocation9 + $0x528] sm:$0xff]
          %v4821 = vld [vmem:[#allocation9 + $0x530] sm:$0xff]
          %v4822 = vld [vmem:[#allocation9 + $0x538] sm:$0xff]
          %v4823 = vld [vmem:[#allocation9 + $0x540] sm:$0xff]
          %v4824 = vld [vmem:[#allocation9 + $0x548] sm:$0xff]
          %v4825 = vld [vmem:[#allocation9 + $0x550] sm:$0xff]
          %v4826 = vld [vmem:[#allocation9 + $0x558] sm:$0xff]
          %v4827 = vld [vmem:[#allocation9 + $0x560] sm:$0xff]
          %v4828 = vld [vmem:[#allocation9 + $0x568] sm:$0xff]
          %v4829 = vld [vmem:[#allocation9 + $0x570] sm:$0xff]
          %v4830 = vld [vmem:[#allocation9 + $0x578] sm:$0xff]
          %v4831 = vld [vmem:[#allocation9 + $0x580] sm:$0xff]
          %v4832 = vld [vmem:[#allocation9 + $0x588] sm:$0xff]
          %v4833 = vld [vmem:[#allocation9 + $0x590] sm:$0xff]
          %v4834 = vld [vmem:[#allocation9 + $0x598] sm:$0xff]
          %v4835 = vld [vmem:[#allocation9 + $0x5a0] sm:$0xff]
          %v4836 = vld [vmem:[#allocation9 + $0x5a8] sm:$0xff]
          %v4837 = vld [vmem:[#allocation9 + $0x5b0] sm:$0xff]
          %v4838 = vld [vmem:[#allocation9 + $0x5b8] sm:$0xff]
          %v4839 = vld [vmem:[#allocation9 + $0x5c0] sm:$0xff]
          %v4840 = vld [vmem:[#allocation9 + $0x5c8] sm:$0xff]
          %v4841 = vld [vmem:[#allocation9 + $0x5d0] sm:$0xff]
          %v4842 = vld [vmem:[#allocation9 + $0x5d8] sm:$0xff]
          %v4843 = vld [vmem:[#allocation9 + $0x5e0] sm:$0xff]
          %v4844 = vld [vmem:[#allocation9 + $0x5e8] sm:$0xff]
          %v4845 = vld [vmem:[#allocation9 + $0x5f0] sm:$0xff]
          %v4846 = vld [vmem:[#allocation9 + $0x5f8] sm:$0xff]
          %v4847 = vld [vmem:[#allocation9 + $0x600] sm:$0xff]
          %v4848 = vld [vmem:[#allocation9 + $0x608] sm:$0xff]
          %v4849 = vld [vmem:[#allocation9 + $0x610] sm:$0xff]
          %v4850 = vld [vmem:[#allocation9 + $0x618] sm:$0xff]
          %v4851 = vld [vmem:[#allocation9 + $0x620] sm:$0xff]
          %v4852 = vld [vmem:[#allocation9 + $0x628] sm:$0xff]
          %v4853 = vld [vmem:[#allocation9 + $0x630] sm:$0xff]
          %v4854 = vld [vmem:[#allocation9 + $0x638] sm:$0xff]
          %v4855 = vld [vmem:[#allocation9 + $0x640] sm:$0xff]
          %v4856 = vld [vmem:[#allocation9 + $0x648] sm:$0xff]
          %v4857 = vld [vmem:[#allocation9 + $0x650] sm:$0xff]
          %v4858 = vld [vmem:[#allocation9 + $0x658] sm:$0xff]
          %v4859 = vld [vmem:[#allocation9 + $0x660] sm:$0xff]
          %v4860 = vld [vmem:[#allocation9 + $0x668] sm:$0xff]
          %v4861 = vld [vmem:[#allocation9 + $0x670] sm:$0xff]
          %v4862 = vld [vmem:[#allocation9 + $0x678] sm:$0xff]
          %v4863 = vld [vmem:[#allocation9 + $0x680] sm:$0xff]
          %v4864 = vld [vmem:[#allocation9 + $0x688] sm:$0xff]
          %v4865 = vld [vmem:[#allocation9 + $0x690] sm:$0xff]
          %v4866 = vld [vmem:[#allocation9 + $0x698] sm:$0xff]
          %v4867 = vld [vmem:[#allocation9 + $0x6a0] sm:$0xff]
          %v4868 = vld [vmem:[#allocation9 + $0x6a8] sm:$0xff]
          %v4869 = vld [vmem:[#allocation9 + $0x6b0] sm:$0xff]
          %v4870 = vld [vmem:[#allocation9 + $0x6b8] sm:$0xff]
          %v4871 = vld [vmem:[#allocation9 + $0x6c0] sm:$0xff]
          %v4872 = vld [vmem:[#allocation9 + $0x6c8] sm:$0xff]
          %v4873 = vld [vmem:[#allocation9 + $0x6d0] sm:$0xff]
          %v4874 = vld [vmem:[#allocation9 + $0x6d8] sm:$0xff]
          %v4875 = vld [vmem:[#allocation9 + $0x6e0] sm:$0xff]
          %v4876 = vld [vmem:[#allocation9 + $0x6e8] sm:$0xff]
          %v4877 = vld [vmem:[#allocation9 + $0x6f0] sm:$0xff]
          %v4878 = vld [vmem:[#allocation9 + $0x6f8] sm:$0xff]
          %v4879 = vld [vmem:[#allocation9 + $0x700] sm:$0xff]
          %v4880 = vld [vmem:[#allocation9 + $0x708] sm:$0xff]
          %v4881 = vld [vmem:[#allocation9 + $0x710] sm:$0xff]
          %v4882 = vld [vmem:[#allocation9 + $0x718] sm:$0xff]
          %v4883 = vld [vmem:[#allocation9 + $0x720] sm:$0xff]
          %v4884 = vld [vmem:[#allocation9 + $0x728] sm:$0xff]
          %v4885 = vld [vmem:[#allocation9 + $0x730] sm:$0xff]
          %v4886 = vld [vmem:[#allocation9 + $0x738] sm:$0xff]
          %v4887 = vld [vmem:[#allocation9 + $0x740] sm:$0xff]
          %v4888 = vld [vmem:[#allocation9 + $0x748] sm:$0xff]
          %v4889 = vld [vmem:[#allocation9 + $0x750] sm:$0xff]
          %v4890 = vld [vmem:[#allocation9 + $0x758] sm:$0xff]
          %v4891 = vld [vmem:[#allocation9 + $0x760] sm:$0xff]
          %v4892 = vld [vmem:[#allocation9 + $0x768] sm:$0xff]
          %v4893 = vld [vmem:[#allocation9 + $0x770] sm:$0xff]
          %v4894 = vld [vmem:[#allocation9 + $0x778] sm:$0xff]
          %v4895 = vld [vmem:[#allocation9 + $0x780] sm:$0xff]
          %v4896 = vld [vmem:[#allocation9 + $0x788] sm:$0xff]
          %v4897 = vld [vmem:[#allocation9 + $0x790] sm:$0xff]
          %v4898 = vld [vmem:[#allocation9 + $0x798] sm:$0xff]
          %v4899 = vld [vmem:[#allocation9 + $0x7a0] sm:$0xff]
          %v4900 = vld [vmem:[#allocation9 + $0x7a8] sm:$0xff]
          %v4901 = vld [vmem:[#allocation9 + $0x7b0] sm:$0xff]
          %v4902 = vld [vmem:[#allocation9 + $0x7b8] sm:$0xff]
          %v4903 = vld [vmem:[#allocation9 + $0x7c0] sm:$0xff]
          %v4904 = vld [vmem:[#allocation9 + $0x7c8] sm:$0xff]
          %v4905 = vld [vmem:[#allocation9 + $0x7d0] sm:$0xff]
          %v4906 = vld [vmem:[#allocation9 + $0x7d8] sm:$0xff]
          %v4907 = vld [vmem:[#allocation9 + $0x7e0] sm:$0xff]
          %v4908 = vld [vmem:[#allocation9 + $0x7e8] sm:$0xff]
          %v4909 = vld [vmem:[#allocation9 + $0x7f0] sm:$0xff]
          %v4910 = vld [vmem:[#allocation9 + $0x7f8] sm:$0xff]
          %v4911 = vld [vmem:[#allocation11] sm:$0xf]
          %v4913 = vperm.slane %v4911, 0
          %v4914 = vperm.slane %v4911, 1
          %v4915 = vperm.slane %v4911, 2
          %v4916 = vperm.slane %v4911, 3
          %v5177 = vunpack.c.l.b16 %v4655
          %v5178 = vunpack.c.h.b16 %v4655
          %v5179 = vunpack.c.l.b16 %v4656
          %v5180 = vunpack.c.h.b16 %v4656
          %v5181 = vunpack.c.l.b16 %v4657
          %v5182 = vunpack.c.h.b16 %v4657
          %v5183 = vunpack.c.l.b16 %v4658
          %v5184 = vunpack.c.h.b16 %v4658
          %v5185 = vunpack.c.l.b16 %v4659
          %v5186 = vunpack.c.h.b16 %v4659
          %v5187 = vunpack.c.l.b16 %v4660
          %v5188 = vunpack.c.h.b16 %v4660
          %v5189 = vunpack.c.l.b16 %v4661
          %v5190 = vunpack.c.h.b16 %v4661
          %v5191 = vunpack.c.l.b16 %v4662
          %v5192 = vunpack.c.h.b16 %v4662
          %v5193 = vunpack.c.l.b16 %v4663
          %v5194 = vunpack.c.h.b16 %v4663
          %v5195 = vunpack.c.l.b16 %v4664
          %v5196 = vunpack.c.h.b16 %v4664
          %v5197 = vunpack.c.l.b16 %v4665
          %v5198 = vunpack.c.h.b16 %v4665
          %v5199 = vunpack.c.l.b16 %v4666
          %v5200 = vunpack.c.h.b16 %v4666
          %v5201 = vunpack.c.l.b16 %v4667
          %v5202 = vunpack.c.h.b16 %v4667
          %v5203 = vunpack.c.l.b16 %v4668
          %v5204 = vunpack.c.h.b16 %v4668
          %v5205 = vunpack.c.l.b16 %v4669
          %v5206 = vunpack.c.h.b16 %v4669
          %v5207 = vunpack.c.l.b16 %v4670
          %v5208 = vunpack.c.h.b16 %v4670
          %v5209 = vunpack.c.l.b16 %v4671
          %v5210 = vunpack.c.h.b16 %v4671
          %v5211 = vunpack.c.l.b16 %v4672
          %v5212 = vunpack.c.h.b16 %v4672
          %v5213 = vunpack.c.l.b16 %v4673
          %v5214 = vunpack.c.h.b16 %v4673
          %v5215 = vunpack.c.l.b16 %v4674
          %v5216 = vunpack.c.h.b16 %v4674
          %v5217 = vunpack.c.l.b16 %v4675
          %v5218 = vunpack.c.h.b16 %v4675
          %v5219 = vunpack.c.l.b16 %v4676
          %v5220 = vunpack.c.h.b16 %v4676
          %v5221 = vunpack.c.l.b16 %v4677
          %v5222 = vunpack.c.h.b16 %v4677
          %v5223 = vunpack.c.l.b16 %v4678
          %v5224 = vunpack.c.h.b16 %v4678
          %v5225 = vunpack.c.l.b16 %v4679
          %v5226 = vunpack.c.h.b16 %v4679
          %v5227 = vunpack.c.l.b16 %v4680
          %v5228 = vunpack.c.h.b16 %v4680
          %v5229 = vunpack.c.l.b16 %v4681
          %v5230 = vunpack.c.h.b16 %v4681
          %v5231 = vunpack.c.l.b16 %v4682
          %v5232 = vunpack.c.h.b16 %v4682
          %v5233 = vunpack.c.l.b16 %v4683
          %v5234 = vunpack.c.h.b16 %v4683
          %v5235 = vunpack.c.l.b16 %v4684
          %v5236 = vunpack.c.h.b16 %v4684
          %v5237 = vunpack.c.l.b16 %v4685
          %v5238 = vunpack.c.h.b16 %v4685
          %v5239 = vunpack.c.l.b16 %v4686
          %v5240 = vunpack.c.h.b16 %v4686
          %v5241 = vunpack.c.l.b16 %v4687
          %v5242 = vunpack.c.h.b16 %v4687
          %v5243 = vunpack.c.l.b16 %v4688
          %v5244 = vunpack.c.h.b16 %v4688
          %v5245 = vunpack.c.l.b16 %v4689
          %v5246 = vunpack.c.h.b16 %v4689
          %v5247 = vunpack.c.l.b16 %v4690
          %v5248 = vunpack.c.h.b16 %v4690
          %v5249 = vunpack.c.l.b16 %v4691
          %v5250 = vunpack.c.h.b16 %v4691
          %v5251 = vunpack.c.l.b16 %v4692
          %v5252 = vunpack.c.h.b16 %v4692
          %v5253 = vunpack.c.l.b16 %v4693
          %v5254 = vunpack.c.h.b16 %v4693
          %v5255 = vunpack.c.l.b16 %v4694
          %v5256 = vunpack.c.h.b16 %v4694
          %v5257 = vunpack.c.l.b16 %v4695
          %v5258 = vunpack.c.h.b16 %v4695
          %v5259 = vunpack.c.l.b16 %v4696
          %v5260 = vunpack.c.h.b16 %v4696
          %v5261 = vunpack.c.l.b16 %v4697
          %v5262 = vunpack.c.h.b16 %v4697
          %v5263 = vunpack.c.l.b16 %v4698
          %v5264 = vunpack.c.h.b16 %v4698
          %v5265 = vunpack.c.l.b16 %v4699
          %v5266 = vunpack.c.h.b16 %v4699
          %v5267 = vunpack.c.l.b16 %v4700
          %v5268 = vunpack.c.h.b16 %v4700
          %v5269 = vunpack.c.l.b16 %v4701
          %v5270 = vunpack.c.h.b16 %v4701
          %v5271 = vunpack.c.l.b16 %v4702
          %v5272 = vunpack.c.h.b16 %v4702
          %v5273 = vunpack.c.l.b16 %v4703
          %v5274 = vunpack.c.h.b16 %v4703
          %v5275 = vunpack.c.l.b16 %v4704
          %v5276 = vunpack.c.h.b16 %v4704
          %v5277 = vunpack.c.l.b16 %v4705
          %v5278 = vunpack.c.h.b16 %v4705
          %v5279 = vunpack.c.l.b16 %v4706
          %v5280 = vunpack.c.h.b16 %v4706
          %v5281 = vunpack.c.l.b16 %v4707
          %v5282 = vunpack.c.h.b16 %v4707
          %v5283 = vunpack.c.l.b16 %v4708
          %v5284 = vunpack.c.h.b16 %v4708
          %v5285 = vunpack.c.l.b16 %v4709
          %v5286 = vunpack.c.h.b16 %v4709
          %v5287 = vunpack.c.l.b16 %v4710
          %v5288 = vunpack.c.h.b16 %v4710
          %v5289 = vunpack.c.l.b16 %v4711
          %v5290 = vunpack.c.h.b16 %v4711
          %v5291 = vunpack.c.l.b16 %v4712
          %v5292 = vunpack.c.h.b16 %v4712
          %v5293 = vunpack.c.l.b16 %v4713
          %v5294 = vunpack.c.h.b16 %v4713
          %v5295 = vunpack.c.l.b16 %v4714
          %v5296 = vunpack.c.h.b16 %v4714
          %v5297 = vunpack.c.l.b16 %v4715
          %v5298 = vunpack.c.h.b16 %v4715
          %v5299 = vunpack.c.l.b16 %v4716
          %v5300 = vunpack.c.h.b16 %v4716
          %v5301 = vunpack.c.l.b16 %v4717
          %v5302 = vunpack.c.h.b16 %v4717
          %v5303 = vunpack.c.l.b16 %v4718
          %v5304 = vunpack.c.h.b16 %v4718
          %v5305 = vunpack.c.l.b16 %v4719
          %v5306 = vunpack.c.h.b16 %v4719
          %v5307 = vunpack.c.l.b16 %v4720
          %v5308 = vunpack.c.h.b16 %v4720
          %v5309 = vunpack.c.l.b16 %v4721
          %v5310 = vunpack.c.h.b16 %v4721
          %v5311 = vunpack.c.l.b16 %v4722
          %v5312 = vunpack.c.h.b16 %v4722
          %v5313 = vunpack.c.l.b16 %v4723
          %v5314 = vunpack.c.h.b16 %v4723
          %v5315 = vunpack.c.l.b16 %v4724
          %v5316 = vunpack.c.h.b16 %v4724
          %v5317 = vunpack.c.l.b16 %v4725
          %v5318 = vunpack.c.h.b16 %v4725
          %v5319 = vunpack.c.l.b16 %v4726
          %v5320 = vunpack.c.h.b16 %v4726
          %v5321 = vunpack.c.l.b16 %v4727
          %v5322 = vunpack.c.h.b16 %v4727
          %v5323 = vunpack.c.l.b16 %v4728
          %v5324 = vunpack.c.h.b16 %v4728
          %v5325 = vunpack.c.l.b16 %v4729
          %v5326 = vunpack.c.h.b16 %v4729
          %v5327 = vunpack.c.l.b16 %v4730
          %v5328 = vunpack.c.h.b16 %v4730
          %v5329 = vunpack.c.l.b16 %v4731
          %v5330 = vunpack.c.h.b16 %v4731
          %v5331 = vunpack.c.l.b16 %v4732
          %v5332 = vunpack.c.h.b16 %v4732
          %v5333 = vunpack.c.l.b16 %v4733
          %v5334 = vunpack.c.h.b16 %v4733
          %v5335 = vunpack.c.l.b16 %v4734
          %v5336 = vunpack.c.h.b16 %v4734
          %v5337 = vunpack.c.l.b16 %v4735
          %v5338 = vunpack.c.h.b16 %v4735
          %v5339 = vunpack.c.l.b16 %v4736
          %v5340 = vunpack.c.h.b16 %v4736
          %v5341 = vunpack.c.l.b16 %v4737
          %v5342 = vunpack.c.h.b16 %v4737
          %v5343 = vunpack.c.l.b16 %v4738
          %v5344 = vunpack.c.h.b16 %v4738
          %v5345 = vunpack.c.l.b16 %v4739
          %v5346 = vunpack.c.h.b16 %v4739
          %v5347 = vunpack.c.l.b16 %v4740
          %v5348 = vunpack.c.h.b16 %v4740
          %v5349 = vunpack.c.l.b16 %v4741
          %v5350 = vunpack.c.h.b16 %v4741
          %v5351 = vunpack.c.l.b16 %v4742
          %v5352 = vunpack.c.h.b16 %v4742
          %v5353 = vunpack.c.l.b16 %v4743
          %v5354 = vunpack.c.h.b16 %v4743
          %v5355 = vunpack.c.l.b16 %v4744
          %v5356 = vunpack.c.h.b16 %v4744
          %v5357 = vunpack.c.l.b16 %v4745
          %v5358 = vunpack.c.h.b16 %v4745
          %v5359 = vunpack.c.l.b16 %v4746
          %v5360 = vunpack.c.h.b16 %v4746
          %v5361 = vunpack.c.l.b16 %v4747
          %v5362 = vunpack.c.h.b16 %v4747
          %v5363 = vunpack.c.l.b16 %v4748
          %v5364 = vunpack.c.h.b16 %v4748
          %v5365 = vunpack.c.l.b16 %v4749
          %v5366 = vunpack.c.h.b16 %v4749
          %v5367 = vunpack.c.l.b16 %v4750
          %v5368 = vunpack.c.h.b16 %v4750
          %v5369 = vunpack.c.l.b16 %v4751
          %v5370 = vunpack.c.h.b16 %v4751
          %v5371 = vunpack.c.l.b16 %v4752
          %v5372 = vunpack.c.h.b16 %v4752
          %v5373 = vunpack.c.l.b16 %v4753
          %v5374 = vunpack.c.h.b16 %v4753
          %v5375 = vunpack.c.l.b16 %v4754
          %v5376 = vunpack.c.h.b16 %v4754
          %v5377 = vunpack.c.l.b16 %v4755
          %v5378 = vunpack.c.h.b16 %v4755
          %v5379 = vunpack.c.l.b16 %v4756
          %v5380 = vunpack.c.h.b16 %v4756
          %v5381 = vunpack.c.l.b16 %v4757
          %v5382 = vunpack.c.h.b16 %v4757
          %v5383 = vunpack.c.l.b16 %v4758
          %v5384 = vunpack.c.h.b16 %v4758
          %v5385 = vunpack.c.l.b16 %v4759
          %v5386 = vunpack.c.h.b16 %v4759
          %v5387 = vunpack.c.l.b16 %v4760
          %v5388 = vunpack.c.h.b16 %v4760
          %v5389 = vunpack.c.l.b16 %v4761
          %v5390 = vunpack.c.h.b16 %v4761
          %v5391 = vunpack.c.l.b16 %v4762
          %v5392 = vunpack.c.h.b16 %v4762
          %v5393 = vunpack.c.l.b16 %v4763
          %v5394 = vunpack.c.h.b16 %v4763
          %v5395 = vunpack.c.l.b16 %v4764
          %v5396 = vunpack.c.h.b16 %v4764
          %v5397 = vunpack.c.l.b16 %v4765
          %v5398 = vunpack.c.h.b16 %v4765
          %v5399 = vunpack.c.l.b16 %v4766
          %v5400 = vunpack.c.h.b16 %v4766
          %v5401 = vunpack.c.l.b16 %v4767
          %v5402 = vunpack.c.h.b16 %v4767
          %v5403 = vunpack.c.l.b16 %v4768
          %v5404 = vunpack.c.h.b16 %v4768
          %v5405 = vunpack.c.l.b16 %v4769
          %v5406 = vunpack.c.h.b16 %v4769
          %v5407 = vunpack.c.l.b16 %v4770
          %v5408 = vunpack.c.h.b16 %v4770
          %v5409 = vunpack.c.l.b16 %v4771
          %v5410 = vunpack.c.h.b16 %v4771
          %v5411 = vunpack.c.l.b16 %v4772
          %v5412 = vunpack.c.h.b16 %v4772
          %v5413 = vunpack.c.l.b16 %v4773
          %v5414 = vunpack.c.h.b16 %v4773
          %v5415 = vunpack.c.l.b16 %v4774
          %v5416 = vunpack.c.h.b16 %v4774
          %v5417 = vunpack.c.l.b16 %v4775
          %v5418 = vunpack.c.h.b16 %v4775
          %v5419 = vunpack.c.l.b16 %v4776
          %v5420 = vunpack.c.h.b16 %v4776
          %v5421 = vunpack.c.l.b16 %v4777
          %v5422 = vunpack.c.h.b16 %v4777
          %v5423 = vunpack.c.l.b16 %v4778
          %v5424 = vunpack.c.h.b16 %v4778
          %v5425 = vunpack.c.l.b16 %v4779
          %v5426 = vunpack.c.h.b16 %v4779
          %v5427 = vunpack.c.l.b16 %v4780
          %v5428 = vunpack.c.h.b16 %v4780
          %v5429 = vunpack.c.l.b16 %v4781
          %v5430 = vunpack.c.h.b16 %v4781
          %v5431 = vunpack.c.l.b16 %v4782
          %v5432 = vunpack.c.h.b16 %v4782
          %v5433 = vunpack.c.l.b16 %v4783
          %v5434 = vunpack.c.h.b16 %v4783
          %v5435 = vunpack.c.l.b16 %v4784
          %v5436 = vunpack.c.h.b16 %v4784
          %v5437 = vunpack.c.l.b16 %v4785
          %v5438 = vunpack.c.h.b16 %v4785
          %v5439 = vunpack.c.l.b16 %v4786
          %v5440 = vunpack.c.h.b16 %v4786
          %v5441 = vunpack.c.l.b16 %v4787
          %v5442 = vunpack.c.h.b16 %v4787
          %v5443 = vunpack.c.l.b16 %v4788
          %v5444 = vunpack.c.h.b16 %v4788
          %v5445 = vunpack.c.l.b16 %v4789
          %v5446 = vunpack.c.h.b16 %v4789
          %v5447 = vunpack.c.l.b16 %v4790
          %v5448 = vunpack.c.h.b16 %v4790
          %v5449 = vunpack.c.l.b16 %v4791
          %v5450 = vunpack.c.h.b16 %v4791
          %v5451 = vunpack.c.l.b16 %v4792
          %v5452 = vunpack.c.h.b16 %v4792
          %v5453 = vunpack.c.l.b16 %v4793
          %v5454 = vunpack.c.h.b16 %v4793
          %v5455 = vunpack.c.l.b16 %v4794
          %v5456 = vunpack.c.h.b16 %v4794
          %v5457 = vunpack.c.l.b16 %v4795
          %v5458 = vunpack.c.h.b16 %v4795
          %v5459 = vunpack.c.l.b16 %v4796
          %v5460 = vunpack.c.h.b16 %v4796
          %v5461 = vunpack.c.l.b16 %v4797
          %v5462 = vunpack.c.h.b16 %v4797
          %v5463 = vunpack.c.l.b16 %v4798
          %v5464 = vunpack.c.h.b16 %v4798
          %v5465 = vunpack.c.l.b16 %v4799
          %v5466 = vunpack.c.h.b16 %v4799
          %v5467 = vunpack.c.l.b16 %v4800
          %v5468 = vunpack.c.h.b16 %v4800
          %v5469 = vunpack.c.l.b16 %v4801
          %v5470 = vunpack.c.h.b16 %v4801
          %v5471 = vunpack.c.l.b16 %v4802
          %v5472 = vunpack.c.h.b16 %v4802
          %v5473 = vunpack.c.l.b16 %v4803
          %v5474 = vunpack.c.h.b16 %v4803
          %v5475 = vunpack.c.l.b16 %v4804
          %v5476 = vunpack.c.h.b16 %v4804
          %v5477 = vunpack.c.l.b16 %v4805
          %v5478 = vunpack.c.h.b16 %v4805
          %v5479 = vunpack.c.l.b16 %v4806
          %v5480 = vunpack.c.h.b16 %v4806
          %v5481 = vunpack.c.l.b16 %v4807
          %v5482 = vunpack.c.h.b16 %v4807
          %v5483 = vunpack.c.l.b16 %v4808
          %v5484 = vunpack.c.h.b16 %v4808
          %v5485 = vunpack.c.l.b16 %v4809
          %v5486 = vunpack.c.h.b16 %v4809
          %v5487 = vunpack.c.l.b16 %v4810
          %v5488 = vunpack.c.h.b16 %v4810
          %v5489 = vunpack.c.l.b16 %v4811
          %v5490 = vunpack.c.h.b16 %v4811
          %v5491 = vunpack.c.l.b16 %v4812
          %v5492 = vunpack.c.h.b16 %v4812
          %v5493 = vunpack.c.l.b16 %v4813
          %v5494 = vunpack.c.h.b16 %v4813
          %v5495 = vunpack.c.l.b16 %v4814
          %v5496 = vunpack.c.h.b16 %v4814
          %v5497 = vunpack.c.l.b16 %v4815
          %v5498 = vunpack.c.h.b16 %v4815
          %v5499 = vunpack.c.l.b16 %v4816
          %v5500 = vunpack.c.h.b16 %v4816
          %v5501 = vunpack.c.l.b16 %v4817
          %v5502 = vunpack.c.h.b16 %v4817
          %v5503 = vunpack.c.l.b16 %v4818
          %v5504 = vunpack.c.h.b16 %v4818
          %v5505 = vunpack.c.l.b16 %v4819
          %v5506 = vunpack.c.h.b16 %v4819
          %v5507 = vunpack.c.l.b16 %v4820
          %v5508 = vunpack.c.h.b16 %v4820
          %v5509 = vunpack.c.l.b16 %v4821
          %v5510 = vunpack.c.h.b16 %v4821
          %v5511 = vunpack.c.l.b16 %v4822
          %v5512 = vunpack.c.h.b16 %v4822
          %v5513 = vunpack.c.l.b16 %v4823
          %v5514 = vunpack.c.h.b16 %v4823
          %v5515 = vunpack.c.l.b16 %v4824
          %v5516 = vunpack.c.h.b16 %v4824
          %v5517 = vunpack.c.l.b16 %v4825
          %v5518 = vunpack.c.h.b16 %v4825
          %v5519 = vunpack.c.l.b16 %v4826
          %v5520 = vunpack.c.h.b16 %v4826
          %v5521 = vunpack.c.l.b16 %v4827
          %v5522 = vunpack.c.h.b16 %v4827
          %v5523 = vunpack.c.l.b16 %v4828
          %v5524 = vunpack.c.h.b16 %v4828
          %v5525 = vunpack.c.l.b16 %v4829
          %v5526 = vunpack.c.h.b16 %v4829
          %v5527 = vunpack.c.l.b16 %v4830
          %v5528 = vunpack.c.h.b16 %v4830
          %v5529 = vunpack.c.l.b16 %v4831
          %v5530 = vunpack.c.h.b16 %v4831
          %v5531 = vunpack.c.l.b16 %v4832
          %v5532 = vunpack.c.h.b16 %v4832
          %v5533 = vunpack.c.l.b16 %v4833
          %v5534 = vunpack.c.h.b16 %v4833
          %v5535 = vunpack.c.l.b16 %v4834
          %v5536 = vunpack.c.h.b16 %v4834
          %v5537 = vunpack.c.l.b16 %v4835
          %v5538 = vunpack.c.h.b16 %v4835
          %v5539 = vunpack.c.l.b16 %v4836
          %v5540 = vunpack.c.h.b16 %v4836
          %v5541 = vunpack.c.l.b16 %v4837
          %v5542 = vunpack.c.h.b16 %v4837
          %v5543 = vunpack.c.l.b16 %v4838
          %v5544 = vunpack.c.h.b16 %v4838
          %v5545 = vunpack.c.l.b16 %v4839
          %v5546 = vunpack.c.h.b16 %v4839
          %v5547 = vunpack.c.l.b16 %v4840
          %v5548 = vunpack.c.h.b16 %v4840
          %v5549 = vunpack.c.l.b16 %v4841
          %v5550 = vunpack.c.h.b16 %v4841
          %v5551 = vunpack.c.l.b16 %v4842
          %v5552 = vunpack.c.h.b16 %v4842
          %v5553 = vunpack.c.l.b16 %v4843
          %v5554 = vunpack.c.h.b16 %v4843
          %v5555 = vunpack.c.l.b16 %v4844
          %v5556 = vunpack.c.h.b16 %v4844
          %v5557 = vunpack.c.l.b16 %v4845
          %v5558 = vunpack.c.h.b16 %v4845
          %v5559 = vunpack.c.l.b16 %v4846
          %v5560 = vunpack.c.h.b16 %v4846
          %v5561 = vunpack.c.l.b16 %v4847
          %v5562 = vunpack.c.h.b16 %v4847
          %v5563 = vunpack.c.l.b16 %v4848
          %v5564 = vunpack.c.h.b16 %v4848
          %v5565 = vunpack.c.l.b16 %v4849
          %v5566 = vunpack.c.h.b16 %v4849
          %v5567 = vunpack.c.l.b16 %v4850
          %v5568 = vunpack.c.h.b16 %v4850
          %v5569 = vunpack.c.l.b16 %v4851
          %v5570 = vunpack.c.h.b16 %v4851
          %v5571 = vunpack.c.l.b16 %v4852
          %v5572 = vunpack.c.h.b16 %v4852
          %v5573 = vunpack.c.l.b16 %v4853
          %v5574 = vunpack.c.h.b16 %v4853
          %v5575 = vunpack.c.l.b16 %v4854
          %v5576 = vunpack.c.h.b16 %v4854
          %v5577 = vunpack.c.l.b16 %v4855
          %v5578 = vunpack.c.h.b16 %v4855
          %v5579 = vunpack.c.l.b16 %v4856
          %v5580 = vunpack.c.h.b16 %v4856
          %v5581 = vunpack.c.l.b16 %v4857
          %v5582 = vunpack.c.h.b16 %v4857
          %v5583 = vunpack.c.l.b16 %v4858
          %v5584 = vunpack.c.h.b16 %v4858
          %v5585 = vunpack.c.l.b16 %v4859
          %v5586 = vunpack.c.h.b16 %v4859
          %v5587 = vunpack.c.l.b16 %v4860
          %v5588 = vunpack.c.h.b16 %v4860
          %v5589 = vunpack.c.l.b16 %v4861
          %v5590 = vunpack.c.h.b16 %v4861
          %v5591 = vunpack.c.l.b16 %v4862
          %v5592 = vunpack.c.h.b16 %v4862
          %v5593 = vunpack.c.l.b16 %v4863
          %v5594 = vunpack.c.h.b16 %v4863
          %v5595 = vunpack.c.l.b16 %v4864
          %v5596 = vunpack.c.h.b16 %v4864
          %v5597 = vunpack.c.l.b16 %v4865
          %v5598 = vunpack.c.h.b16 %v4865
          %v5599 = vunpack.c.l.b16 %v4866
          %v5600 = vunpack.c.h.b16 %v4866
          %v5601 = vunpack.c.l.b16 %v4867
          %v5602 = vunpack.c.h.b16 %v4867
          %v5603 = vunpack.c.l.b16 %v4868
          %v5604 = vunpack.c.h.b16 %v4868
          %v5605 = vunpack.c.l.b16 %v4869
          %v5606 = vunpack.c.h.b16 %v4869
          %v5607 = vunpack.c.l.b16 %v4870
          %v5608 = vunpack.c.h.b16 %v4870
          %v5609 = vunpack.c.l.b16 %v4871
          %v5610 = vunpack.c.h.b16 %v4871
          %v5611 = vunpack.c.l.b16 %v4872
          %v5612 = vunpack.c.h.b16 %v4872
          %v5613 = vunpack.c.l.b16 %v4873
          %v5614 = vunpack.c.h.b16 %v4873
          %v5615 = vunpack.c.l.b16 %v4874
          %v5616 = vunpack.c.h.b16 %v4874
          %v5617 = vunpack.c.l.b16 %v4875
          %v5618 = vunpack.c.h.b16 %v4875
          %v5619 = vunpack.c.l.b16 %v4876
          %v5620 = vunpack.c.h.b16 %v4876
          %v5621 = vunpack.c.l.b16 %v4877
          %v5622 = vunpack.c.h.b16 %v4877
          %v5623 = vunpack.c.l.b16 %v4878
          %v5624 = vunpack.c.h.b16 %v4878
          %v5625 = vunpack.c.l.b16 %v4879
          %v5626 = vunpack.c.h.b16 %v4879
          %v5627 = vunpack.c.l.b16 %v4880
          %v5628 = vunpack.c.h.b16 %v4880
          %v5629 = vunpack.c.l.b16 %v4881
          %v5630 = vunpack.c.h.b16 %v4881
          %v5631 = vunpack.c.l.b16 %v4882
          %v5632 = vunpack.c.h.b16 %v4882
          %v5633 = vunpack.c.l.b16 %v4883
          %v5634 = vunpack.c.h.b16 %v4883
          %v5635 = vunpack.c.l.b16 %v4884
          %v5636 = vunpack.c.h.b16 %v4884
          %v5637 = vunpack.c.l.b16 %v4885
          %v5638 = vunpack.c.h.b16 %v4885
          %v5639 = vunpack.c.l.b16 %v4886
          %v5640 = vunpack.c.h.b16 %v4886
          %v5641 = vunpack.c.l.b16 %v4887
          %v5642 = vunpack.c.h.b16 %v4887
          %v5643 = vunpack.c.l.b16 %v4888
          %v5644 = vunpack.c.h.b16 %v4888
          %v5645 = vunpack.c.l.b16 %v4889
          %v5646 = vunpack.c.h.b16 %v4889
          %v5647 = vunpack.c.l.b16 %v4890
          %v5648 = vunpack.c.h.b16 %v4890
          %v5649 = vunpack.c.l.b16 %v4891
          %v5650 = vunpack.c.h.b16 %v4891
          %v5651 = vunpack.c.l.b16 %v4892
          %v5652 = vunpack.c.h.b16 %v4892
          %v5653 = vunpack.c.l.b16 %v4893
          %v5654 = vunpack.c.h.b16 %v4893
          %v5655 = vunpack.c.l.b16 %v4894
          %v5656 = vunpack.c.h.b16 %v4894
          %v5657 = vunpack.c.l.b16 %v4895
          %v5658 = vunpack.c.h.b16 %v4895
          %v5659 = vunpack.c.l.b16 %v4896
          %v5660 = vunpack.c.h.b16 %v4896
          %v5661 = vunpack.c.l.b16 %v4897
          %v5662 = vunpack.c.h.b16 %v4897
          %v5663 = vunpack.c.l.b16 %v4898
          %v5664 = vunpack.c.h.b16 %v4898
          %v5665 = vunpack.c.l.b16 %v4899
          %v5666 = vunpack.c.h.b16 %v4899
          %v5667 = vunpack.c.l.b16 %v4900
          %v5668 = vunpack.c.h.b16 %v4900
          %v5669 = vunpack.c.l.b16 %v4901
          %v5670 = vunpack.c.h.b16 %v4901
          %v5671 = vunpack.c.l.b16 %v4902
          %v5672 = vunpack.c.h.b16 %v4902
          %v5673 = vunpack.c.l.b16 %v4903
          %v5674 = vunpack.c.h.b16 %v4903
          %v5675 = vunpack.c.l.b16 %v4904
          %v5676 = vunpack.c.h.b16 %v4904
          %v5677 = vunpack.c.l.b16 %v4905
          %v5678 = vunpack.c.h.b16 %v4905
          %v5679 = vunpack.c.l.b16 %v4906
          %v5680 = vunpack.c.h.b16 %v4906
          %v5681 = vunpack.c.l.b16 %v4907
          %v5682 = vunpack.c.h.b16 %v4907
          %v5683 = vunpack.c.l.b16 %v4908
          %v5684 = vunpack.c.h.b16 %v4908
          %v5685 = vunpack.c.l.b16 %v4909
          %v5686 = vunpack.c.h.b16 %v4909
          %v5687 = vunpack.c.l.b16 %v4910
          %v5688 = vunpack.c.h.b16 %v4910
          %v5689 = vpack.c.b16 %v5181, %v5177
          %v5690 = vpack.c.b16 %v5182, %v5178
          %v5691 = vpack.c.b16 %v5183, %v5179
          %v5692 = vpack.c.b16 %v5184, %v5180
          %v5693 = vpack.c.b16 %v5189, %v5185
          %v5694 = vpack.c.b16 %v5190, %v5186
          %v5695 = vpack.c.b16 %v5191, %v5187
          %v5696 = vpack.c.b16 %v5192, %v5188
          %v5697 = vpack.c.b16 %v5197, %v5193
          %v5698 = vpack.c.b16 %v5198, %v5194
          %v5699 = vpack.c.b16 %v5199, %v5195
          %v5700 = vpack.c.b16 %v5200, %v5196
          %v5701 = vpack.c.b16 %v5205, %v5201
          %v5702 = vpack.c.b16 %v5206, %v5202
          %v5703 = vpack.c.b16 %v5207, %v5203
          %v5704 = vpack.c.b16 %v5208, %v5204
          %v5705 = vpack.c.b16 %v5213, %v5209
          %v5706 = vpack.c.b16 %v5214, %v5210
          %v5707 = vpack.c.b16 %v5215, %v5211
          %v5708 = vpack.c.b16 %v5216, %v5212
          %v5709 = vpack.c.b16 %v5221, %v5217
          %v5710 = vpack.c.b16 %v5222, %v5218
          %v5711 = vpack.c.b16 %v5223, %v5219
          %v5712 = vpack.c.b16 %v5224, %v5220
          %v5713 = vpack.c.b16 %v5229, %v5225
          %v5714 = vpack.c.b16 %v5230, %v5226
          %v5715 = vpack.c.b16 %v5231, %v5227
          %v5716 = vpack.c.b16 %v5232, %v5228
          %v5717 = vpack.c.b16 %v5237, %v5233
          %v5718 = vpack.c.b16 %v5238, %v5234
          %v5719 = vpack.c.b16 %v5239, %v5235
          %v5720 = vpack.c.b16 %v5240, %v5236
          %v5721 = vpack.c.b16 %v5245, %v5241
          %v5722 = vpack.c.b16 %v5246, %v5242
          %v5723 = vpack.c.b16 %v5247, %v5243
          %v5724 = vpack.c.b16 %v5248, %v5244
          %v5725 = vpack.c.b16 %v5253, %v5249
          %v5726 = vpack.c.b16 %v5254, %v5250
          %v5727 = vpack.c.b16 %v5255, %v5251
          %v5728 = vpack.c.b16 %v5256, %v5252
          %v5729 = vpack.c.b16 %v5261, %v5257
          %v5730 = vpack.c.b16 %v5262, %v5258
          %v5731 = vpack.c.b16 %v5263, %v5259
          %v5732 = vpack.c.b16 %v5264, %v5260
          %v5733 = vpack.c.b16 %v5269, %v5265
          %v5734 = vpack.c.b16 %v5270, %v5266
          %v5735 = vpack.c.b16 %v5271, %v5267
          %v5736 = vpack.c.b16 %v5272, %v5268
          %v5737 = vpack.c.b16 %v5277, %v5273
          %v5738 = vpack.c.b16 %v5278, %v5274
          %v5739 = vpack.c.b16 %v5279, %v5275
          %v5740 = vpack.c.b16 %v5280, %v5276
          %v5741 = vpack.c.b16 %v5285, %v5281
          %v5742 = vpack.c.b16 %v5286, %v5282
          %v5743 = vpack.c.b16 %v5287, %v5283
          %v5744 = vpack.c.b16 %v5288, %v5284
          %v5745 = vpack.c.b16 %v5293, %v5289
          %v5746 = vpack.c.b16 %v5294, %v5290
          %v5747 = vpack.c.b16 %v5295, %v5291
          %v5748 = vpack.c.b16 %v5296, %v5292
          %v5749 = vpack.c.b16 %v5301, %v5297
          %v5750 = vpack.c.b16 %v5302, %v5298
          %v5751 = vpack.c.b16 %v5303, %v5299
          %v5752 = vpack.c.b16 %v5304, %v5300
          %v5753 = vpack.c.b16 %v5309, %v5305
          %v5754 = vpack.c.b16 %v5310, %v5306
          %v5755 = vpack.c.b16 %v5311, %v5307
          %v5756 = vpack.c.b16 %v5312, %v5308
          %v5757 = vpack.c.b16 %v5317, %v5313
          %v5758 = vpack.c.b16 %v5318, %v5314
          %v5759 = vpack.c.b16 %v5319, %v5315
          %v5760 = vpack.c.b16 %v5320, %v5316
          %v5761 = vpack.c.b16 %v5325, %v5321
          %v5762 = vpack.c.b16 %v5326, %v5322
          %v5763 = vpack.c.b16 %v5327, %v5323
          %v5764 = vpack.c.b16 %v5328, %v5324
          %v5765 = vpack.c.b16 %v5333, %v5329
          %v5766 = vpack.c.b16 %v5334, %v5330
          %v5767 = vpack.c.b16 %v5335, %v5331
          %v5768 = vpack.c.b16 %v5336, %v5332
          %v5769 = vpack.c.b16 %v5341, %v5337
          %v5770 = vpack.c.b16 %v5342, %v5338
          %v5771 = vpack.c.b16 %v5343, %v5339
          %v5772 = vpack.c.b16 %v5344, %v5340
          %v5773 = vpack.c.b16 %v5349, %v5345
          %v5774 = vpack.c.b16 %v5350, %v5346
          %v5775 = vpack.c.b16 %v5351, %v5347
          %v5776 = vpack.c.b16 %v5352, %v5348
          %v5777 = vpack.c.b16 %v5357, %v5353
          %v5778 = vpack.c.b16 %v5358, %v5354
          %v5779 = vpack.c.b16 %v5359, %v5355
          %v5780 = vpack.c.b16 %v5360, %v5356
          %v5781 = vpack.c.b16 %v5365, %v5361
          %v5782 = vpack.c.b16 %v5366, %v5362
          %v5783 = vpack.c.b16 %v5367, %v5363
          %v5784 = vpack.c.b16 %v5368, %v5364
          %v5785 = vpack.c.b16 %v5373, %v5369
          %v5786 = vpack.c.b16 %v5374, %v5370
          %v5787 = vpack.c.b16 %v5375, %v5371
          %v5788 = vpack.c.b16 %v5376, %v5372
          %v5789 = vpack.c.b16 %v5381, %v5377
          %v5790 = vpack.c.b16 %v5382, %v5378
          %v5791 = vpack.c.b16 %v5383, %v5379
          %v5792 = vpack.c.b16 %v5384, %v5380
          %v5793 = vpack.c.b16 %v5389, %v5385
          %v5794 = vpack.c.b16 %v5390, %v5386
          %v5795 = vpack.c.b16 %v5391, %v5387
          %v5796 = vpack.c.b16 %v5392, %v5388
          %v5797 = vpack.c.b16 %v5397, %v5393
          %v5798 = vpack.c.b16 %v5398, %v5394
          %v5799 = vpack.c.b16 %v5399, %v5395
          %v5800 = vpack.c.b16 %v5400, %v5396
          %v5801 = vpack.c.b16 %v5405, %v5401
          %v5802 = vpack.c.b16 %v5406, %v5402
          %v5803 = vpack.c.b16 %v5407, %v5403
          %v5804 = vpack.c.b16 %v5408, %v5404
          %v5805 = vpack.c.b16 %v5413, %v5409
          %v5806 = vpack.c.b16 %v5414, %v5410
          %v5807 = vpack.c.b16 %v5415, %v5411
          %v5808 = vpack.c.b16 %v5416, %v5412
          %v5809 = vpack.c.b16 %v5421, %v5417
          %v5810 = vpack.c.b16 %v5422, %v5418
          %v5811 = vpack.c.b16 %v5423, %v5419
          %v5812 = vpack.c.b16 %v5424, %v5420
          %v5813 = vpack.c.b16 %v5429, %v5425
          %v5814 = vpack.c.b16 %v5430, %v5426
          %v5815 = vpack.c.b16 %v5431, %v5427
          %v5816 = vpack.c.b16 %v5432, %v5428
          %v5817 = vpack.c.b16 %v5437, %v5433
          %v5818 = vpack.c.b16 %v5438, %v5434
          %v5819 = vpack.c.b16 %v5439, %v5435
          %v5820 = vpack.c.b16 %v5440, %v5436
          %v5821 = vpack.c.b16 %v5445, %v5441
          %v5822 = vpack.c.b16 %v5446, %v5442
          %v5823 = vpack.c.b16 %v5447, %v5443
          %v5824 = vpack.c.b16 %v5448, %v5444
          %v5825 = vpack.c.b16 %v5453, %v5449
          %v5826 = vpack.c.b16 %v5454, %v5450
          %v5827 = vpack.c.b16 %v5455, %v5451
          %v5828 = vpack.c.b16 %v5456, %v5452
          %v5829 = vpack.c.b16 %v5461, %v5457
          %v5830 = vpack.c.b16 %v5462, %v5458
          %v5831 = vpack.c.b16 %v5463, %v5459
          %v5832 = vpack.c.b16 %v5464, %v5460
          %v5833 = vpack.c.b16 %v5469, %v5465
          %v5834 = vpack.c.b16 %v5470, %v5466
          %v5835 = vpack.c.b16 %v5471, %v5467
          %v5836 = vpack.c.b16 %v5472, %v5468
          %v5837 = vpack.c.b16 %v5477, %v5473
          %v5838 = vpack.c.b16 %v5478, %v5474
          %v5839 = vpack.c.b16 %v5479, %v5475
          %v5840 = vpack.c.b16 %v5480, %v5476
          %v5841 = vpack.c.b16 %v5485, %v5481
          %v5842 = vpack.c.b16 %v5486, %v5482
          %v5843 = vpack.c.b16 %v5487, %v5483
          %v5844 = vpack.c.b16 %v5488, %v5484
          %v5845 = vpack.c.b16 %v5493, %v5489
          %v5846 = vpack.c.b16 %v5494, %v5490
          %v5847 = vpack.c.b16 %v5495, %v5491
          %v5848 = vpack.c.b16 %v5496, %v5492
          %v5849 = vpack.c.b16 %v5501, %v5497
          %v5850 = vpack.c.b16 %v5502, %v5498
          %v5851 = vpack.c.b16 %v5503, %v5499
          %v5852 = vpack.c.b16 %v5504, %v5500
          %v5853 = vpack.c.b16 %v5509, %v5505
          %v5854 = vpack.c.b16 %v5510, %v5506
          %v5855 = vpack.c.b16 %v5511, %v5507
          %v5856 = vpack.c.b16 %v5512, %v5508
          %v5857 = vpack.c.b16 %v5517, %v5513
          %v5858 = vpack.c.b16 %v5518, %v5514
          %v5859 = vpack.c.b16 %v5519, %v5515
          %v5860 = vpack.c.b16 %v5520, %v5516
          %v5861 = vpack.c.b16 %v5525, %v5521
          %v5862 = vpack.c.b16 %v5526, %v5522
          %v5863 = vpack.c.b16 %v5527, %v5523
          %v5864 = vpack.c.b16 %v5528, %v5524
          %v5865 = vpack.c.b16 %v5533, %v5529
          %v5866 = vpack.c.b16 %v5534, %v5530
          %v5867 = vpack.c.b16 %v5535, %v5531
          %v5868 = vpack.c.b16 %v5536, %v5532
          %v5869 = vpack.c.b16 %v5541, %v5537
          %v5870 = vpack.c.b16 %v5542, %v5538
          %v5871 = vpack.c.b16 %v5543, %v5539
          %v5872 = vpack.c.b16 %v5544, %v5540
          %v5873 = vpack.c.b16 %v5549, %v5545
          %v5874 = vpack.c.b16 %v5550, %v5546
          %v5875 = vpack.c.b16 %v5551, %v5547
          %v5876 = vpack.c.b16 %v5552, %v5548
          %v5877 = vpack.c.b16 %v5557, %v5553
          %v5878 = vpack.c.b16 %v5558, %v5554
          %v5879 = vpack.c.b16 %v5559, %v5555
          %v5880 = vpack.c.b16 %v5560, %v5556
          %v5881 = vpack.c.b16 %v5565, %v5561
          %v5882 = vpack.c.b16 %v5566, %v5562
          %v5883 = vpack.c.b16 %v5567, %v5563
          %v5884 = vpack.c.b16 %v5568, %v5564
          %v5885 = vpack.c.b16 %v5573, %v5569
          %v5886 = vpack.c.b16 %v5574, %v5570
          %v5887 = vpack.c.b16 %v5575, %v5571
          %v5888 = vpack.c.b16 %v5576, %v5572
          %v5889 = vpack.c.b16 %v5581, %v5577
          %v5890 = vpack.c.b16 %v5582, %v5578
          %v5891 = vpack.c.b16 %v5583, %v5579
          %v5892 = vpack.c.b16 %v5584, %v5580
          %v5893 = vpack.c.b16 %v5589, %v5585
          %v5894 = vpack.c.b16 %v5590, %v5586
          %v5895 = vpack.c.b16 %v5591, %v5587
          %v5896 = vpack.c.b16 %v5592, %v5588
          %v5897 = vpack.c.b16 %v5597, %v5593
          %v5898 = vpack.c.b16 %v5598, %v5594
          %v5899 = vpack.c.b16 %v5599, %v5595
          %v5900 = vpack.c.b16 %v5600, %v5596
          %v5901 = vpack.c.b16 %v5605, %v5601
          %v5902 = vpack.c.b16 %v5606, %v5602
          %v5903 = vpack.c.b16 %v5607, %v5603
          %v5904 = vpack.c.b16 %v5608, %v5604
          %v5905 = vpack.c.b16 %v5613, %v5609
          %v5906 = vpack.c.b16 %v5614, %v5610
          %v5907 = vpack.c.b16 %v5615, %v5611
          %v5908 = vpack.c.b16 %v5616, %v5612
          %v5909 = vpack.c.b16 %v5621, %v5617
          %v5910 = vpack.c.b16 %v5622, %v5618
          %v5911 = vpack.c.b16 %v5623, %v5619
          %v5912 = vpack.c.b16 %v5624, %v5620
          %v5913 = vpack.c.b16 %v5629, %v5625
          %v5914 = vpack.c.b16 %v5630, %v5626
          %v5915 = vpack.c.b16 %v5631, %v5627
          %v5916 = vpack.c.b16 %v5632, %v5628
          %v5917 = vpack.c.b16 %v5637, %v5633
          %v5918 = vpack.c.b16 %v5638, %v5634
          %v5919 = vpack.c.b16 %v5639, %v5635
          %v5920 = vpack.c.b16 %v5640, %v5636
          %v5921 = vpack.c.b16 %v5645, %v5641
          %v5922 = vpack.c.b16 %v5646, %v5642
          %v5923 = vpack.c.b16 %v5647, %v5643
          %v5924 = vpack.c.b16 %v5648, %v5644
          %v5925 = vpack.c.b16 %v5653, %v5649
          %v5926 = vpack.c.b16 %v5654, %v5650
          %v5927 = vpack.c.b16 %v5655, %v5651
          %v5928 = vpack.c.b16 %v5656, %v5652
          %v5929 = vpack.c.b16 %v5661, %v5657
          %v5930 = vpack.c.b16 %v5662, %v5658
          %v5931 = vpack.c.b16 %v5663, %v5659
          %v5932 = vpack.c.b16 %v5664, %v5660
          %v5933 = vpack.c.b16 %v5669, %v5665
          %v5934 = vpack.c.b16 %v5670, %v5666
          %v5935 = vpack.c.b16 %v5671, %v5667
          %v5936 = vpack.c.b16 %v5672, %v5668
          %v5937 = vpack.c.b16 %v5677, %v5673
          %v5938 = vpack.c.b16 %v5678, %v5674
          %v5939 = vpack.c.b16 %v5679, %v5675
          %v5940 = vpack.c.b16 %v5680, %v5676
          %v5941 = vpack.c.b16 %v5685, %v5681
          %v5942 = vpack.c.b16 %v5686, %v5682
          %v5943 = vpack.c.b16 %v5687, %v5683
          %v5944 = vpack.c.b16 %v5688, %v5684
          %6201 = vmatpush.bf16.msra.mxu0 %v5717
          %6202 = vmatpush.bf16.msra.mxu0 %v5713
          %6203 = vmatpush.bf16.msra.mxu0 %v5709
          %6204 = vmatpush.bf16.msra.mxu0 %v5705
          %6205 = vmatpush.bf16.msra.mxu0 %v5701
          %6206 = vmatpush.bf16.msra.mxu0 %v5697
          %6207 = vmatpush.bf16.msra.mxu0 %v5693
          %6208 = vmatpush.bf16.msra.mxu0 %v5689
          %6209 = vmatmul.bf16.gmra.mxu0 %v4647
          %v6210 = vpop.f32.mrf.mxu0
          %v6211 = vadd.f32 %v4913, %v6210
          %v6212 = vpop.f32.mrf.mxu0
          %v6213 = vadd.f32 %v4913, %v6212
          %6214 = vdwg.mxu0
          %6215 = vmatpush.bf16.msra.mxu0 %v5749
          %6216 = vmatpush.bf16.msra.mxu0 %v5745
          %6217 = vmatpush.bf16.msra.mxu0 %v5741
          %6218 = vmatpush.bf16.msra.mxu0 %v5737
          %6219 = vmatpush.bf16.msra.mxu0 %v5733
          %6220 = vmatpush.bf16.msra.mxu0 %v5729
          %6221 = vmatpush.bf16.msra.mxu0 %v5725
          %6222 = vmatpush.bf16.msra.mxu0 %v5721
          %6223 = vmatmul.bf16.gmra.mxu0 %v4648
          %v6224 = vpop.f32.mrf.mxu0
          %v6225 = vadd.f32 %v6211, %v6224
          %v6226 = vpop.f32.mrf.mxu0
          %v6227 = vadd.f32 %v6213, %v6226
          %6228 = vdwg.mxu0
          %6229 = vmatpush.bf16.msra.mxu0 %v5781
          %6230 = vmatpush.bf16.msra.mxu0 %v5777
          %6231 = vmatpush.bf16.msra.mxu0 %v5773
          %6232 = vmatpush.bf16.msra.mxu0 %v5769
          %6233 = vmatpush.bf16.msra.mxu0 %v5765
          %6234 = vmatpush.bf16.msra.mxu0 %v5761
          %6235 = vmatpush.bf16.msra.mxu0 %v5757
          %6236 = vmatpush.bf16.msra.mxu0 %v5753
          %6237 = vmatmul.bf16.gmra.mxu0 %v4649
          %v6238 = vpop.f32.mrf.mxu0
          %v6239 = vadd.f32 %v6225, %v6238
          %v6240 = vpop.f32.mrf.mxu0
          %v6241 = vadd.f32 %v6227, %v6240
          %6242 = vdwg.mxu0
          %6243 = vmatpush.bf16.msra.mxu0 %v5813
          %6244 = vmatpush.bf16.msra.mxu0 %v5809
          %6245 = vmatpush.bf16.msra.mxu0 %v5805
          %6246 = vmatpush.bf16.msra.mxu0 %v5801
          %6247 = vmatpush.bf16.msra.mxu0 %v5797
          %6248 = vmatpush.bf16.msra.mxu0 %v5793
          %6249 = vmatpush.bf16.msra.mxu0 %v5789
          %6250 = vmatpush.bf16.msra.mxu0 %v5785
          %6251 = vmatmul.bf16.gmra.mxu0 %v4650
          %v6252 = vpop.f32.mrf.mxu0
          %v6253 = vadd.f32 %v6239, %v6252
          %v6254 = vpop.f32.mrf.mxu0
          %v6255 = vadd.f32 %v6241, %v6254
          %6256 = vdwg.mxu0
          %6257 = vmatpush.bf16.msra.mxu0 %v5845
          %6258 = vmatpush.bf16.msra.mxu0 %v5841
          %6259 = vmatpush.bf16.msra.mxu0 %v5837
          %6260 = vmatpush.bf16.msra.mxu0 %v5833
          %6261 = vmatpush.bf16.msra.mxu0 %v5829
          %6262 = vmatpush.bf16.msra.mxu0 %v5825
          %6263 = vmatpush.bf16.msra.mxu0 %v5821
          %6264 = vmatpush.bf16.msra.mxu0 %v5817
          %6265 = vmatmul.bf16.gmra.mxu0 %v4651
          %v6266 = vpop.f32.mrf.mxu0
          %v6267 = vadd.f32 %v6253, %v6266
          %v6268 = vpop.f32.mrf.mxu0
          %v6269 = vadd.f32 %v6255, %v6268
          %6270 = vdwg.mxu0
          %6271 = vmatpush.bf16.msra.mxu0 %v5877
          %6272 = vmatpush.bf16.msra.mxu0 %v5873
          %6273 = vmatpush.bf16.msra.mxu0 %v5869
          %6274 = vmatpush.bf16.msra.mxu0 %v5865
          %6275 = vmatpush.bf16.msra.mxu0 %v5861
          %6276 = vmatpush.bf16.msra.mxu0 %v5857
          %6277 = vmatpush.bf16.msra.mxu0 %v5853
          %6278 = vmatpush.bf16.msra.mxu0 %v5849
          %6279 = vmatmul.bf16.gmra.mxu0 %v4652
          %v6280 = vpop.f32.mrf.mxu0
          %v6281 = vadd.f32 %v6267, %v6280
          %v6282 = vpop.f32.mrf.mxu0
          %v6283 = vadd.f32 %v6269, %v6282
          %6284 = vdwg.mxu0
          %6285 = vmatpush.bf16.msra.mxu0 %v5909
          %6286 = vmatpush.bf16.msra.mxu0 %v5905
          %6287 = vmatpush.bf16.msra.mxu0 %v5901
          %6288 = vmatpush.bf16.msra.mxu0 %v5897
          %6289 = vmatpush.bf16.msra.mxu0 %v5893
          %6290 = vmatpush.bf16.msra.mxu0 %v5889
          %6291 = vmatpush.bf16.msra.mxu0 %v5885
          %6292 = vmatpush.bf16.msra.mxu0 %v5881
          %6293 = vmatmul.bf16.gmra.mxu0 %v4653
          %v6294 = vpop.f32.mrf.mxu0
          %v6295 = vadd.f32 %v6281, %v6294
          %v6296 = vpop.f32.mrf.mxu0
          %v6297 = vadd.f32 %v6283, %v6296
          %6298 = vdwg.mxu0
          %6299 = vmatpush.bf16.msra.mxu0 %v5941
          %6300 = vmatpush.bf16.msra.mxu0 %v5937
          %6301 = vmatpush.bf16.msra.mxu0 %v5933
          %6302 = vmatpush.bf16.msra.mxu0 %v5929
          %6303 = vmatpush.bf16.msra.mxu0 %v5925
          %6304 = vmatpush.bf16.msra.mxu0 %v5921
          %6305 = vmatpush.bf16.msra.mxu0 %v5917
          %6306 = vmatpush.bf16.msra.mxu0 %v5913
          %6307 = vmatmul.bf16.gmra.mxu0 %v4654
          %v6308 = vpop.f32.mrf.mxu0
          %v6309 = vadd.f32 %v6295, %v6308
          %v6310 = vpop.f32.mrf.mxu0
          %v6311 = vadd.f32 %v6297, %v6310
          %6312 = vdwg.mxu0
          %6313 = vmatpush.bf16.msra.mxu0 %v5718
          %6314 = vmatpush.bf16.msra.mxu0 %v5714
          %6315 = vmatpush.bf16.msra.mxu0 %v5710
          %6316 = vmatpush.bf16.msra.mxu0 %v5706
          %6317 = vmatpush.bf16.msra.mxu0 %v5702
          %6318 = vmatpush.bf16.msra.mxu0 %v5698
          %6319 = vmatpush.bf16.msra.mxu0 %v5694
          %6320 = vmatpush.bf16.msra.mxu0 %v5690
          %6321 = vmatmul.bf16.gmra.mxu0 %v4647
          %v6322 = vpop.f32.mrf.mxu0
          %v6323 = vadd.f32 %v4914, %v6322
          %v6324 = vpop.f32.mrf.mxu0
          %v6325 = vadd.f32 %v4914, %v6324
          %6326 = vdwg.mxu0
          %6327 = vmatpush.bf16.msra.mxu0 %v5750
          %6328 = vmatpush.bf16.msra.mxu0 %v5746
          %6329 = vmatpush.bf16.msra.mxu0 %v5742
          %6330 = vmatpush.bf16.msra.mxu0 %v5738
          %6331 = vmatpush.bf16.msra.mxu0 %v5734
          %6332 = vmatpush.bf16.msra.mxu0 %v5730
          %6333 = vmatpush.bf16.msra.mxu0 %v5726
          %6334 = vmatpush.bf16.msra.mxu0 %v5722
          %6335 = vmatmul.bf16.gmra.mxu0 %v4648
          %v6336 = vpop.f32.mrf.mxu0
          %v6337 = vadd.f32 %v6323, %v6336
          %v6338 = vpop.f32.mrf.mxu0
          %v6339 = vadd.f32 %v6325, %v6338
          %6340 = vdwg.mxu0
          %6341 = vmatpush.bf16.msra.mxu0 %v5782
          %6342 = vmatpush.bf16.msra.mxu0 %v5778
          %6343 = vmatpush.bf16.msra.mxu0 %v5774
          %6344 = vmatpush.bf16.msra.mxu0 %v5770
          %6345 = vmatpush.bf16.msra.mxu0 %v5766
          %6346 = vmatpush.bf16.msra.mxu0 %v5762
          %6347 = vmatpush.bf16.msra.mxu0 %v5758
          %6348 = vmatpush.bf16.msra.mxu0 %v5754
          %6349 = vmatmul.bf16.gmra.mxu0 %v4649
          %v6350 = vpop.f32.mrf.mxu0
          %v6351 = vadd.f32 %v6337, %v6350
          %v6352 = vpop.f32.mrf.mxu0
          %v6353 = vadd.f32 %v6339, %v6352
          %6354 = vdwg.mxu0
          %6355 = vmatpush.bf16.msra.mxu0 %v5814
          %6356 = vmatpush.bf16.msra.mxu0 %v5810
          %6357 = vmatpush.bf16.msra.mxu0 %v5806
          %6358 = vmatpush.bf16.msra.mxu0 %v5802
          %6359 = vmatpush.bf16.msra.mxu0 %v5798
          %6360 = vmatpush.bf16.msra.mxu0 %v5794
          %6361 = vmatpush.bf16.msra.mxu0 %v5790
          %6362 = vmatpush.bf16.msra.mxu0 %v5786
          %6363 = vmatmul.bf16.gmra.mxu0 %v4650
          %v6364 = vpop.f32.mrf.mxu0
          %v6365 = vadd.f32 %v6351, %v6364
          %v6366 = vpop.f32.mrf.mxu0
          %v6367 = vadd.f32 %v6353, %v6366
          %6368 = vdwg.mxu0
          %6369 = vmatpush.bf16.msra.mxu0 %v5846
          %6370 = vmatpush.bf16.msra.mxu0 %v5842
          %6371 = vmatpush.bf16.msra.mxu0 %v5838
          %6372 = vmatpush.bf16.msra.mxu0 %v5834
          %6373 = vmatpush.bf16.msra.mxu0 %v5830
          %6374 = vmatpush.bf16.msra.mxu0 %v5826
          %6375 = vmatpush.bf16.msra.mxu0 %v5822
          %6376 = vmatpush.bf16.msra.mxu0 %v5818
          %6377 = vmatmul.bf16.gmra.mxu0 %v4651
          %v6378 = vpop.f32.mrf.mxu0
          %v6379 = vadd.f32 %v6365, %v6378
          %v6380 = vpop.f32.mrf.mxu0
          %v6381 = vadd.f32 %v6367, %v6380
          %6382 = vdwg.mxu0
          %6383 = vmatpush.bf16.msra.mxu0 %v5878
          %6384 = vmatpush.bf16.msra.mxu0 %v5874
          %6385 = vmatpush.bf16.msra.mxu0 %v5870
          %6386 = vmatpush.bf16.msra.mxu0 %v5866
          %6387 = vmatpush.bf16.msra.mxu0 %v5862
          %6388 = vmatpush.bf16.msra.mxu0 %v5858
          %6389 = vmatpush.bf16.msra.mxu0 %v5854
          %6390 = vmatpush.bf16.msra.mxu0 %v5850
          %6391 = vmatmul.bf16.gmra.mxu0 %v4652
          %v6392 = vpop.f32.mrf.mxu0
          %v6393 = vadd.f32 %v6379, %v6392
          %v6394 = vpop.f32.mrf.mxu0
          %v6395 = vadd.f32 %v6381, %v6394
          %6396 = vdwg.mxu0
          %6397 = vmatpush.bf16.msra.mxu0 %v5910
          %6398 = vmatpush.bf16.msra.mxu0 %v5906
          %6399 = vmatpush.bf16.msra.mxu0 %v5902
          %6400 = vmatpush.bf16.msra.mxu0 %v5898
          %6401 = vmatpush.bf16.msra.mxu0 %v5894
          %6402 = vmatpush.bf16.msra.mxu0 %v5890
          %6403 = vmatpush.bf16.msra.mxu0 %v5886
          %6404 = vmatpush.bf16.msra.mxu0 %v5882
          %6405 = vmatmul.bf16.gmra.mxu0 %v4653
          %v6406 = vpop.f32.mrf.mxu0
          %v6407 = vadd.f32 %v6393, %v6406
          %v6408 = vpop.f32.mrf.mxu0
          %v6409 = vadd.f32 %v6395, %v6408
          %6410 = vdwg.mxu0
          %6411 = vmatpush.bf16.msra.mxu0 %v5942
          %6412 = vmatpush.bf16.msra.mxu0 %v5938
          %6413 = vmatpush.bf16.msra.mxu0 %v5934
          %6414 = vmatpush.bf16.msra.mxu0 %v5930
          %6415 = vmatpush.bf16.msra.mxu0 %v5926
          %6416 = vmatpush.bf16.msra.mxu0 %v5922
          %6417 = vmatpush.bf16.msra.mxu0 %v5918
          %6418 = vmatpush.bf16.msra.mxu0 %v5914
          %6419 = vmatmul.bf16.gmra.mxu0 %v4654
          %v6420 = vpop.f32.mrf.mxu0
          %v6421 = vadd.f32 %v6407, %v6420
          %v6422 = vpop.f32.mrf.mxu0
          %v6423 = vadd.f32 %v6409, %v6422
          %6424 = vdwg.mxu0
          %6425 = vmatpush.bf16.msra.mxu0 %v5719
          %6426 = vmatpush.bf16.msra.mxu0 %v5715
          %6427 = vmatpush.bf16.msra.mxu0 %v5711
          %6428 = vmatpush.bf16.msra.mxu0 %v5707
          %6429 = vmatpush.bf16.msra.mxu0 %v5703
          %6430 = vmatpush.bf16.msra.mxu0 %v5699
          %6431 = vmatpush.bf16.msra.mxu0 %v5695
          %6432 = vmatpush.bf16.msra.mxu0 %v5691
          %6433 = vmatmul.bf16.gmra.mxu0 %v4647
          %v6434 = vpop.f32.mrf.mxu0
          %v6435 = vadd.f32 %v4915, %v6434
          %v6436 = vpop.f32.mrf.mxu0
          %v6437 = vadd.f32 %v4915, %v6436
          %6438 = vdwg.mxu0
          %6439 = vmatpush.bf16.msra.mxu0 %v5751
          %6440 = vmatpush.bf16.msra.mxu0 %v5747
          %6441 = vmatpush.bf16.msra.mxu0 %v5743
          %6442 = vmatpush.bf16.msra.mxu0 %v5739
          %6443 = vmatpush.bf16.msra.mxu0 %v5735
          %6444 = vmatpush.bf16.msra.mxu0 %v5731
          %6445 = vmatpush.bf16.msra.mxu0 %v5727
          %6446 = vmatpush.bf16.msra.mxu0 %v5723
          %6447 = vmatmul.bf16.gmra.mxu0 %v4648
          %v6448 = vpop.f32.mrf.mxu0
          %v6449 = vadd.f32 %v6435, %v6448
          %v6450 = vpop.f32.mrf.mxu0
          %v6451 = vadd.f32 %v6437, %v6450
          %6452 = vdwg.mxu0
          %6453 = vmatpush.bf16.msra.mxu0 %v5783
          %6454 = vmatpush.bf16.msra.mxu0 %v5779
          %6455 = vmatpush.bf16.msra.mxu0 %v5775
          %6456 = vmatpush.bf16.msra.mxu0 %v5771
          %6457 = vmatpush.bf16.msra.mxu0 %v5767
          %6458 = vmatpush.bf16.msra.mxu0 %v5763
          %6459 = vmatpush.bf16.msra.mxu0 %v5759
          %6460 = vmatpush.bf16.msra.mxu0 %v5755
          %6461 = vmatmul.bf16.gmra.mxu0 %v4649
          %v6462 = vpop.f32.mrf.mxu0
          %v6463 = vadd.f32 %v6449, %v6462
          %v6464 = vpop.f32.mrf.mxu0
          %v6465 = vadd.f32 %v6451, %v6464
          %6466 = vdwg.mxu0
          %6467 = vmatpush.bf16.msra.mxu0 %v5815
          %6468 = vmatpush.bf16.msra.mxu0 %v5811
          %6469 = vmatpush.bf16.msra.mxu0 %v5807
          %6470 = vmatpush.bf16.msra.mxu0 %v5803
          %6471 = vmatpush.bf16.msra.mxu0 %v5799
          %6472 = vmatpush.bf16.msra.mxu0 %v5795
          %6473 = vmatpush.bf16.msra.mxu0 %v5791
          %6474 = vmatpush.bf16.msra.mxu0 %v5787
          %6475 = vmatmul.bf16.gmra.mxu0 %v4650
          %v6476 = vpop.f32.mrf.mxu0
          %v6477 = vadd.f32 %v6463, %v6476
          %v6478 = vpop.f32.mrf.mxu0
          %v6479 = vadd.f32 %v6465, %v6478
          %6480 = vdwg.mxu0
          %6481 = vmatpush.bf16.msra.mxu0 %v5847
          %6482 = vmatpush.bf16.msra.mxu0 %v5843
          %6483 = vmatpush.bf16.msra.mxu0 %v5839
          %6484 = vmatpush.bf16.msra.mxu0 %v5835
          %6485 = vmatpush.bf16.msra.mxu0 %v5831
          %6486 = vmatpush.bf16.msra.mxu0 %v5827
          %6487 = vmatpush.bf16.msra.mxu0 %v5823
          %6488 = vmatpush.bf16.msra.mxu0 %v5819
          %6489 = vmatmul.bf16.gmra.mxu0 %v4651
          %v6490 = vpop.f32.mrf.mxu0
          %v6491 = vadd.f32 %v6477, %v6490
          %v6492 = vpop.f32.mrf.mxu0
          %v6493 = vadd.f32 %v6479, %v6492
          %6494 = vdwg.mxu0
          %6495 = vmatpush.bf16.msra.mxu0 %v5879
          %6496 = vmatpush.bf16.msra.mxu0 %v5875
          %6497 = vmatpush.bf16.msra.mxu0 %v5871
          %6498 = vmatpush.bf16.msra.mxu0 %v5867
          %6499 = vmatpush.bf16.msra.mxu0 %v5863
          %6500 = vmatpush.bf16.msra.mxu0 %v5859
          %6501 = vmatpush.bf16.msra.mxu0 %v5855
          %6502 = vmatpush.bf16.msra.mxu0 %v5851
          %6503 = vmatmul.bf16.gmra.mxu0 %v4652
          %v6504 = vpop.f32.mrf.mxu0
          %v6505 = vadd.f32 %v6491, %v6504
          %v6506 = vpop.f32.mrf.mxu0
          %v6507 = vadd.f32 %v6493, %v6506
          %6508 = vdwg.mxu0
          %6509 = vmatpush.bf16.msra.mxu0 %v5911
          %6510 = vmatpush.bf16.msra.mxu0 %v5907
          %6511 = vmatpush.bf16.msra.mxu0 %v5903
          %6512 = vmatpush.bf16.msra.mxu0 %v5899
          %6513 = vmatpush.bf16.msra.mxu0 %v5895
          %6514 = vmatpush.bf16.msra.mxu0 %v5891
          %6515 = vmatpush.bf16.msra.mxu0 %v5887
          %6516 = vmatpush.bf16.msra.mxu0 %v5883
          %6517 = vmatmul.bf16.gmra.mxu0 %v4653
          %v6518 = vpop.f32.mrf.mxu0
          %v6519 = vadd.f32 %v6505, %v6518
          %v6520 = vpop.f32.mrf.mxu0
          %v6521 = vadd.f32 %v6507, %v6520
          %6522 = vdwg.mxu0
          %6523 = vmatpush.bf16.msra.mxu0 %v5943
          %6524 = vmatpush.bf16.msra.mxu0 %v5939
          %6525 = vmatpush.bf16.msra.mxu0 %v5935
          %6526 = vmatpush.bf16.msra.mxu0 %v5931
          %6527 = vmatpush.bf16.msra.mxu0 %v5927
          %6528 = vmatpush.bf16.msra.mxu0 %v5923
          %6529 = vmatpush.bf16.msra.mxu0 %v5919
          %6530 = vmatpush.bf16.msra.mxu0 %v5915
          %6531 = vmatmul.bf16.gmra.mxu0 %v4654
          %v6532 = vpop.f32.mrf.mxu0
          %v6533 = vadd.f32 %v6519, %v6532
          %v6534 = vpop.f32.mrf.mxu0
          %v6535 = vadd.f32 %v6521, %v6534
          %6536 = vdwg.mxu0
          %6537 = vmatpush.bf16.msra.mxu0 %v5720
          %6538 = vmatpush.bf16.msra.mxu0 %v5716
          %6539 = vmatpush.bf16.msra.mxu0 %v5712
          %6540 = vmatpush.bf16.msra.mxu0 %v5708
          %6541 = vmatpush.bf16.msra.mxu0 %v5704
          %6542 = vmatpush.bf16.msra.mxu0 %v5700
          %6543 = vmatpush.bf16.msra.mxu0 %v5696
          %6544 = vmatpush.bf16.msra.mxu0 %v5692
          %6545 = vmatmul.bf16.gmra.mxu0 %v4647
          %v6546 = vpop.f32.mrf.mxu0
          %v6547 = vadd.f32 %v4916, %v6546
          %v6548 = vpop.f32.mrf.mxu0
          %v6549 = vadd.f32 %v4916, %v6548
          %6550 = vdwg.mxu0
          %6551 = vmatpush.bf16.msra.mxu0 %v5752
          %6552 = vmatpush.bf16.msra.mxu0 %v5748
          %6553 = vmatpush.bf16.msra.mxu0 %v5744
          %6554 = vmatpush.bf16.msra.mxu0 %v5740
          %6555 = vmatpush.bf16.msra.mxu0 %v5736
          %6556 = vmatpush.bf16.msra.mxu0 %v5732
          %6557 = vmatpush.bf16.msra.mxu0 %v5728
          %6558 = vmatpush.bf16.msra.mxu0 %v5724
          %6559 = vmatmul.bf16.gmra.mxu0 %v4648
          %v6560 = vpop.f32.mrf.mxu0
          %v6561 = vadd.f32 %v6547, %v6560
          %v6562 = vpop.f32.mrf.mxu0
          %v6563 = vadd.f32 %v6549, %v6562
          %6564 = vdwg.mxu0
          %6565 = vmatpush.bf16.msra.mxu0 %v5784
          %6566 = vmatpush.bf16.msra.mxu0 %v5780
          %6567 = vmatpush.bf16.msra.mxu0 %v5776
          %6568 = vmatpush.bf16.msra.mxu0 %v5772
          %6569 = vmatpush.bf16.msra.mxu0 %v5768
          %6570 = vmatpush.bf16.msra.mxu0 %v5764
          %6571 = vmatpush.bf16.msra.mxu0 %v5760
          %6572 = vmatpush.bf16.msra.mxu0 %v5756
          %6573 = vmatmul.bf16.gmra.mxu0 %v4649
          %v6574 = vpop.f32.mrf.mxu0
          %v6575 = vadd.f32 %v6561, %v6574
          %v6576 = vpop.f32.mrf.mxu0
          %v6577 = vadd.f32 %v6563, %v6576
          %6578 = vdwg.mxu0
          %6579 = vmatpush.bf16.msra.mxu0 %v5816
          %6580 = vmatpush.bf16.msra.mxu0 %v5812
          %6581 = vmatpush.bf16.msra.mxu0 %v5808
          %6582 = vmatpush.bf16.msra.mxu0 %v5804
          %6583 = vmatpush.bf16.msra.mxu0 %v5800
          %6584 = vmatpush.bf16.msra.mxu0 %v5796
          %6585 = vmatpush.bf16.msra.mxu0 %v5792
          %6586 = vmatpush.bf16.msra.mxu0 %v5788
          %6587 = vmatmul.bf16.gmra.mxu0 %v4650
          %v6588 = vpop.f32.mrf.mxu0
          %v6589 = vadd.f32 %v6575, %v6588
          %v6590 = vpop.f32.mrf.mxu0
          %v6591 = vadd.f32 %v6577, %v6590
          %6592 = vdwg.mxu0
          %6593 = vmatpush.bf16.msra.mxu0 %v5848
          %6594 = vmatpush.bf16.msra.mxu0 %v5844
          %6595 = vmatpush.bf16.msra.mxu0 %v5840
          %6596 = vmatpush.bf16.msra.mxu0 %v5836
          %6597 = vmatpush.bf16.msra.mxu0 %v5832
          %6598 = vmatpush.bf16.msra.mxu0 %v5828
          %6599 = vmatpush.bf16.msra.mxu0 %v5824
          %6600 = vmatpush.bf16.msra.mxu0 %v5820
          %6601 = vmatmul.bf16.gmra.mxu0 %v4651
          %v6602 = vpop.f32.mrf.mxu0
          %v6603 = vadd.f32 %v6589, %v6602
          %v6604 = vpop.f32.mrf.mxu0
          %v6605 = vadd.f32 %v6591, %v6604
          %6606 = vdwg.mxu0
          %6607 = vmatpush.bf16.msra.mxu0 %v5880
          %6608 = vmatpush.bf16.msra.mxu0 %v5876
          %6609 = vmatpush.bf16.msra.mxu0 %v5872
          %6610 = vmatpush.bf16.msra.mxu0 %v5868
          %6611 = vmatpush.bf16.msra.mxu0 %v5864
          %6612 = vmatpush.bf16.msra.mxu0 %v5860
          %6613 = vmatpush.bf16.msra.mxu0 %v5856
          %6614 = vmatpush.bf16.msra.mxu0 %v5852
          %6615 = vmatmul.bf16.gmra.mxu0 %v4652
          %v6616 = vpop.f32.mrf.mxu0
          %v6617 = vadd.f32 %v6603, %v6616
          %v6618 = vpop.f32.mrf.mxu0
          %v6619 = vadd.f32 %v6605, %v6618
          %6620 = vdwg.mxu0
          %6621 = vmatpush.bf16.msra.mxu0 %v5912
          %6622 = vmatpush.bf16.msra.mxu0 %v5908
          %6623 = vmatpush.bf16.msra.mxu0 %v5904
          %6624 = vmatpush.bf16.msra.mxu0 %v5900
          %6625 = vmatpush.bf16.msra.mxu0 %v5896
          %6626 = vmatpush.bf16.msra.mxu0 %v5892
          %6627 = vmatpush.bf16.msra.mxu0 %v5888
          %6628 = vmatpush.bf16.msra.mxu0 %v5884
          %6629 = vmatmul.bf16.gmra.mxu0 %v4653
          %v6630 = vpop.f32.mrf.mxu0
          %v6631 = vadd.f32 %v6617, %v6630
          %v6632 = vpop.f32.mrf.mxu0
          %v6633 = vadd.f32 %v6619, %v6632
          %6634 = vdwg.mxu0
          %6635 = vmatpush.bf16.msra.mxu0 %v5944
          %6636 = vmatpush.bf16.msra.mxu0 %v5940
          %6637 = vmatpush.bf16.msra.mxu0 %v5936
          %6638 = vmatpush.bf16.msra.mxu0 %v5932
          %6639 = vmatpush.bf16.msra.mxu0 %v5928
          %6640 = vmatpush.bf16.msra.mxu0 %v5924
          %6641 = vmatpush.bf16.msra.mxu0 %v5920
          %6642 = vmatpush.bf16.msra.mxu0 %v5916
          %6643 = vmatmul.bf16.gmra.mxu0 %v4654
          %v6644 = vpop.f32.mrf.mxu0
          %v6645 = vadd.f32 %v6631, %v6644
          %v6646 = vpop.f32.mrf.mxu0
          %v6647 = vadd.f32 %v6633, %v6646
          %6648 = vdwg.mxu0
          %v6649 = vmax.f32 %v6309, 0.0
          %v6650 = vmax.f32 %v6421, 0.0
          %v6651 = vmax.f32 %v6533, 0.0
          %v6652 = vmax.f32 %v6645, 0.0
          %v6653 = vmax.f32 %v6311, 0.0
          %v6654 = vmax.f32 %v6423, 0.0
          %v6655 = vmax.f32 %v6535, 0.0
          %v6656 = vmax.f32 %v6647, 0.0
          %v6657 = vpack.c.bf16 %v6653, %v6649
          %v6658 = vpack.c.bf16 %v6654, %v6650
          %v6659 = vpack.c.bf16 %v6655, %v6651
          %v6660 = vpack.c.bf16 %v6656, %v6652
          %v6661 = vld [vmem:[#allocation12] sm:$0xf]
          %v6662 = vld [vmem:[#allocation12 + $0x4] sm:$0xf]
          %v6663 = vld [vmem:[#allocation12 + $0x8] sm:$0xf]
          %v6664 = vld [vmem:[#allocation12 + $0xc] sm:$0xf]
          %v6665 = vld [vmem:[#allocation12 + $0x10] sm:$0xf]
          %v6666 = vld [vmem:[#allocation12 + $0x14] sm:$0xf]
          %v6667 = vld [vmem:[#allocation12 + $0x18] sm:$0xf]
          %v6668 = vld [vmem:[#allocation12 + $0x1c] sm:$0xf]
          %v6669 = vld [vmem:[#allocation12 + $0x20] sm:$0xf]
          %v6670 = vld [vmem:[#allocation12 + $0x24] sm:$0xf]
          %v6671 = vld [vmem:[#allocation12 + $0x28] sm:$0xf]
          %v6672 = vld [vmem:[#allocation12 + $0x2c] sm:$0xf]
          %v6673 = vld [vmem:[#allocation12 + $0x30] sm:$0xf]
          %v6674 = vld [vmem:[#allocation12 + $0x34] sm:$0xf]
          %v6675 = vld [vmem:[#allocation12 + $0x38] sm:$0xf]
          %v6676 = vld [vmem:[#allocation12 + $0x3c] sm:$0xf]
          %v6677 = vld [vmem:[#allocation12 + $0x40] sm:$0xf]
          %v6678 = vld [vmem:[#allocation12 + $0x44] sm:$0xf]
          %v6679 = vld [vmem:[#allocation12 + $0x48] sm:$0xf]
          %v6680 = vld [vmem:[#allocation12 + $0x4c] sm:$0xf]
          %v6681 = vld [vmem:[#allocation12 + $0x50] sm:$0xf]
          %v6682 = vld [vmem:[#allocation12 + $0x54] sm:$0xf]
          %v6683 = vld [vmem:[#allocation12 + $0x58] sm:$0xf]
          %v6684 = vld [vmem:[#allocation12 + $0x5c] sm:$0xf]
          %v6685 = vld [vmem:[#allocation12 + $0x60] sm:$0xf]
          %v6686 = vld [vmem:[#allocation12 + $0x64] sm:$0xf]
          %v6687 = vld [vmem:[#allocation12 + $0x68] sm:$0xf]
          %v6688 = vld [vmem:[#allocation12 + $0x6c] sm:$0xf]
          %v6689 = vld [vmem:[#allocation12 + $0x70] sm:$0xf]
          %v6690 = vld [vmem:[#allocation12 + $0x74] sm:$0xf]
          %v6691 = vld [vmem:[#allocation12 + $0x78] sm:$0xf]
          %v6692 = vld [vmem:[#allocation12 + $0x7c] sm:$0xf]
          %v6693 = vld [vmem:[#allocation12 + $0x80] sm:$0xf]
          %v6694 = vld [vmem:[#allocation12 + $0x84] sm:$0xf]
          %v6695 = vld [vmem:[#allocation12 + $0x88] sm:$0xf]
          %v6696 = vld [vmem:[#allocation12 + $0x8c] sm:$0xf]
          %v6697 = vld [vmem:[#allocation12 + $0x90] sm:$0xf]
          %v6698 = vld [vmem:[#allocation12 + $0x94] sm:$0xf]
          %v6699 = vld [vmem:[#allocation12 + $0x98] sm:$0xf]
          %v6700 = vld [vmem:[#allocation12 + $0x9c] sm:$0xf]
          %v6701 = vld [vmem:[#allocation12 + $0xa0] sm:$0xf]
          %v6702 = vld [vmem:[#allocation12 + $0xa4] sm:$0xf]
          %v6703 = vld [vmem:[#allocation12 + $0xa8] sm:$0xf]
          %v6704 = vld [vmem:[#allocation12 + $0xac] sm:$0xf]
          %v6705 = vld [vmem:[#allocation12 + $0xb0] sm:$0xf]
          %v6706 = vld [vmem:[#allocation12 + $0xb4] sm:$0xf]
          %v6707 = vld [vmem:[#allocation12 + $0xb8] sm:$0xf]
          %v6708 = vld [vmem:[#allocation12 + $0xbc] sm:$0xf]
          %v6709 = vld [vmem:[#allocation12 + $0xc0] sm:$0xf]
          %v6710 = vld [vmem:[#allocation12 + $0xc4] sm:$0xf]
          %v6711 = vld [vmem:[#allocation12 + $0xc8] sm:$0xf]
          %v6712 = vld [vmem:[#allocation12 + $0xcc] sm:$0xf]
          %v6713 = vld [vmem:[#allocation12 + $0xd0] sm:$0xf]
          %v6714 = vld [vmem:[#allocation12 + $0xd4] sm:$0xf]
          %v6715 = vld [vmem:[#allocation12 + $0xd8] sm:$0xf]
          %v6716 = vld [vmem:[#allocation12 + $0xdc] sm:$0xf]
          %v6717 = vld [vmem:[#allocation12 + $0xe0] sm:$0xf]
          %v6718 = vld [vmem:[#allocation12 + $0xe4] sm:$0xf]
          %v6719 = vld [vmem:[#allocation12 + $0xe8] sm:$0xf]
          %v6720 = vld [vmem:[#allocation12 + $0xec] sm:$0xf]
          %v6721 = vld [vmem:[#allocation12 + $0xf0] sm:$0xf]
          %v6722 = vld [vmem:[#allocation12 + $0xf4] sm:$0xf]
          %v6723 = vld [vmem:[#allocation12 + $0xf8] sm:$0xf]
          %v6724 = vld [vmem:[#allocation12 + $0xfc] sm:$0xf]
          %v6725 = vld [vmem:[#allocation14] sm:$0x1]
          %v6727 = vperm.slane %v6725, 0
          %v6793 = vunpack.c.l.b16 %v6661
          %v6794 = vunpack.c.l.b16 %v6662
          %v6795 = vunpack.c.l.b16 %v6663
          %v6796 = vunpack.c.l.b16 %v6664
          %v6797 = vunpack.c.l.b16 %v6665
          %v6798 = vunpack.c.l.b16 %v6666
          %v6799 = vunpack.c.l.b16 %v6667
          %v6800 = vunpack.c.l.b16 %v6668
          %v6801 = vunpack.c.l.b16 %v6669
          %v6802 = vunpack.c.l.b16 %v6670
          %v6803 = vunpack.c.l.b16 %v6671
          %v6804 = vunpack.c.l.b16 %v6672
          %v6805 = vunpack.c.l.b16 %v6673
          %v6806 = vunpack.c.l.b16 %v6674
          %v6807 = vunpack.c.l.b16 %v6675
          %v6808 = vunpack.c.l.b16 %v6676
          %v6809 = vunpack.c.l.b16 %v6677
          %v6810 = vunpack.c.l.b16 %v6678
          %v6811 = vunpack.c.l.b16 %v6679
          %v6812 = vunpack.c.l.b16 %v6680
          %v6813 = vunpack.c.l.b16 %v6681
          %v6814 = vunpack.c.l.b16 %v6682
          %v6815 = vunpack.c.l.b16 %v6683
          %v6816 = vunpack.c.l.b16 %v6684
          %v6817 = vunpack.c.l.b16 %v6685
          %v6818 = vunpack.c.l.b16 %v6686
          %v6819 = vunpack.c.l.b16 %v6687
          %v6820 = vunpack.c.l.b16 %v6688
          %v6821 = vunpack.c.l.b16 %v6689
          %v6822 = vunpack.c.l.b16 %v6690
          %v6823 = vunpack.c.l.b16 %v6691
          %v6824 = vunpack.c.l.b16 %v6692
          %v6825 = vunpack.c.l.b16 %v6693
          %v6826 = vunpack.c.l.b16 %v6694
          %v6827 = vunpack.c.l.b16 %v6695
          %v6828 = vunpack.c.l.b16 %v6696
          %v6829 = vunpack.c.l.b16 %v6697
          %v6830 = vunpack.c.l.b16 %v6698
          %v6831 = vunpack.c.l.b16 %v6699
          %v6832 = vunpack.c.l.b16 %v6700
          %v6833 = vunpack.c.l.b16 %v6701
          %v6834 = vunpack.c.l.b16 %v6702
          %v6835 = vunpack.c.l.b16 %v6703
          %v6836 = vunpack.c.l.b16 %v6704
          %v6837 = vunpack.c.l.b16 %v6705
          %v6838 = vunpack.c.l.b16 %v6706
          %v6839 = vunpack.c.l.b16 %v6707
          %v6840 = vunpack.c.l.b16 %v6708
          %v6841 = vunpack.c.l.b16 %v6709
          %v6842 = vunpack.c.l.b16 %v6710
          %v6843 = vunpack.c.l.b16 %v6711
          %v6844 = vunpack.c.l.b16 %v6712
          %v6845 = vunpack.c.l.b16 %v6713
          %v6846 = vunpack.c.l.b16 %v6714
          %v6847 = vunpack.c.l.b16 %v6715
          %v6848 = vunpack.c.l.b16 %v6716
          %v6849 = vunpack.c.l.b16 %v6717
          %v6850 = vunpack.c.l.b16 %v6718
          %v6851 = vunpack.c.l.b16 %v6719
          %v6852 = vunpack.c.l.b16 %v6720
          %v6853 = vunpack.c.l.b16 %v6721
          %v6854 = vunpack.c.l.b16 %v6722
          %v6855 = vunpack.c.l.b16 %v6723
          %v6856 = vunpack.c.l.b16 %v6724
          %v6857 = vpack.c.b16 %v6794, %v6793
          %v6858 = vpack.c.b16 %v6796, %v6795
          %v6859 = vpack.c.b16 %v6798, %v6797
          %v6860 = vpack.c.b16 %v6800, %v6799
          %v6861 = vpack.c.b16 %v6802, %v6801
          %v6862 = vpack.c.b16 %v6804, %v6803
          %v6863 = vpack.c.b16 %v6806, %v6805
          %v6864 = vpack.c.b16 %v6808, %v6807
          %v6865 = vpack.c.b16 %v6810, %v6809
          %v6866 = vpack.c.b16 %v6812, %v6811
          %v6867 = vpack.c.b16 %v6814, %v6813
          %v6868 = vpack.c.b16 %v6816, %v6815
          %v6869 = vpack.c.b16 %v6818, %v6817
          %v6870 = vpack.c.b16 %v6820, %v6819
          %v6871 = vpack.c.b16 %v6822, %v6821
          %v6872 = vpack.c.b16 %v6824, %v6823
          %v6873 = vpack.c.b16 %v6826, %v6825
          %v6874 = vpack.c.b16 %v6828, %v6827
          %v6875 = vpack.c.b16 %v6830, %v6829
          %v6876 = vpack.c.b16 %v6832, %v6831
          %v6877 = vpack.c.b16 %v6834, %v6833
          %v6878 = vpack.c.b16 %v6836, %v6835
          %v6879 = vpack.c.b16 %v6838, %v6837
          %v6880 = vpack.c.b16 %v6840, %v6839
          %v6881 = vpack.c.b16 %v6842, %v6841
          %v6882 = vpack.c.b16 %v6844, %v6843
          %v6883 = vpack.c.b16 %v6846, %v6845
          %v6884 = vpack.c.b16 %v6848, %v6847
          %v6885 = vpack.c.b16 %v6850, %v6849
          %v6886 = vpack.c.b16 %v6852, %v6851
          %v6887 = vpack.c.b16 %v6854, %v6853
          %v6888 = vpack.c.b16 %v6856, %v6855
          %6921 = vmatpush.bf16.msra.mxu0 %v6864
          %6922 = vmatpush.bf16.msra.mxu0 %v6863
          %6923 = vmatpush.bf16.msra.mxu0 %v6862
          %6924 = vmatpush.bf16.msra.mxu0 %v6861
          %6925 = vmatpush.bf16.msra.mxu0 %v6860
          %6926 = vmatpush.bf16.msra.mxu0 %v6859
          %6927 = vmatpush.bf16.msra.mxu0 %v6858
          %6928 = vmatpush.bf16.msra.mxu0 %v6857
          %6929 = vmatmul.bf16.gmra.mxu0 %v6657
          %v6930 = vpop.f32.mrf.mxu0
          %v6931 = vadd.f32 %v6727, %v6930
          %v6932 = vpop.f32.mrf.mxu0
          %v6933 = vadd.f32 %v6727, %v6932
          %6934 = vdwg.mxu0
          %6935 = vmatpush.bf16.msra.mxu0 %v6872
          %6936 = vmatpush.bf16.msra.mxu0 %v6871
          %6937 = vmatpush.bf16.msra.mxu0 %v6870
          %6938 = vmatpush.bf16.msra.mxu0 %v6869
          %6939 = vmatpush.bf16.msra.mxu0 %v6868
          %6940 = vmatpush.bf16.msra.mxu0 %v6867
          %6941 = vmatpush.bf16.msra.mxu0 %v6866
          %6942 = vmatpush.bf16.msra.mxu0 %v6865
          %6943 = vmatmul.bf16.gmra.mxu0 %v6658
          %v6944 = vpop.f32.mrf.mxu0
          %v6945 = vadd.f32 %v6931, %v6944
          %v6946 = vpop.f32.mrf.mxu0
          %v6947 = vadd.f32 %v6933, %v6946
          %6948 = vdwg.mxu0
          %6949 = vmatpush.bf16.msra.mxu0 %v6880
          %6950 = vmatpush.bf16.msra.mxu0 %v6879
          %6951 = vmatpush.bf16.msra.mxu0 %v6878
          %6952 = vmatpush.bf16.msra.mxu0 %v6877
          %6953 = vmatpush.bf16.msra.mxu0 %v6876
          %6954 = vmatpush.bf16.msra.mxu0 %v6875
          %6955 = vmatpush.bf16.msra.mxu0 %v6874
          %6956 = vmatpush.bf16.msra.mxu0 %v6873
          %6957 = vmatmul.bf16.gmra.mxu0 %v6659
          %v6958 = vpop.f32.mrf.mxu0
          %v6959 = vadd.f32 %v6945, %v6958
          %v6960 = vpop.f32.mrf.mxu0
          %v6961 = vadd.f32 %v6947, %v6960
          %6962 = vdwg.mxu0
          %6963 = vmatpush.bf16.msra.mxu0 %v6888
          %6964 = vmatpush.bf16.msra.mxu0 %v6887
          %6965 = vmatpush.bf16.msra.mxu0 %v6886
          %6966 = vmatpush.bf16.msra.mxu0 %v6885
          %6967 = vmatpush.bf16.msra.mxu0 %v6884
          %6968 = vmatpush.bf16.msra.mxu0 %v6883
          %6969 = vmatpush.bf16.msra.mxu0 %v6882
          %6970 = vmatpush.bf16.msra.mxu0 %v6881
          %6971 = vmatmul.bf16.gmra.mxu0 %v6660
          %v6972 = vpop.f32.mrf.mxu0
          %v6973 = vadd.f32 %v6959, %v6972
          %v6974 = vpop.f32.mrf.mxu0
          %v6975 = vadd.f32 %v6961, %v6974
          %6976 = vdwg.mxu0
          %v6977 = vmax.f32 %v6973, 0.0
          %v6978 = vmax.f32 %v6975, 0.0
          %v6979 = vpack.c.bf16 %v6978, %v6977
          %v6980 = vld [vmem:[#allocation15] sm:$0xf]
          %v6981 = vld [vmem:[#allocation15 + $0x4] sm:$0xf]
          %v6982 = vld [vmem:[#allocation15 + $0x8] sm:$0xf]
          %v6983 = vld [vmem:[#allocation15 + $0xc] sm:$0xf]
          %v6984 = vld [vmem:[#allocation15 + $0x10] sm:$0xf]
          %v6985 = vld [vmem:[#allocation15 + $0x14] sm:$0xf]
          %v6986 = vld [vmem:[#allocation15 + $0x18] sm:$0xf]
          %v6987 = vld [vmem:[#allocation15 + $0x1c] sm:$0xf]
          %v6988 = vld [vmem:[#allocation15 + $0x20] sm:$0xf]
          %v6989 = vld [vmem:[#allocation15 + $0x24] sm:$0xf]
          %v6990 = vld [vmem:[#allocation15 + $0x28] sm:$0xf]
          %v6991 = vld [vmem:[#allocation15 + $0x2c] sm:$0xf]
          %v6992 = vld [vmem:[#allocation15 + $0x30] sm:$0xf]
          %v6993 = vld [vmem:[#allocation15 + $0x34] sm:$0xf]
          %v6994 = vld [vmem:[#allocation15 + $0x38] sm:$0xf]
          %v6995 = vld [vmem:[#allocation15 + $0x3c] sm:$0xf]
          %v6996 = vld [vmem:[#allocation17] sm:$0x1]
          %v6998 = vperm.slane %v6996, 0
          %v7016 = vunpack.c.l.b16 %v6980
          %v7017 = vunpack.c.l.b16 %v6981
          %v7018 = vunpack.c.l.b16 %v6982
          %v7019 = vunpack.c.l.b16 %v6983
          %v7020 = vunpack.c.l.b16 %v6984
          %v7021 = vunpack.c.l.b16 %v6985
          %v7022 = vunpack.c.l.b16 %v6986
          %v7023 = vunpack.c.l.b16 %v6987
          %v7024 = vunpack.c.l.b16 %v6988
          %v7025 = vunpack.c.l.b16 %v6989
          %v7026 = vunpack.c.l.b16 %v6990
          %v7027 = vunpack.c.l.b16 %v6991
          %v7028 = vunpack.c.l.b16 %v6992
          %v7029 = vunpack.c.l.b16 %v6993
          %v7030 = vunpack.c.l.b16 %v6994
          %v7031 = vunpack.c.l.b16 %v6995
          %v7032 = vpack.c.b16 %v7017, %v7016
          %v7033 = vpack.c.b16 %v7019, %v7018
          %v7034 = vpack.c.b16 %v7021, %v7020
          %v7035 = vpack.c.b16 %v7023, %v7022
          %v7036 = vpack.c.b16 %v7025, %v7024
          %v7037 = vpack.c.b16 %v7027, %v7026
          %v7038 = vpack.c.b16 %v7029, %v7028
          %v7039 = vpack.c.b16 %v7031, %v7030
          %7048 = vmatpush.bf16.msra.mxu0 %v7039
          %7049 = vmatpush.bf16.msra.mxu0 %v7038
          %7050 = vmatpush.bf16.msra.mxu0 %v7037
          %7051 = vmatpush.bf16.msra.mxu0 %v7036
          %7052 = vmatpush.bf16.msra.mxu0 %v7035
          %7053 = vmatpush.bf16.msra.mxu0 %v7034
          %7054 = vmatpush.bf16.msra.mxu0 %v7033
          %7055 = vmatpush.bf16.msra.mxu0 %v7032
          %7056 = vmatmul.bf16.gmra.mxu0 %v6979
          %v7057 = vpop.f32.mrf.mxu0
          %v7058 = vadd.f32 %v6998, %v7057
          %v7059 = vpop.f32.mrf.mxu0
          %v7060 = vadd.f32 %v6998, %v7059
          %7061 = vdwg.mxu0
          %7062 = vst [vmem:[#allocation18] sm:$0xff] %v7058
          %7063 = vst [vmem:[#allocation18 + $0x8] sm:$0xff] %v7060
        $region100: #{tpu_custom_call.1} parent=55 // pred_fallthru
          _
        // Predicated region
        $region101: #{tpu_custom_call.1} parent=55 // pred_check
          %p7064 = pneg %p242
        $region102: #{tpu_custom_call.1} parent=55 // pred_check_branch
          %7066 = sbr.rel (%p7064) target = $region104
        $region103: #{tpu_custom_call.1} parent=55 // pred_region
          %7068 = vsyncadd [#allocation5], 0
          %s7069 = sshll.u32 [#allocation18], 4
          %s7070 = int_to_ptr.vmem [resolvable:$true] %s7069
          %s7071 = sshll.u32 %s9, 4
          %s7072 = int_to_ptr.hbm [resolvable:$true] %s7071
          %7077 = dma.vmem_to_hbm [thread:$0]  %s7070, 256, %s7072, [#allocation5], 128, 128, 8
        $region104: #{tpu_custom_call.1} parent=55 // pred_fallthru
          _
        // Predicated region
        $region105: #{tpu_custom_call.1} parent=55 // pred_check
          %p7078 = pneg %p242
        $region106: #{tpu_custom_call.1} parent=55 // pred_check_branch
          %7080 = sbr.rel (%p7078) target = $region108
        $region107: #{tpu_custom_call.1} parent=55 // pred_region
          %7082 = dma.done [#allocation5], 256
        $region108: #{tpu_custom_call.1} parent=55 // pred_fallthru
          _
      $region56: #{tpu_custom_call.1} parent=5 // pred_fallthru
        _
      %p7083 = scmp.le.s32.totalorder 2, %s25
      // Predicated region
      $region109: #{tpu_custom_call.1} parent=5 // pred_check
        %p7084 = pneg %p7083
      $region110: #{tpu_custom_call.1} parent=5 // pred_check_branch
        %7086 = sbr.rel (%p7084) target = $region112
      $region111: #{tpu_custom_call.1} parent=5 // pred_region
        %s7087 = ssub.s32 %s25, 2
      $region112: #{tpu_custom_call.1} parent=5 // pred_fallthru
        _
    $region6: #{tpu_custom_call.1} parent=1 // loop_footer
      %s29 = sadd.s32 1, %s25
    $region7: #{tpu_custom_call.1} parent=1 // loop_footer_branch
      %24 = sbr.rel target = $region3
    $region8: #{tpu_custom_call.1} parent=1 // loop_exit
      _
    %7088 = vsyncpa [#allocation4], 1
    %s7089 = scalar_lea.sflag [#allocation4], 1
    %7090 = vsyncpa %s7089, 1
    %7091 = vsyncpa [#allocation7], 1
    %s7092 = scalar_lea.sflag [#allocation7], 1
    %7093 = vsyncpa %s7092, 1
    %7094 = vsyncpa [#allocation10], 1
    %7095 = vsyncpa [#allocation13], 1
    %7096 = vsyncpa [#allocation16], 1
    %7097 = vsyncpa [#allocation5], 1
    %s7098 = scalar_lea.sflag [#allocation5], 1
    %7099 = vsyncpa %s7098, 1

</llo_original>
